<compile_context>
chip_gen: v7x
topology: tpu7x:2x2x1
jax: 0.10.0
libtpu: 0.0.40
codegen_flags: <defaults>
</compile_context>

<pallas_src>
import math
import jax
import jax.numpy as jnp
from jax.experimental import pallas as pl
from jax.experimental.pallas import tpu as pltpu


# ----------------------------- in-kernel helpers -----------------------------

def _layernorm(h, gamma, beta, eps=1e-5):
    mu = jnp.mean(h, axis=-1, keepdims=True)
    xc = h - mu
    var = jnp.mean(xc * xc, axis=-1, keepdims=True)
    return xc * jax.lax.rsqrt(var + eps) * gamma + beta


# ---------------------- fused transformer stack kernel ------------------------

def transformer_stack_kernel(x_ref, mask_ref,
                             ln1_g_ref, ln1_b_ref,
                             wqkv_ref, bqkv_ref,
                             wo_ref, bo_ref,
                             ln2_g_ref, ln2_b_ref,
                             w1_ref, b1_ref, w2_ref, b2_ref,
                             o_ref, x_scr):
    l = pl.program_id(1)
    D = x_scr.shape[-1]

    # Load the embedding once per batch element; keep activation in VMEM f32.
    @pl.when(l == 0)
    def _():
        x_scr[...] = x_ref[0].astype(jnp.float32)

    x = x_scr[...]                               # (S, D) f32
    m = mask_ref[0]                              # (S, S) int8, 1 = attend

    # --- pre-LN masked single-head self-attention sublayer ---
    h = _layernorm(x, ln1_g_ref[0], ln1_b_ref[0])
    hb = h.astype(jnp.bfloat16)
    qkv = jnp.dot(hb, wqkv_ref[0],
                  preferred_element_type=jnp.float32) + bqkv_ref[0]   # (S, 3D)
    q = qkv[:, 0 * D:1 * D].astype(jnp.bfloat16)
    k = qkv[:, 1 * D:2 * D].astype(jnp.bfloat16)
    v = qkv[:, 2 * D:3 * D].astype(jnp.bfloat16)

    scores = jax.lax.dot_general(q, k, (((1,), (1,)), ((), ())),
                                 preferred_element_type=jnp.float32)  # (S, S)
    scores = scores * jnp.float32(1.0 / math.sqrt(D))
    scores = jnp.where(m != 0, scores, jnp.float32(-1e9))
    smax = jnp.max(scores, axis=-1, keepdims=True)
    p = jnp.exp(scores - smax)
    p = p * pl.reciprocal(jnp.sum(p, axis=-1, keepdims=True), approx=True)

    attn = jnp.dot(p.astype(jnp.bfloat16), v,
                   preferred_element_type=jnp.float32)
    attn = jnp.dot(attn.astype(jnp.bfloat16), wo_ref[0],
                   preferred_element_type=jnp.float32) + bo_ref[0]
    x = x + attn

    # --- pre-LN position-wise feed-forward sublayer (ReLU) ---
    h2 = _layernorm(x, ln2_g_ref[0], ln2_b_ref[0])
    f = jnp.dot(h2.astype(jnp.bfloat16), w1_ref[0],
                preferred_element_type=jnp.float32) + b1_ref[0]
    f = jnp.maximum(f, 0.0)
    f = jnp.dot(f.astype(jnp.bfloat16), w2_ref[0],
                preferred_element_type=jnp.float32) + b2_ref[0]
    x_scr[...] = x + f

    # Write activations back to HBM only once, after the last layer.
    @pl.when(l == pl.num_programs(1) - 1)
    def _():
        o_ref[0] = x_scr[...].astype(o_ref.dtype)


_STACK_KEYS = ("ln1_g", "ln1_b", "w_qkv", "b_qkv", "w_o", "b_o",
               "ln2_g", "ln2_b", "w1", "b1", "w2", "b2")


def run_transformer_stack(x, mask, stacked):
    B, S, D = x.shape
    L = stacked["w_qkv"].shape[0]
    weights = [stacked[k] for k in _STACK_KEYS]

    def layer_spec(arr):
        rest = tuple(arr.shape[1:])
        n = len(rest)
        return pl.BlockSpec((1,) + rest, lambda b, l, _n=n: (l,) + (0,) * _n)

    in_specs = ([pl.BlockSpec((1, S, D), lambda b, l: (b, 0, 0)),
                 pl.BlockSpec((1, S, S), lambda b, l: (b, 0, 0))]
                + [layer_spec(w) for w in weights])

    return pl.pallas_call(
        transformer_stack_kernel,
        out_shape=jax.ShapeDtypeStruct((B, S, D), jnp.float32),
        grid_spec=pltpu.PrefetchScalarGridSpec(
            num_scalar_prefetch=0,
            grid=(B, L),
            in_specs=in_specs,
            out_specs=pl.BlockSpec((1, S, D), lambda b, l: (b, 0, 0)),
            scratch_shapes=[pltpu.VMEM((S, D), jnp.float32)],
        ),
        compiler_params=pltpu.CompilerParams(
            dimension_semantics=("parallel", "arbitrary")),
    )(x, mask, *weights)


# ------------ output Linear + log_softmax, tiled over the vocab dim -----------

def output_logits_kernel(x_ref, lnf_g_ref, lnf_b_ref, w_ref, b_ref,
                         logits_ref, lse_ref, h_scr, m_scr, l_scr):
    j = pl.program_id(1)

    @pl.when(j == 0)
    def _():
        x = x_ref[0].astype(jnp.float32)
        h = _layernorm(x, lnf_g_ref[...], lnf_b_ref[...])   # final stack LN
        h_scr[...] = h.astype(jnp.bfloat16)
        m_scr[...] = jnp.full_like(m_scr, -jnp.inf)
        l_scr[...] = jnp.zeros_like(l_scr)

    # logits for this vocab tile (lane-dense store)
    logits = jnp.dot(h_scr[...], w_ref[...],
                     preferred_element_type=jnp.float32) + b_ref[...]
    logits_ref[0] = logits

    # online max / logsumexp accumulation across vocab tiles
    m_prev = m_scr[...]
    m_new = jnp.maximum(m_prev, jnp.max(logits, axis=-1, keepdims=True))
    l_scr[...] = (l_scr[...] * jnp.exp(m_prev - m_new)
                  + jnp.sum(jnp.exp(logits - m_new), axis=-1, keepdims=True))
    m_scr[...] = m_new

    @pl.when(j == pl.num_programs(1) - 1)
    def _():
        lse_ref[0] = m_scr[...] + jnp.log(l_scr[...])


def log_softmax_kernel(logits_ref, lse_ref, o_ref):
    o_ref[0] = (logits_ref[0] - lse_ref[0]).astype(o_ref.dtype)


def run_output_layer(x, out_params, tile_v=128):
    B, S, D = x.shape
    V = out_params["w_out"].shape[1]
    assert V % tile_v == 0, "vocab size must be a multiple of the vocab tile"
    NV = V // tile_v

    logits, lse = pl.pallas_call(
        output_logits_kernel,
        out_shape=(jax.ShapeDtypeStruct((B, S, V), jnp.float32),
                   jax.ShapeDtypeStruct((B, S, 1), jnp.float32)),
        grid_spec=pltpu.PrefetchScalarGridSpec(
            num_scalar_prefetch=0,
            grid=(B, NV),
            in_specs=[pl.BlockSpec((1, S, D), lambda b, j: (b, 0, 0)),
                      pl.BlockSpec((1, D), lambda b, j: (0, 0)),
                      pl.BlockSpec((1, D), lambda b, j: (0, 0)),
                      pl.BlockSpec((D, tile_v), lambda b, j: (0, j)),
                      pl.BlockSpec((1, tile_v), lambda b, j: (0, j))],
            out_specs=[pl.BlockSpec((1, S, tile_v), lambda b, j: (b, 0, j)),
                       pl.BlockSpec((1, S, 1), lambda b, j: (b, 0, 0))],
            scratch_shapes=[pltpu.VMEM((S, D), jnp.bfloat16),
                            pltpu.VMEM((S, 1), jnp.float32),
                            pltpu.VMEM((S, 1), jnp.float32)],
        ),
        compiler_params=pltpu.CompilerParams(
            dimension_semantics=("parallel", "arbitrary")),
    )(x, out_params["lnf_g"], out_params["lnf_b"],
      out_params["w_out"], out_params["b_out"])

    return pl.pallas_call(
        log_softmax_kernel,
        out_shape=jax.ShapeDtypeStruct((B, S, V), jnp.float32),
        grid_spec=pltpu.PrefetchScalarGridSpec(
            num_scalar_prefetch=0,
            grid=(B, NV),
            in_specs=[pl.BlockSpec((1, S, tile_v), lambda b, j: (b, 0, j)),
                      pl.BlockSpec((1, S, 1), lambda b, j: (b, 0, 0))],
            out_specs=pl.BlockSpec((1, S, tile_v), lambda b, j: (b, 0, j)),
        ),
        compiler_params=pltpu.CompilerParams(
            dimension_semantics=("parallel", "parallel")),
    )(logits, lse)


# ------------------------------ glue (plain JAX) ------------------------------

def sinusoidal_positional_encoding(S, D):
    pos = jnp.arange(S, dtype=jnp.float32)[:, None]
    div = jnp.exp(jnp.arange(0, D, 2, dtype=jnp.float32) * (-math.log(10000.0) / D))
    pe = jnp.zeros((S, D), dtype=jnp.float32)
    pe = pe.at[:, 0::2].set(jnp.sin(pos * div))
    pe = pe.at[:, 1::2].set(jnp.cos(pos * div))
    return pe


def embed(tokens, emb_table):
    S = tokens.shape[-1]
    D = emb_table.shape[-1]
    x = jnp.take(emb_table, tokens, axis=0) * jnp.float32(math.sqrt(D))
    return x + sinusoidal_positional_encoding(S, D)[None]


def init_params(key, n_layers, D, D_ff, V):
    ks = iter(jax.random.split(key, 8))

    def nrm(shape, k, dtype=jnp.float32):
        return (0.02 * jax.random.normal(k, shape, dtype=jnp.float32)).astype(dtype)

    stacked = dict(
        ln1_g=jnp.ones((n_layers, 1, D), jnp.float32),
        ln1_b=jnp.zeros((n_layers, 1, D), jnp.float32),
        w_qkv=nrm((n_layers, D, 3 * D), next(ks), jnp.bfloat16),   # fused Q/K/V
        b_qkv=jnp.zeros((n_layers, 1, 3 * D), jnp.float32),
        w_o=nrm((n_layers, D, D), next(ks), jnp.bfloat16),
        b_o=jnp.zeros((n_layers, 1, D), jnp.float32),
        ln2_g=jnp.ones((n_layers, 1, D), jnp.float32),
        ln2_b=jnp.zeros((n_layers, 1, D), jnp.float32),
        w1=nrm((n_layers, D, D_ff), next(ks), jnp.bfloat16),
        b1=jnp.zeros((n_layers, 1, D_ff), jnp.float32),
        w2=nrm((n_layers, D_ff, D), next(ks), jnp.bfloat16),
        b2=jnp.zeros((n_layers, 1, D), jnp.float32),
    )
    out = dict(
        lnf_g=jnp.ones((1, D), jnp.float32),
        lnf_b=jnp.zeros((1, D), jnp.float32),
        w_out=nrm((D, V), next(ks), jnp.bfloat16),
        b_out=jnp.zeros((1, V), jnp.float32),
    )
    emb_table = nrm((V, D), next(ks))
    return emb_table, stacked, out


def full_transformer_forward(tokens, mask, emb_table, stacked, out_params):
    x = embed(tokens, emb_table)                 # embedding(input_sequence)
    x = run_transformer_stack(x, mask, stacked)  # transformer_stack(embeddings, mask)
    return run_output_layer(x, out_params)       # log_softmax(output_layer(...))


# --------------------------------- main ---------------------------------------

if __name__ == "__main__":
    # Small but lane-dense sizes: all last dims are multiples of 128.
    B, S, D, D_ff, V, N_LAYERS = 2, 128, 128, 512, 256, 2

    key = jax.random.PRNGKey(0)
    k_tok, k_par = jax.random.split(key)

    tokens = jax.random.randint(k_tok, (B, S), 0, V, dtype=jnp.int32)
    # causal mask, (B, S, S) int8, 1 = attend
    mask = jnp.broadcast_to(
        jnp.tril(jnp.ones((S, S), jnp.int8))[None], (B, S, S)).astype(jnp.int8)

    emb_table, stacked, out_params = init_params(k_par, N_LAYERS, D, D_ff, V)

    fwd = jax.jit(full_transformer_forward)
    log_probs = fwd(tokens, mask, emb_table, stacked, out_params)
    log_probs = jax.block_until_ready(log_probs)

    assert log_probs.shape == (B, S, V)
    # rows of log_softmax must normalize to 1 in prob space
    assert bool(jnp.all(jnp.abs(jnp.sum(jnp.exp(log_probs), axis=-1) - 1.0) < 1e-4))
    print("KERNEL_OK")
</pallas_src>

<mosaic_0001>
module attributes {stable_mosaic.version = 11 : i64} {
  func.func @transformer_stack_kernel(%arg0: i32, %arg1: i32, %arg2: memref<1x128x128xf32, #tpu.memory_space<vmem>>, %arg3: memref<1x128x128xi8, #tpu.memory_space<vmem>>, %arg4: memref<1x1x128xf32, #tpu.memory_space<vmem>>, %arg5: memref<1x1x128xf32, #tpu.memory_space<vmem>>, %arg6: memref<1x128x384xbf16, #tpu.memory_space<vmem>>, %arg7: memref<1x1x384xf32, #tpu.memory_space<vmem>>, %arg8: memref<1x128x128xbf16, #tpu.memory_space<vmem>>, %arg9: memref<1x1x128xf32, #tpu.memory_space<vmem>>, %arg10: memref<1x1x128xf32, #tpu.memory_space<vmem>>, %arg11: memref<1x1x128xf32, #tpu.memory_space<vmem>>, %arg12: memref<1x128x512xbf16, #tpu.memory_space<vmem>>, %arg13: memref<1x1x512xf32, #tpu.memory_space<vmem>>, %arg14: memref<1x512x128xbf16, #tpu.memory_space<vmem>>, %arg15: memref<1x1x128xf32, #tpu.memory_space<vmem>>, %arg16: memref<1x128x128xf32, #tpu.memory_space<vmem>>, %arg17: memref<128x128xf32, #tpu.memory_space<vmem>>) attributes {dimension_semantics = [#tpu.dimension_semantics<parallel>, #tpu.dimension_semantics<arbitrary>], iteration_bounds = array<i64: 2, 2>, scalar_prefetch = 0 : i64, scratch_operands = 1 : i64, tpu.core_type = #tpu.core_type<tc>, window_params = [{transform_indices = @transform_0, window_bounds = array<i64: 1, 128, 128>}, {transform_indices = @transform_1, window_bounds = array<i64: 1, 128, 128>}, {transform_indices = @transform_2, window_bounds = array<i64: 1, 1, 128>}, {transform_indices = @transform_3, window_bounds = array<i64: 1, 1, 128>}, {transform_indices = @transform_4, window_bounds = array<i64: 1, 128, 384>}, {transform_indices = @transform_5, window_bounds = array<i64: 1, 1, 384>}, {transform_indices = @transform_6, window_bounds = array<i64: 1, 128, 128>}, {transform_indices = @transform_7, window_bounds = array<i64: 1, 1, 128>}, {transform_indices = @transform_8, window_bounds = array<i64: 1, 1, 128>}, {transform_indices = @transform_9, window_bounds = array<i64: 1, 1, 128>}, {transform_indices = @transform_10, window_bounds = array<i64: 1, 128, 512>}, {transform_indices = @transform_11, window_bounds = array<i64: 1, 1, 512>}, {transform_indices = @transform_12, window_bounds = array<i64: 1, 512, 128>}, {transform_indices = @transform_13, window_bounds = array<i64: 1, 1, 128>}, {transform_indices = @transform_14, window_bounds = array<i64: 1, 128, 128>}]} {
    %c0_i32 = arith.constant 0 : i32
    %0 = arith.cmpi eq, %arg1, %c0_i32 : i32
    %1 = arith.extui %0 : i1 to i32
    %c0_i32_0 = arith.constant 0 : i32
    %2 = arith.cmpi ne, %1, %c0_i32_0 : i32
    scf.if %2 {
      %c0_64 = arith.constant 0 : index
      %c0_65 = arith.constant 0 : index
      %c0_66 = arith.constant 0 : index
      %119 = vector.load %arg2[%c0_64, %c0_65, %c0_66] : memref<1x128x128xf32, #tpu.memory_space<vmem>>, vector<1x128x128xf32>
      %120 = vector.shape_cast %119 : vector<1x128x128xf32> to vector<128x128xf32>
      %c0_67 = arith.constant 0 : index
      %c0_68 = arith.constant 0 : index
      %121 = vector.load %arg17[%c0_67, %c0_68] : memref<128x128xf32, #tpu.memory_space<vmem>>, vector<128x128xf32>
      tpu.vector_store %arg17[%c0_67, %c0_68], %120 {strides = array<i32>} : memref<128x128xf32, #tpu.memory_space<vmem>>, vector<128x128xf32>,
    } else {
    }
    %c0 = arith.constant 0 : index
    %c0_1 = arith.constant 0 : index
    %3 = vector.load %arg17[%c0, %c0_1] : memref<128x128xf32, #tpu.memory_space<vmem>>, vector<128x128xf32>
    %c0_2 = arith.constant 0 : index
    %c0_3 = arith.constant 0 : index
    %c0_4 = arith.constant 0 : index
    %4 = vector.load %arg3[%c0_2, %c0_3, %c0_4] : memref<1x128x128xi8, #tpu.memory_space<vmem>>, vector<1x128x128xi8>
    %5 = vector.shape_cast %4 : vector<1x128x128xi8> to vector<128x128xi8>
    %c0_5 = arith.constant 0 : index
    %c0_6 = arith.constant 0 : index
    %c0_7 = arith.constant 0 : index
    %6 = vector.load %arg4[%c0_5, %c0_6, %c0_7] : memref<1x1x128xf32, #tpu.memory_space<vmem>>, vector<1x1x128xf32>
    %7 = vector.shape_cast %6 : vector<1x1x128xf32> to vector<1x128xf32>
    %c0_8 = arith.constant 0 : index
    %c0_9 = arith.constant 0 : index
    %c0_10 = arith.constant 0 : index
    %8 = vector.load %arg5[%c0_8, %c0_9, %c0_10] : memref<1x1x128xf32, #tpu.memory_space<vmem>>, vector<1x1x128xf32>
    %9 = vector.shape_cast %8 : vector<1x1x128xf32> to vector<1x128xf32>
    %cst = arith.constant dense<0.000000e+00> : vector<128xf32>
    %10 = vector.multi_reduction <add>, %3, %cst [1] : vector<128x128xf32> to vector<128xf32>
    %11 = vector.shape_cast %10 : vector<128xf32> to vector<128x1xf32>
    %cst_11 = arith.constant 1.280000e+02 : f32
    %12 = vector.broadcast %cst_11 : f32 to vector<128x1xf32>
    %13 = arith.divf %11, %12 : vector<128x1xf32>
    %14 = vector.broadcast %13 : vector<128x1xf32> to vector<128x128xf32>
    %15 = arith.subf %3, %14 : vector<128x128xf32>
    %16 = arith.mulf %15, %15 : vector<128x128xf32>
    %cst_12 = arith.constant dense<0.000000e+00> : vector<128xf32>
    %17 = vector.multi_reduction <add>, %16, %cst_12 [1] : vector<128x128xf32> to vector<128xf32>
    %18 = vector.shape_cast %17 : vector<128xf32> to vector<128x1xf32>
    %cst_13 = arith.constant 1.280000e+02 : f32
    %19 = vector.broadcast %cst_13 : f32 to vector<128x1xf32>
    %20 = arith.divf %18, %19 : vector<128x1xf32>
    %cst_14 = arith.constant 9.99999974E-6 : f32
    %21 = vector.broadcast %cst_14 : f32 to vector<128x1xf32>
    %22 = arith.addf %20, %21 : vector<128x1xf32>
    %23 = math.rsqrt %22 : vector<128x1xf32>
    %24 = vector.broadcast %23 : vector<128x1xf32> to vector<128x128xf32>
    %25 = arith.mulf %15, %24 : vector<128x128xf32>
    %26 = vector.broadcast %7 : vector<1x128xf32> to vector<128x128xf32>
    %27 = arith.mulf %25, %26 : vector<128x128xf32>
    %28 = vector.broadcast %9 : vector<1x128xf32> to vector<128x128xf32>
    %29 = arith.addf %27, %28 : vector<128x128xf32>
    %30 = arith.truncf %29 : vector<128x128xf32> to vector<128x128xbf16>
    %c0_15 = arith.constant 0 : index
    %c0_16 = arith.constant 0 : index
    %c0_17 = arith.constant 0 : index
    %31 = vector.load %arg6[%c0_15, %c0_16, %c0_17] : memref<1x128x384xbf16, #tpu.memory_space<vmem>>, vector<1x128x384xbf16>
    %32 = vector.shape_cast %31 : vector<1x128x384xbf16> to vector<128x384xbf16>
    %cst_18 = arith.constant dense<0.000000e+00> : vector<128x384xf32>
    %33 = tpu.matmul %30, %32, %cst_18 {dimension_numbers = #tpu.dot_dimension_numbers<[1], [0], [0], [1], [0, 0, 1, 1], [], []>} : vector<128x128xbf16>, vector<128x384xbf16>, vector<128x384xf32> -> vector<128x384xf32>
    %c0_19 = arith.constant 0 : index
    %c0_20 = arith.constant 0 : index
    %c0_21 = arith.constant 0 : index
    %34 = vector.load %arg7[%c0_19, %c0_20, %c0_21] : memref<1x1x384xf32, #tpu.memory_space<vmem>>, vector<1x1x384xf32>
    %35 = vector.shape_cast %34 : vector<1x1x384xf32> to vector<1x384xf32>
    %36 = vector.broadcast %35 : vector<1x384xf32> to vector<128x384xf32>
    %37 = arith.addf %33, %36 : vector<128x384xf32>
    %38 = vector.extract_strided_slice %37 {offsets = [0, 0], sizes = [128, 128], strides = [1, 1]} : vector<128x384xf32> to vector<128x128xf32>
    %39 = arith.truncf %38 : vector<128x128xf32> to vector<128x128xbf16>
    %40 = vector.extract_strided_slice %37 {offsets = [0, 128], sizes = [128, 128], strides = [1, 1]} : vector<128x384xf32> to vector<128x128xf32>
    %41 = arith.truncf %40 : vector<128x128xf32> to vector<128x128xbf16>
    %42 = vector.extract_strided_slice %37 {offsets = [0, 256], sizes = [128, 128], strides = [1, 1]} : vector<128x384xf32> to vector<128x128xf32>
    %43 = arith.truncf %42 : vector<128x128xf32> to vector<128x128xbf16>
    %cst_22 = arith.constant dense<0.000000e+00> : vector<128x128xf32>
    %44 = tpu.matmul %39, %41, %cst_22 {dimension_numbers = #tpu.dot_dimension_numbers<[1], [1], [0], [0], [0, 0, 1, 0], [], []>} : vector<128x128xbf16>, vector<128x128xbf16>, vector<128x128xf32> -> vector<128x128xf32>
    %cst_23 = arith.constant 0.0883883461 : f32
    %45 = vector.broadcast %cst_23 : f32 to vector<128x128xf32>
    %46 = arith.mulf %44, %45 : vector<128x128xf32>
    %c0_i8 = arith.constant 0 : i8
    %47 = vector.broadcast %c0_i8 : i8 to vector<128x128xi8>
    %48 = arith.cmpi ne, %5, %47 : vector<128x128xi8>
    %cst_24 = arith.constant -1.000000e+09 : f32
    %49 = vector.broadcast %cst_24 : f32 to vector<128x128xf32>
    %50 = arith.select %48, %46, %49 : vector<128x128xi1>, vector<128x128xf32>
    %cst_25 = arith.constant dense<0xFF800000> : vector<128xf32>
    %51 = vector.multi_reduction <maximumf>, %50, %cst_25 [1] : vector<128x128xf32> to vector<128xf32>
    %52 = vector.shape_cast %51 : vector<128xf32> to vector<128x1xf32>
    %53 = vector.broadcast %52 : vector<128x1xf32> to vector<128x128xf32>
    %54 = arith.subf %50, %53 : vector<128x128xf32>
    %55 = math.exp %54 : vector<128x128xf32>
    %cst_26 = arith.constant dense<0.000000e+00> : vector<128xf32>
    %56 = vector.multi_reduction <add>, %55, %cst_26 [1] : vector<128x128xf32> to vector<128xf32>
    %57 = vector.shape_cast %56 : vector<128xf32> to vector<128x1xf32>
    %58 = tpu.reciprocal %57 {approx = true} : vector<128x1xf32> -> vector<128x1xf32>
    %59 = vector.broadcast %58 : vector<128x1xf32> to vector<128x128xf32>
    %60 = arith.mulf %55, %59 : vector<128x128xf32>
    %61 = arith.truncf %60 : vector<128x128xf32> to vector<128x128xbf16>
    %cst_27 = arith.constant dense<0.000000e+00> : vector<128x128xf32>
    %62 = tpu.matmul %61, %43, %cst_27 {dimension_numbers = #tpu.dot_dimension_numbers<[1], [0], [0], [1], [0, 0, 1, 1], [], []>} : vector<128x128xbf16>, vector<128x128xbf16>, vector<128x128xf32> -> vector<128x128xf32>
    %63 = arith.truncf %62 : vector<128x128xf32> to vector<128x128xbf16>
    %c0_28 = arith.constant 0 : index
    %c0_29 = arith.constant 0 : index
    %c0_30 = arith.constant 0 : index
    %64 = vector.load %arg8[%c0_28, %c0_29, %c0_30] : memref<1x128x128xbf16, #tpu.memory_space<vmem>>, vector<1x128x128xbf16>
    %65 = vector.shape_cast %64 : vector<1x128x128xbf16> to vector<128x128xbf16>
    %cst_31 = arith.constant dense<0.000000e+00> : vector<128x128xf32>
    %66 = tpu.matmul %63, %65, %cst_31 {dimension_numbers = #tpu.dot_dimension_numbers<[1], [0], [0], [1], [0, 0, 1, 1], [], []>} : vector<128x128xbf16>, vector<128x128xbf16>, vector<128x128xf32> -> vector<128x128xf32>
    %c0_32 = arith.constant 0 : index
    %c0_33 = arith.constant 0 : index
    %c0_34 = arith.constant 0 : index
    %67 = vector.load %arg9[%c0_32, %c0_33, %c0_34] : memref<1x1x128xf32, #tpu.memory_space<vmem>>, vector<1x1x128xf32>
    %68 = vector.shape_cast %67 : vector<1x1x128xf32> to vector<1x128xf32>
    %69 = vector.broadcast %68 : vector<1x128xf32> to vector<128x128xf32>
    %70 = arith.addf %66, %69 : vector<128x128xf32>
    %71 = arith.addf %3, %70 : vector<128x128xf32>
    %c0_35 = arith.constant 0 : index
    %c0_36 = arith.constant 0 : index
    %c0_37 = arith.constant 0 : index
    %72 = vector.load %arg10[%c0_35, %c0_36, %c0_37] : memref<1x1x128xf32, #tpu.memory_space<vmem>>, vector<1x1x128xf32>
    %73 = vector.shape_cast %72 : vector<1x1x128xf32> to vector<1x128xf32>
    %c0_38 = arith.constant 0 : index
    %c0_39 = arith.constant 0 : index
    %c0_40 = arith.constant 0 : index
    %74 = vector.load %arg11[%c0_38, %c0_39, %c0_40] : memref<1x1x128xf32, #tpu.memory_space<vmem>>, vector<1x1x128xf32>
    %75 = vector.shape_cast %74 : vector<1x1x128xf32> to vector<1x128xf32>
    %cst_41 = arith.constant dense<0.000000e+00> : vector<128xf32>
    %76 = vector.multi_reduction <add>, %71, %cst_41 [1] : vector<128x128xf32> to vector<128xf32>
    %77 = vector.shape_cast %76 : vector<128xf32> to vector<128x1xf32>
    %cst_42 = arith.constant 1.280000e+02 : f32
    %78 = vector.broadcast %cst_42 : f32 to vector<128x1xf32>
    %79 = arith.divf %77, %78 : vector<128x1xf32>
    %80 = vector.broadcast %79 : vector<128x1xf32> to vector<128x128xf32>
    %81 = arith.subf %71, %80 : vector<128x128xf32>
    %82 = arith.mulf %81, %81 : vector<128x128xf32>
    %cst_43 = arith.constant dense<0.000000e+00> : vector<128xf32>
    %83 = vector.multi_reduction <add>, %82, %cst_43 [1] : vector<128x128xf32> to vector<128xf32>
    %84 = vector.shape_cast %83 : vector<128xf32> to vector<128x1xf32>
    %cst_44 = arith.constant 1.280000e+02 : f32
    %85 = vector.broadcast %cst_44 : f32 to vector<128x1xf32>
    %86 = arith.divf %84, %85 : vector<128x1xf32>
    %cst_45 = arith.constant 9.99999974E-6 : f32
    %87 = vector.broadcast %cst_45 : f32 to vector<128x1xf32>
    %88 = arith.addf %86, %87 : vector<128x1xf32>
    %89 = math.rsqrt %88 : vector<128x1xf32>
    %90 = vector.broadcast %89 : vector<128x1xf32> to vector<128x128xf32>
    %91 = arith.mulf %81, %90 : vector<128x128xf32>
    %92 = vector.broadcast %73 : vector<1x128xf32> to vector<128x128xf32>
    %93 = arith.mulf %91, %92 : vector<128x128xf32>
    %94 = vector.broadcast %75 : vector<1x128xf32> to vector<128x128xf32>
    %95 = arith.addf %93, %94 : vector<128x128xf32>
    %96 = arith.truncf %95 : vector<128x128xf32> to vector<128x128xbf16>
    %c0_46 = arith.constant 0 : index
    %c0_47 = arith.constant 0 : index
    %c0_48 = arith.constant 0 : index
    %97 = vector.load %arg12[%c0_46, %c0_47, %c0_48] : memref<1x128x512xbf16, #tpu.memory_space<vmem>>, vector<1x128x512xbf16>
    %98 = vector.shape_cast %97 : vector<1x128x512xbf16> to vector<128x512xbf16>
    %cst_49 = arith.constant dense<0.000000e+00> : vector<128x512xf32>
    %99 = tpu.matmul %96, %98, %cst_49 {dimension_numbers = #tpu.dot_dimension_numbers<[1], [0], [0], [1], [0, 0, 1, 1], [], []>} : vector<128x128xbf16>, vector<128x512xbf16>, vector<128x512xf32> -> vector<128x512xf32>
    %c0_50 = arith.constant 0 : index
    %c0_51 = arith.constant 0 : index
    %c0_52 = arith.constant 0 : index
    %100 = vector.load %arg13[%c0_50, %c0_51, %c0_52] : memref<1x1x512xf32, #tpu.memory_space<vmem>>, vector<1x1x512xf32>
    %101 = vector.shape_cast %100 : vector<1x1x512xf32> to vector<1x512xf32>
    %102 = vector.broadcast %101 : vector<1x512xf32> to vector<128x512xf32>
    %103 = arith.addf %99, %102 : vector<128x512xf32>
    %cst_53 = arith.constant 0.000000e+00 : f32
    %104 = vector.broadcast %cst_53 : f32 to vector<128x512xf32>
    %105 = arith.maximumf %103, %104 : vector<128x512xf32>
    %106 = arith.truncf %105 : vector<128x512xf32> to vector<128x512xbf16>
    %c0_54 = arith.constant 0 : index
    %c0_55 = arith.constant 0 : index
    %c0_56 = arith.constant 0 : index
    %107 = vector.load %arg14[%c0_54, %c0_55, %c0_56] : memref<1x512x128xbf16, #tpu.memory_space<vmem>>, vector<1x512x128xbf16>
    %108 = vector.shape_cast %107 : vector<1x512x128xbf16> to vector<512x128xbf16>
    %cst_57 = arith.constant dense<0.000000e+00> : vector<128x128xf32>
    %109 = tpu.matmul %106, %108, %cst_57 {dimension_numbers = #tpu.dot_dimension_numbers<[1], [0], [0], [1], [0, 0, 1, 1], [], []>} : vector<128x512xbf16>, vector<512x128xbf16>, vector<128x128xf32> -> vector<128x128xf32>
    %c0_58 = arith.constant 0 : index
    %c0_59 = arith.constant 0 : index
    %c0_60 = arith.constant 0 : index
    %110 = vector.load %arg15[%c0_58, %c0_59, %c0_60] : memref<1x1x128xf32, #tpu.memory_space<vmem>>, vector<1x1x128xf32>
    %111 = vector.shape_cast %110 : vector<1x1x128xf32> to vector<1x128xf32>
    %112 = vector.broadcast %111 : vector<1x128xf32> to vector<128x128xf32>
    %113 = arith.addf %109, %112 : vector<128x128xf32>
    %114 = arith.addf %71, %113 : vector<128x128xf32>
    %c0_61 = arith.constant 0 : index
    %c0_62 = arith.constant 0 : index
    %115 = vector.load %arg17[%c0_61, %c0_62] : memref<128x128xf32, #tpu.memory_space<vmem>>, vector<128x128xf32>
    tpu.vector_store %arg17[%c0_61, %c0_62], %114 {strides = array<i32>} : memref<128x128xf32, #tpu.memory_space<vmem>>, vector<128x128xf32>,
    %c1_i32 = arith.constant 1 : i32
    %116 = arith.cmpi eq, %arg1, %c1_i32 : i32
    %117 = arith.extui %116 : i1 to i32
    %c0_i32_63 = arith.constant 0 : i32
    %118 = arith.cmpi ne, %117, %c0_i32_63 : i32
    scf.if %118 {
      %c0_64 = arith.constant 0 : index
      %c0_65 = arith.constant 0 : index
      %119 = vector.load %arg17[%c0_64, %c0_65] : memref<128x128xf32, #tpu.memory_space<vmem>>, vector<128x128xf32>
      %c0_66 = arith.constant 0 : index
      %c0_67 = arith.constant 0 : index
      %c0_68 = arith.constant 0 : index
      %120 = vector.load %arg16[%c0_66, %c0_67, %c0_68] : memref<1x128x128xf32, #tpu.memory_space<vmem>>, vector<1x128x128xf32>
      %121 = vector.shape_cast %120 : vector<1x128x128xf32> to vector<128x128xf32>
      %122 = vector.shape_cast %119 : vector<128x128xf32> to vector<1x128x128xf32>
      tpu.vector_store %arg16[%c0_66, %c0_67, %c0_68], %122 {strides = array<i32>} : memref<1x128x128xf32, #tpu.memory_space<vmem>>, vector<1x128x128xf32>,
    } else {
    }
    return
  }
  func.func @transform_0(%arg0: i32, %arg1: i32) -> (i32, i32, i32) {
    %c0_i32 = arith.constant 0 : i32
    %c0_i32_0 = arith.constant 0 : i32
    %c0_i32_1 = arith.constant 0 : i32
    return %arg0, %c0_i32, %c0_i32_0 : i32, i32, i32
  }
  func.func @transform_1(%arg0: i32, %arg1: i32) -> (i32, i32, i32) {
    %c0_i32 = arith.constant 0 : i32
    %c0_i32_0 = arith.constant 0 : i32
    %c0_i32_1 = arith.constant 0 : i32
    return %arg0, %c0_i32, %c0_i32_0 : i32, i32, i32
  }
  func.func @transform_2(%arg0: i32, %arg1: i32) -> (i32, i32, i32) {
    %c0_i32 = arith.constant 0 : i32
    %c0_i32_0 = arith.constant 0 : i32
    %c0_i32_1 = arith.constant 0 : i32
    return %arg1, %c0_i32, %c0_i32_0 : i32, i32, i32
  }
  func.func @transform_3(%arg0: i32, %arg1: i32) -> (i32, i32, i32) {
    %c0_i32 = arith.constant 0 : i32
    %c0_i32_0 = arith.constant 0 : i32
    %c0_i32_1 = arith.constant 0 : i32
    return %arg1, %c0_i32, %c0_i32_0 : i32, i32, i32
  }
  func.func @transform_4(%arg0: i32, %arg1: i32) -> (i32, i32, i32) {
    %c0_i32 = arith.constant 0 : i32
    %c0_i32_0 = arith.constant 0 : i32
    %c0_i32_1 = arith.constant 0 : i32
    return %arg1, %c0_i32, %c0_i32_0 : i32, i32, i32
  }
  func.func @transform_5(%arg0: i32, %arg1: i32) -> (i32, i32, i32) {
    %c0_i32 = arith.constant 0 : i32
    %c0_i32_0 = arith.constant 0 : i32
    %c0_i32_1 = arith.constant 0 : i32
    return %arg1, %c0_i32, %c0_i32_0 : i32, i32, i32
  }
  func.func @transform_6(%arg0: i32, %arg1: i32) -> (i32, i32, i32) {
    %c0_i32 = arith.constant 0 : i32
    %c0_i32_0 = arith.constant 0 : i32
    %c0_i32_1 = arith.constant 0 : i32
    return %arg1, %c0_i32, %c0_i32_0 : i32, i32, i32
  }
  func.func @transform_7(%arg0: i32, %arg1: i32) -> (i32, i32, i32) {
    %c0_i32 = arith.constant 0 : i32
    %c0_i32_0 = arith.constant 0 : i32
    %c0_i32_1 = arith.constant 0 : i32
    return %arg1, %c0_i32, %c0_i32_0 : i32, i32, i32
  }
  func.func @transform_8(%arg0: i32, %arg1: i32) -> (i32, i32, i32) {
    %c0_i32 = arith.constant 0 : i32
    %c0_i32_0 = arith.constant 0 : i32
    %c0_i32_1 = arith.constant 0 : i32
    return %arg1, %c0_i32, %c0_i32_0 : i32, i32, i32
  }
  func.func @transform_9(%arg0: i32, %arg1: i32) -> (i32, i32, i32) {
    %c0_i32 = arith.constant 0 : i32
    %c0_i32_0 = arith.constant 0 : i32
    %c0_i32_1 = arith.constant 0 : i32
    return %arg1, %c0_i32, %c0_i32_0 : i32, i32, i32
  }
  func.func @transform_10(%arg0: i32, %arg1: i32) -> (i32, i32, i32) {
    %c0_i32 = arith.constant 0 : i32
    %c0_i32_0 = arith.constant 0 : i32
    %c0_i32_1 = arith.constant 0 : i32
    return %arg1, %c0_i32, %c0_i32_0 : i32, i32, i32
  }
  func.func @transform_11(%arg0: i32, %arg1: i32) -> (i32, i32, i32) {
    %c0_i32 = arith.constant 0 : i32
    %c0_i32_0 = arith.constant 0 : i32
    %c0_i32_1 = arith.constant 0 : i32
    return %arg1, %c0_i32, %c0_i32_0 : i32, i32, i32
  }
  func.func @transform_12(%arg0: i32, %arg1: i32) -> (i32, i32, i32) {
    %c0_i32 = arith.constant 0 : i32
    %c0_i32_0 = arith.constant 0 : i32
    %c0_i32_1 = arith.constant 0 : i32
    return %arg1, %c0_i32, %c0_i32_0 : i32, i32, i32
  }
  func.func @transform_13(%arg0: i32, %arg1: i32) -> (i32, i32, i32) {
    %c0_i32 = arith.constant 0 : i32
    %c0_i32_0 = arith.constant 0 : i32
    %c0_i32_1 = arith.constant 0 : i32
    return %arg1, %c0_i32, %c0_i32_0 : i32, i32, i32
  }
  func.func @transform_14(%arg0: i32, %arg1: i32) -> (i32, i32, i32) {
    %c0_i32 = arith.constant 0 : i32
    %c0_i32_0 = arith.constant 0 : i32
    %c0_i32_1 = arith.constant 0 : i32
    return %arg0, %c0_i32, %c0_i32_0 : i32, i32, i32
  }
}

module attributes {stable_mosaic.version = 11 : i64} {
  func.func @output_logits_kernel(%arg0: i32, %arg1: i32, %arg2: memref<1x128x128xf32, #tpu.memory_space<vmem>>, %arg3: memref<1x128xf32, #tpu.memory_space<vmem>>, %arg4: memref<1x128xf32, #tpu.memory_space<vmem>>, %arg5: memref<128x128xbf16, #tpu.memory_space<vmem>>, %arg6: memref<1x128xf32, #tpu.memory_space<vmem>>, %arg7: memref<1x128x128xf32, #tpu.memory_space<vmem>>, %arg8: memref<1x128x1xf32, #tpu.memory_space<vmem>>, %arg9: memref<128x128xbf16, #tpu.memory_space<vmem>>, %arg10: memref<128x1xf32, #tpu.memory_space<vmem>>, %arg11: memref<128x1xf32, #tpu.memory_space<vmem>>) attributes {dimension_semantics = [#tpu.dimension_semantics<parallel>, #tpu.dimension_semantics<arbitrary>], iteration_bounds = array<i64: 2, 2>, scalar_prefetch = 0 : i64, scratch_operands = 3 : i64, tpu.core_type = #tpu.core_type<tc>, window_params = [{transform_indices = @transform_0, window_bounds = array<i64: 1, 128, 128>}, {pipeline_mode = #tpu.pipeline_mode<synchronous>, transform_indices = @transform_1, window_bounds = array<i64: 1, 128>}, {pipeline_mode = #tpu.pipeline_mode<synchronous>, transform_indices = @transform_2, window_bounds = array<i64: 1, 128>}, {transform_indices = @transform_3, window_bounds = array<i64: 128, 128>}, {transform_indices = @transform_4, window_bounds = array<i64: 1, 128>}, {transform_indices = @transform_5, window_bounds = array<i64: 1, 128, 128>}, {transform_indices = @transform_6, window_bounds = array<i64: 1, 128, 1>}]} {
    %c0_i32 = arith.constant 0 : i32
    %0 = arith.cmpi eq, %arg1, %c0_i32 : i32
    %1 = arith.extui %0 : i1 to i32
    %c0_i32_0 = arith.constant 0 : i32
    %2 = arith.cmpi ne, %1, %c0_i32_0 : i32
    scf.if %2 {
      %c0_20 = arith.constant 0 : index
      %c0_21 = arith.constant 0 : index
      %c0_22 = arith.constant 0 : index
      %31 = vector.load %arg2[%c0_20, %c0_21, %c0_22] : memref<1x128x128xf32, #tpu.memory_space<vmem>>, vector<1x128x128xf32>
      %32 = vector.shape_cast %31 : vector<1x128x128xf32> to vector<128x128xf32>
      %c0_23 = arith.constant 0 : index
      %c0_24 = arith.constant 0 : index
      %33 = vector.load %arg3[%c0_23, %c0_24] : memref<1x128xf32, #tpu.memory_space<vmem>>, vector<1x128xf32>
      %c0_25 = arith.constant 0 : index
      %c0_26 = arith.constant 0 : index
      %34 = vector.load %arg4[%c0_25, %c0_26] : memref<1x128xf32, #tpu.memory_space<vmem>>, vector<1x128xf32>
      %cst_27 = arith.constant dense<0.000000e+00> : vector<128xf32>
      %35 = vector.multi_reduction <add>, %32, %cst_27 [1] : vector<128x128xf32> to vector<128xf32>
      %36 = vector.shape_cast %35 : vector<128xf32> to vector<128x1xf32>
      %cst_28 = arith.constant 1.280000e+02 : f32
      %37 = vector.broadcast %cst_28 : f32 to vector<128x1xf32>
      %38 = arith.divf %36, %37 : vector<128x1xf32>
      %39 = vector.broadcast %38 : vector<128x1xf32> to vector<128x128xf32>
      %40 = arith.subf %32, %39 : vector<128x128xf32>
      %41 = arith.mulf %40, %40 : vector<128x128xf32>
      %cst_29 = arith.constant dense<0.000000e+00> : vector<128xf32>
      %42 = vector.multi_reduction <add>, %41, %cst_29 [1] : vector<128x128xf32> to vector<128xf32>
      %43 = vector.shape_cast %42 : vector<128xf32> to vector<128x1xf32>
      %cst_30 = arith.constant 1.280000e+02 : f32
      %44 = vector.broadcast %cst_30 : f32 to vector<128x1xf32>
      %45 = arith.divf %43, %44 : vector<128x1xf32>
      %cst_31 = arith.constant 9.99999974E-6 : f32
      %46 = vector.broadcast %cst_31 : f32 to vector<128x1xf32>
      %47 = arith.addf %45, %46 : vector<128x1xf32>
      %48 = math.rsqrt %47 : vector<128x1xf32>
      %49 = vector.broadcast %48 : vector<128x1xf32> to vector<128x128xf32>
      %50 = arith.mulf %40, %49 : vector<128x128xf32>
      %51 = vector.broadcast %33 : vector<1x128xf32> to vector<128x128xf32>
      %52 = arith.mulf %50, %51 : vector<128x128xf32>
      %53 = vector.broadcast %34 : vector<1x128xf32> to vector<128x128xf32>
      %54 = arith.addf %52, %53 : vector<128x128xf32>
      %55 = arith.truncf %54 : vector<128x128xf32> to vector<128x128xbf16>
      %c0_32 = arith.constant 0 : index
      %c0_33 = arith.constant 0 : index
      %56 = vector.load %arg9[%c0_32, %c0_33] : memref<128x128xbf16, #tpu.memory_space<vmem>>, vector<128x128xbf16>
      tpu.vector_store %arg9[%c0_32, %c0_33], %55 {strides = array<i32>} : memref<128x128xbf16, #tpu.memory_space<vmem>>, vector<128x128xbf16>,
      %cst_34 = arith.constant 0xFF800000 : f32
      %57 = vector.broadcast %cst_34 : f32 to vector<128x1xf32>
      %c0_35 = arith.constant 0 : index
      %c0_36 = arith.constant 0 : index
      %58 = vector.load %arg10[%c0_35, %c0_36] : memref<128x1xf32, #tpu.memory_space<vmem>>, vector<128x1xf32>
      tpu.vector_store %arg10[%c0_35, %c0_36], %57 {strides = array<i32>} : memref<128x1xf32, #tpu.memory_space<vmem>>, vector<128x1xf32>,
      %cst_37 = arith.constant 0.000000e+00 : f32
      %59 = vector.broadcast %cst_37 : f32 to vector<128x1xf32>
      %c0_38 = arith.constant 0 : index
      %c0_39 = arith.constant 0 : index
      %60 = vector.load %arg11[%c0_38, %c0_39] : memref<128x1xf32, #tpu.memory_space<vmem>>, vector<128x1xf32>
      tpu.vector_store %arg11[%c0_38, %c0_39], %59 {strides = array<i32>} : memref<128x1xf32, #tpu.memory_space<vmem>>, vector<128x1xf32>,
    } else {
    }
    %c0 = arith.constant 0 : index
    %c0_1 = arith.constant 0 : index
    %3 = vector.load %arg9[%c0, %c0_1] : memref<128x128xbf16, #tpu.memory_space<vmem>>, vector<128x128xbf16>
    %c0_2 = arith.constant 0 : index
    %c0_3 = arith.constant 0 : index
    %4 = vector.load %arg5[%c0_2, %c0_3] : memref<128x128xbf16, #tpu.memory_space<vmem>>, vector<128x128xbf16>
    %cst = arith.constant dense<0.000000e+00> : vector<128x128xf32>
    %5 = tpu.matmul %3, %4, %cst {dimension_numbers = #tpu.dot_dimension_numbers<[1], [0], [0], [1], [0, 0, 1, 1], [], []>} : vector<128x128xbf16>, vector<128x128xbf16>, vector<128x128xf32> -> vector<128x128xf32>
    %c0_4 = arith.constant 0 : index
    %c0_5 = arith.constant 0 : index
    %6 = vector.load %arg6[%c0_4, %c0_5] : memref<1x128xf32, #tpu.memory_space<vmem>>, vector<1x128xf32>
    %7 = vector.broadcast %6 : vector<1x128xf32> to vector<128x128xf32>
    %8 = arith.addf %5, %7 : vector<128x128xf32>
    %c0_6 = arith.constant 0 : index
    %c0_7 = arith.constant 0 : index
    %c0_8 = arith.constant 0 : index
    %9 = vector.load %arg7[%c0_6, %c0_7, %c0_8] : memref<1x128x128xf32, #tpu.memory_space<vmem>>, vector<1x128x128xf32>
    %10 = vector.shape_cast %9 : vector<1x128x128xf32> to vector<128x128xf32>
    %11 = vector.shape_cast %8 : vector<128x128xf32> to vector<1x128x128xf32>
    tpu.vector_store %arg7[%c0_6, %c0_7, %c0_8], %11 {strides = array<i32>} : memref<1x128x128xf32, #tpu.memory_space<vmem>>, vector<1x128x128xf32>,
    %c0_9 = arith.constant 0 : index
    %c0_10 = arith.constant 0 : index
    %12 = vector.load %arg10[%c0_9, %c0_10] : memref<128x1xf32, #tpu.memory_space<vmem>>, vector<128x1xf32>
    %cst_11 = arith.constant dense<0xFF800000> : vector<128xf32>
    %13 = vector.multi_reduction <maximumf>, %8, %cst_11 [1] : vector<128x128xf32> to vector<128xf32>
    %14 = vector.shape_cast %13 : vector<128xf32> to vector<128x1xf32>
    %15 = arith.maximumf %12, %14 : vector<128x1xf32>
    %c0_12 = arith.constant 0 : index
    %c0_13 = arith.constant 0 : index
    %16 = vector.load %arg11[%c0_12, %c0_13] : memref<128x1xf32, #tpu.memory_space<vmem>>, vector<128x1xf32>
    %17 = arith.subf %12, %15 : vector<128x1xf32>
    %18 = math.exp %17 : vector<128x1xf32>
    %19 = arith.mulf %16, %18 : vector<128x1xf32>
    %20 = vector.broadcast %15 : vector<128x1xf32> to vector<128x128xf32>
    %21 = arith.subf %8, %20 : vector<128x128xf32>
    %22 = math.exp %21 : vector<128x128xf32>
    %cst_14 = arith.constant dense<0.000000e+00> : vector<128xf32>
    %23 = vector.multi_reduction <add>, %22, %cst_14 [1] : vector<128x128xf32> to vector<128xf32>
    %24 = vector.shape_cast %23 : vector<128xf32> to vector<128x1xf32>
    %25 = arith.addf %19, %24 : vector<128x1xf32>
    %c0_15 = arith.constant 0 : index
    %c0_16 = arith.constant 0 : index
    %26 = vector.load %arg11[%c0_15, %c0_16] : memref<128x1xf32, #tpu.memory_space<vmem>>, vector<128x1xf32>
    tpu.vector_store %arg11[%c0_15, %c0_16], %25 {strides = array<i32>} : memref<128x1xf32, #tpu.memory_space<vmem>>, vector<128x1xf32>,
    %c0_17 = arith.constant 0 : index
    %c0_18 = arith.constant 0 : index
    %27 = vector.load %arg10[%c0_17, %c0_18] : memref<128x1xf32, #tpu.memory_space<vmem>>, vector<128x1xf32>
    tpu.vector_store %arg10[%c0_17, %c0_18], %15 {strides = array<i32>} : memref<128x1xf32, #tpu.memory_space<vmem>>, vector<128x1xf32>,
    %c1_i32 = arith.constant 1 : i32
    %28 = arith.cmpi eq, %arg1, %c1_i32 : i32
    %29 = arith.extui %28 : i1 to i32
    %c0_i32_19 = arith.constant 0 : i32
    %30 = arith.cmpi ne, %29, %c0_i32_19 : i32
    scf.if %30 {
      %c0_20 = arith.constant 0 : index
      %c0_21 = arith.constant 0 : index
      %31 = vector.load %arg10[%c0_20, %c0_21] : memref<128x1xf32, #tpu.memory_space<vmem>>, vector<128x1xf32>
      %c0_22 = arith.constant 0 : index
      %c0_23 = arith.constant 0 : index
      %32 = vector.load %arg11[%c0_22, %c0_23] : memref<128x1xf32, #tpu.memory_space<vmem>>, vector<128x1xf32>
      %33 = math.log %32 : vector<128x1xf32>
      %34 = arith.addf %31, %33 : vector<128x1xf32>
      %c0_24 = arith.constant 0 : index
      %c0_25 = arith.constant 0 : index
      %c0_26 = arith.constant 0 : index
      %35 = vector.load %arg8[%c0_24, %c0_25, %c0_26] : memref<1x128x1xf32, #tpu.memory_space<vmem>>, vector<1x128x1xf32>
      %36 = vector.shape_cast %35 : vector<1x128x1xf32> to vector<128x1xf32>
      %37 = vector.shape_cast %34 : vector<128x1xf32> to vector<1x128x1xf32>
      tpu.vector_store %arg8[%c0_24, %c0_25, %c0_26], %37 {strides = array<i32>} : memref<1x128x1xf32, #tpu.memory_space<vmem>>, vector<1x128x1xf32>,
    } else {
    }
    return
  }
  func.func @transform_0(%arg0: i32, %arg1: i32) -> (i32, i32, i32) {
    %c0_i32 = arith.constant 0 : i32
    %c0_i32_0 = arith.constant 0 : i32
    %c0_i32_1 = arith.constant 0 : i32
    return %arg0, %c0_i32, %c0_i32_0 : i32, i32, i32
  }
  func.func @transform_1(%arg0: i32, %arg1: i32) -> (i32, i32) {
    %c0_i32 = arith.constant 0 : i32
    %c0_i32_0 = arith.constant 0 : i32
    %c0_i32_1 = arith.constant 0 : i32
    return %c0_i32, %c0_i32_0 : i32, i32
  }
  func.func @transform_2(%arg0: i32, %arg1: i32) -> (i32, i32) {
    %c0_i32 = arith.constant 0 : i32
    %c0_i32_0 = arith.constant 0 : i32
    %c0_i32_1 = arith.constant 0 : i32
    return %c0_i32, %c0_i32_0 : i32, i32
  }
  func.func @transform_3(%arg0: i32, %arg1: i32) -> (i32, i32) {
    %c0_i32 = arith.constant 0 : i32
    %c0_i32_0 = arith.constant 0 : i32
    return %c0_i32, %arg1 : i32, i32
  }
  func.func @transform_4(%arg0: i32, %arg1: i32) -> (i32, i32) {
    %c0_i32 = arith.constant 0 : i32
    %c0_i32_0 = arith.constant 0 : i32
    return %c0_i32, %arg1 : i32, i32
  }
  func.func @transform_5(%arg0: i32, %arg1: i32) -> (i32, i32, i32) {
    %c0_i32 = arith.constant 0 : i32
    %c0_i32_0 = arith.constant 0 : i32
    return %arg0, %c0_i32, %arg1 : i32, i32, i32
  }
  func.func @transform_6(%arg0: i32, %arg1: i32) -> (i32, i32, i32) {
    %c0_i32 = arith.constant 0 : i32
    %c0_i32_0 = arith.constant 0 : i32
    %c0_i32_1 = arith.constant 0 : i32
    return %arg0, %c0_i32, %c0_i32_0 : i32, i32, i32
  }
}

module attributes {stable_mosaic.version = 11 : i64} {
  func.func @log_softmax_kernel(%arg0: i32, %arg1: i32, %arg2: memref<1x128x128xf32, #tpu.memory_space<vmem>>, %arg3: memref<1x128x1xf32, #tpu.memory_space<vmem>>, %arg4: memref<1x128x128xf32, #tpu.memory_space<vmem>>) attributes {dimension_semantics = [#tpu.dimension_semantics<parallel>, #tpu.dimension_semantics<parallel>], iteration_bounds = array<i64: 2, 2>, scalar_prefetch = 0 : i64, scratch_operands = 0 : i64, tpu.core_type = #tpu.core_type<tc>, window_params = [{transform_indices = @transform_0, window_bounds = array<i64: 1, 128, 128>}, {transform_indices = @transform_1, window_bounds = array<i64: 1, 128, 1>}, {transform_indices = @transform_2, window_bounds = array<i64: 1, 128, 128>}]} {
    %c0 = arith.constant 0 : index
    %c0_0 = arith.constant 0 : index
    %c0_1 = arith.constant 0 : index
    %0 = vector.load %arg2[%c0, %c0_0, %c0_1] : memref<1x128x128xf32, #tpu.memory_space<vmem>>, vector<1x128x128xf32>
    %1 = vector.shape_cast %0 : vector<1x128x128xf32> to vector<128x128xf32>
    %c0_2 = arith.constant 0 : index
    %c0_3 = arith.constant 0 : index
    %c0_4 = arith.constant 0 : index
    %2 = vector.load %arg3[%c0_2, %c0_3, %c0_4] : memref<1x128x1xf32, #tpu.memory_space<vmem>>, vector<1x128x1xf32>
    %3 = vector.shape_cast %2 : vector<1x128x1xf32> to vector<128x1xf32>
    %4 = vector.broadcast %3 : vector<128x1xf32> to vector<128x128xf32>
    %5 = arith.subf %1, %4 : vector<128x128xf32>
    %c0_5 = arith.constant 0 : index
    %c0_6 = arith.constant 0 : index
    %c0_7 = arith.constant 0 : index
    %6 = vector.load %arg4[%c0_5, %c0_6, %c0_7] : memref<1x128x128xf32, #tpu.memory_space<vmem>>, vector<1x128x128xf32>
    %7 = vector.shape_cast %6 : vector<1x128x128xf32> to vector<128x128xf32>
    %8 = vector.shape_cast %5 : vector<128x128xf32> to vector<1x128x128xf32>
    tpu.vector_store %arg4[%c0_5, %c0_6, %c0_7], %8 {strides = array<i32>} : memref<1x128x128xf32, #tpu.memory_space<vmem>>, vector<1x128x128xf32>,
    return
  }
  func.func @transform_0(%arg0: i32, %arg1: i32) -> (i32, i32, i32) {
    %c0_i32 = arith.constant 0 : i32
    %c0_i32_0 = arith.constant 0 : i32
    return %arg0, %c0_i32, %arg1 : i32, i32, i32
  }
  func.func @transform_1(%arg0: i32, %arg1: i32) -> (i32, i32, i32) {
    %c0_i32 = arith.constant 0 : i32
    %c0_i32_0 = arith.constant 0 : i32
    %c0_i32_1 = arith.constant 0 : i32
    return %arg0, %c0_i32, %c0_i32_0 : i32, i32, i32
  }
  func.func @transform_2(%arg0: i32, %arg1: i32) -> (i32, i32, i32) {
    %c0_i32 = arith.constant 0 : i32
    %c0_i32_0 = arith.constant 0 : i32
    return %arg0, %c0_i32, %arg1 : i32, i32, i32
  }
}

</mosaic_0001>

<llo_original>
// kernel: full_transformer_forward.5
$region0: #{full_transformer_forward.5}
  #allocation0 [shape = 'u32[]', space=smem, size = 0x4, offset = 0x4, fixed_abs, tag = 'smem constant byte address 0x4 - core index']
  #allocation1 [shape = 'u32[144,128]{1,0:T(1,128)}', space=vmem, size = 0x12000, scoped, tag = 'internal scratch']
  %s0 = inlined_call_operand.vmem [shape: f32[2,128,256], index: 0, kind: input, shape index: {}]
  %s1 = inlined_call_operand.vmem [shape: f32[2,128,1], index: 1, kind: input, shape index: {}]
  %s2 = inlined_call_operand.hbm [shape: f32[2,128,256], index: 2, kind: output, shape index: {}]
  %s3 = sld [smem:[#allocation0]]
  $region79: #{full_transformer_forward.5} parent=0
    _
  %s5 = ssub.s32 1, %s3
  %s6 = scalar_select 0, %s5, %s3
  $region1: #{full_transformer_forward.5} parent=0
    #allocation2 [shape = 'u8[131072]{0}', space=vmem, size = 0x20000, scoped, tag = 'input window, operand 0']
    #allocation3 [shape = 'u8[131072]{0}', space=vmem, size = 0x20000, scoped, tag = 'output window, operand 0']
    #allocation4 [shape = 's32[2]{0}', space=sflag, size = 0x8, scoped, tag = 'scoped memory for full_transformer_forward.5']
    %7 = vsyncpa [#allocation4], 0
    %s8 = scalar_lea.sflag [#allocation4], 1
    %9 = vsyncpa %s8, 0
    loop: start=0, step=1, limit=6
    $region2: #{full_transformer_forward.5} parent=1 // loop_pre_header
      _
    $region3: #{full_transformer_forward.5} parent=1 // loop_header
      %s11 = sphi 0, %s15
      %p12 = scmp.ge.s32.totalorder %s11, 6
      %s18 = sphi 0, %s30
      %s19 = sphi 0, %s26
      %s20 = sphi 0, %s18
      %s21 = sphi 0, %s19
      %s22 = sphi 0, %s20
      %s23 = sphi 0, %s21
      %s35 = sphi 0, %s37
      %s38 = sphi 0, %s35
      %s39 = sphi 0, %s38
      %s55 = sphi 0, %s39
      %s61 = sphi 0, %s63
      %s64 = sphi 0, %s61
      %s65 = sphi 0, %s64
      %s81 = sphi 0, %s65
      %s89 = sphi 0, %s91
      %s92 = sphi 0, %s89
      %s93 = sphi 0, %s92
      %s109 = sphi 0, %s93
    $region4: #{full_transformer_forward.5} parent=1 // loop_header_branch
      %14 = sbr.rel (%p12) target = $region8
    $region5: #{full_transformer_forward.5} parent=1 // loop_body
      %s16 = ssub.s32 %s11, 1
      %s17 = ssub.s32 %s11, 2
      %s24 = sadd.s32 1, %s19
      %p25 = scmp.ge.s32.totalorder %s24, 2
      %s26 = scalar_select %p25, 0, %s24
      %s27 = sadd.s32 1, %s18
      %s28 = scalar_select %p25, %s27, %s18
      %p29 = scmp.ge.s32.totalorder %s28, 2
      %s30 = scalar_select %p29, 0, %s28
      %s31 = ssub.s32 %s18, %s30
      %s32 = ssub.s32 %s19, %s26
      %s33 = sor.u32 %s31, %s32
      %p34 = scmp.eq.s32.totalorder %s33, 0
      %s36 = sadd.s32 %s35, 1
      %s37 = scalar_select %p34, %s35, %s36
      %p40 = pneg %p34
      %p41 = scmp.eq.s32.totalorder %s11, 3
      %p42 = por %p40, %p41
      %p43 = scmp.ne.s32.totalorder %s35, %s38
      %p44 = scmp.eq.s32.totalorder %s11, 0
      %p45 = por %p43, %p44
      %p46 = scmp.ne.s32.totalorder %s35, %s38
      %p47 = scmp.eq.s32.totalorder %s16, 3
      %p48 = por %p46, %p47
      %p49 = scmp.ne.s32.totalorder %s38, %s39
      %p50 = scmp.eq.s32.totalorder %s16, 0
      %p51 = por %p49, %p50
      %p52 = scmp.ne.s32.totalorder %s38, %s39
      %p53 = scmp.eq.s32.totalorder %s17, 3
      %p54 = por %p52, %p53
      %p56 = scmp.ne.s32.totalorder %s39, %s55
      %p57 = scmp.eq.s32.totalorder %s17, 0
      %p58 = por %p56, %p57
      %s59 = ssub.s32 %s18, %s30
      %p60 = scmp.eq.s32.totalorder %s59, 0
      %s62 = sadd.s32 %s61, 1
      %s63 = scalar_select %p60, %s61, %s62
      %p66 = pneg %p60
      %p67 = scmp.eq.s32.totalorder %s11, 3
      %p68 = por %p66, %p67
      %p69 = scmp.ne.s32.totalorder %s61, %s64
      %p70 = scmp.eq.s32.totalorder %s11, 0
      %p71 = por %p69, %p70
      %p72 = scmp.ne.s32.totalorder %s61, %s64
      %p73 = scmp.eq.s32.totalorder %s16, 3
      %p74 = por %p72, %p73
      %p75 = scmp.ne.s32.totalorder %s64, %s65
      %p76 = scmp.eq.s32.totalorder %s16, 0
      %p77 = por %p75, %p76
      %p78 = scmp.ne.s32.totalorder %s64, %s65
      %p79 = scmp.eq.s32.totalorder %s17, 3
      %p80 = por %p78, %p79
      %p82 = scmp.ne.s32.totalorder %s65, %s81
      %p83 = scmp.eq.s32.totalorder %s17, 0
      %p84 = por %p82, %p83
      %s85 = ssub.s32 %s18, %s30
      %s86 = ssub.s32 %s19, %s26
      %s87 = sor.u32 %s85, %s86
      %p88 = scmp.eq.s32.totalorder %s87, 0
      %s90 = sadd.s32 %s89, 1
      %s91 = scalar_select %p88, %s89, %s90
      %p94 = pneg %p88
      %p95 = scmp.eq.s32.totalorder %s11, 3
      %p96 = por %p94, %p95
      %p97 = scmp.ne.s32.totalorder %s89, %s92
      %p98 = scmp.eq.s32.totalorder %s11, 0
      %p99 = por %p97, %p98
      %p100 = scmp.ne.s32.totalorder %s89, %s92
      %p101 = scmp.eq.s32.totalorder %s16, 3
      %p102 = por %p100, %p101
      %p103 = scmp.ne.s32.totalorder %s92, %s93
      %p104 = scmp.eq.s32.totalorder %s16, 0
      %p105 = por %p103, %p104
      %p106 = scmp.ne.s32.totalorder %s92, %s93
      %p107 = scmp.eq.s32.totalorder %s17, 3
      %p108 = por %p106, %p107
      %p110 = scmp.ne.s32.totalorder %s93, %s109
      %p111 = scmp.eq.s32.totalorder %s17, 0
      %p112 = por %p110, %p111
      %p113 = scmp.le.s32.totalorder 1, %s11
      %p114 = scmp.lt.s32.totalorder %s11, 5
      %p115 = pnand %p113, %p114
      %p116 = pneg %p115
      // Predicated region
      $region9: #{full_transformer_forward.5} parent=5 // pred_check
        _
      $region10: #{full_transformer_forward.5} parent=5 // pred_check_branch
        %118 = sbr.rel (%p115) target = $region12
      $region11: #{full_transformer_forward.5} parent=5 // pred_region
        %s119 = ssub.s32 %s11, 1
      $region12: #{full_transformer_forward.5} parent=5 // pred_fallthru
        _
      %p120 = scmp.lt.s32.totalorder %s11, 4
      // Predicated region
      $region13: #{full_transformer_forward.5} parent=5 // pred_check
        %p121 = pneg %p120
      $region14: #{full_transformer_forward.5} parent=5 // pred_check_branch
        %123 = sbr.rel (%p121) target = $region16
      $region15: #{full_transformer_forward.5} parent=5 // pred_region
        // Predicated region
        $region17: #{full_transformer_forward.5} parent=15 // pred_check
          %p124 = pneg %p45
        $region18: #{full_transformer_forward.5} parent=15 // pred_check_branch
          %126 = sbr.rel (%p124) target = $region20
        $region19: #{full_transformer_forward.5} parent=15 // pred_region
          %s127 = sand.u32 %s35, 1
          %s128 = sand.u32 %s35, 1
          %s129 = smul.addr %s128, 128
          %s130 = scalar_lea.vmem [#allocation2], %s129
          %s131 = smul.addr %s18, 32
          %s132 = sadd.s32 %s19, %s131
          %s133 = smul.addr %s132, 8
          %s134 = scalar_lea.vmem %s0, %s133
          // Predicated region
          $region21: #{full_transformer_forward.5} parent=19 // pred_check
            _
          $region22: #{full_transformer_forward.5} parent=19 // pred_check_branch
            %136 = sbr.rel (0) target = $region24
          $region23: #{full_transformer_forward.5} parent=19 // pred_region
            // Predicated region
            $region25: #{full_transformer_forward.5} parent=23 // pred_check
              _
            $region26: #{full_transformer_forward.5} parent=23 // pred_check_branch
              %138 = sbr.rel (0) target = $region28
            $region27: #{full_transformer_forward.5} parent=23 // pred_region
              // Predicated region
              $region40: #{full_transformer_forward.5} parent=27 // pred_check
                _
              $region41: #{full_transformer_forward.5} parent=27 // pred_check_branch
                %183 = sbr.rel (0) target = $region43
              $region42: #{full_transformer_forward.5} parent=27 // pred_region
                loop: start=0, step=1, limit=1
                $region44: #{full_transformer_forward.5} parent=42 // loop_pre_header
                  _
                $region45: #{full_transformer_forward.5} parent=42 // loop_header
                  %s185 = sphi 0, %s189
                  %p186 = scmp.ge.s32.totalorder %s185, 1
                  %s190 = sphi %s134, %s134
                  %s191 = sphi %s130, %s130
                $region46: #{full_transformer_forward.5} parent=42 // loop_header_branch
                  %188 = sbr.rel (%p186) target = $region50
                $region47: #{full_transformer_forward.5} parent=42 // loop_body
                  %v192 = vld [vmem:[%s190] sm:$0xff]
                  %193 = vst [vmem:[%s191] sm:$0xff] %v192
                  %v194 = vld [vmem:[%s190 + $0x10] sm:$0xff]
                  %195 = vst [vmem:[%s191 + $0x8] sm:$0xff] %v194
                  %v196 = vld [vmem:[%s190 + $0x20] sm:$0xff]
                  %197 = vst [vmem:[%s191 + $0x10] sm:$0xff] %v196
                  %v198 = vld [vmem:[%s190 + $0x30] sm:$0xff]
                  %199 = vst [vmem:[%s191 + $0x18] sm:$0xff] %v198
                  %v200 = vld [vmem:[%s190 + $0x40] sm:$0xff]
                  %201 = vst [vmem:[%s191 + $0x20] sm:$0xff] %v200
                  %v202 = vld [vmem:[%s190 + $0x50] sm:$0xff]
                  %203 = vst [vmem:[%s191 + $0x28] sm:$0xff] %v202
                  %v204 = vld [vmem:[%s190 + $0x60] sm:$0xff]
                  %205 = vst [vmem:[%s191 + $0x30] sm:$0xff] %v204
                  %v206 = vld [vmem:[%s190 + $0x70] sm:$0xff]
                  %207 = vst [vmem:[%s191 + $0x38] sm:$0xff] %v206
                  %v208 = vld [vmem:[%s190 + $0x80] sm:$0xff]
                  %209 = vst [vmem:[%s191 + $0x40] sm:$0xff] %v208
                  %v210 = vld [vmem:[%s190 + $0x90] sm:$0xff]
                  %211 = vst [vmem:[%s191 + $0x48] sm:$0xff] %v210
                  %v212 = vld [vmem:[%s190 + $0xa0] sm:$0xff]
                  %213 = vst [vmem:[%s191 + $0x50] sm:$0xff] %v212
                  %v214 = vld [vmem:[%s190 + $0xb0] sm:$0xff]
                  %215 = vst [vmem:[%s191 + $0x58] sm:$0xff] %v214
                  %v216 = vld [vmem:[%s190 + $0xc0] sm:$0xff]
                  %217 = vst [vmem:[%s191 + $0x60] sm:$0xff] %v216
                  %v218 = vld [vmem:[%s190 + $0xd0] sm:$0xff]
                  %219 = vst [vmem:[%s191 + $0x68] sm:$0xff] %v218
                  %v220 = vld [vmem:[%s190 + $0xe0] sm:$0xff]
                  %221 = vst [vmem:[%s191 + $0x70] sm:$0xff] %v220
                  %v222 = vld [vmem:[%s190 + $0xf0] sm:$0xff]
                  %223 = vst [vmem:[%s191 + $0x78] sm:$0xff] %v222
                $region48: #{full_transformer_forward.5} parent=42 // loop_footer
                  %s189 = sadd.s32 1, %s185
                $region49: #{full_transformer_forward.5} parent=42 // loop_footer_branch
                  %184 = sbr.rel target = $region45
                $region50: #{full_transformer_forward.5} parent=42 // loop_exit
                  _
              $region43: #{full_transformer_forward.5} parent=27 // pred_fallthru
                _
              // Predicated region
              $region51: #{full_transformer_forward.5} parent=27 // pred_check
                _
              $region52: #{full_transformer_forward.5} parent=27 // pred_check_branch
                %225 = sbr.rel target = $region54
              $region53: #{full_transformer_forward.5} parent=27 // pred_region
                _
              $region54: #{full_transformer_forward.5} parent=27 // pred_fallthru
                _
            $region28: #{full_transformer_forward.5} parent=23 // pred_fallthru
              _
            // Predicated region
            $region29: #{full_transformer_forward.5} parent=23 // pred_check
              _
            $region30: #{full_transformer_forward.5} parent=23 // pred_check_branch
              %140 = sbr.rel target = $region32
            $region31: #{full_transformer_forward.5} parent=23 // pred_region
              loop: start=0, step=1, limit=1
              $region33: #{full_transformer_forward.5} parent=31 // loop_pre_header
                _
              $region34: #{full_transformer_forward.5} parent=31 // loop_header
                %s143 = sphi 0, %s147
                %p144 = scmp.ge.s32.totalorder %s143, 1
                %s148 = sphi %s134, %s134
                %s149 = sphi %s130, %s130
              $region35: #{full_transformer_forward.5} parent=31 // loop_header_branch
                %146 = sbr.rel (%p144) target = $region39
              $region36: #{full_transformer_forward.5} parent=31 // loop_body
                %v150 = vld [vmem:[%s148] sm:$0xff]
                %151 = vst [vmem:[%s149] sm:$0xff] %v150
                %v152 = vld [vmem:[%s148 + $0x10] sm:$0xff]
                %153 = vst [vmem:[%s149 + $0x8] sm:$0xff] %v152
                %v154 = vld [vmem:[%s148 + $0x20] sm:$0xff]
                %155 = vst [vmem:[%s149 + $0x10] sm:$0xff] %v154
                %v156 = vld [vmem:[%s148 + $0x30] sm:$0xff]
                %157 = vst [vmem:[%s149 + $0x18] sm:$0xff] %v156
                %v158 = vld [vmem:[%s148 + $0x40] sm:$0xff]
                %159 = vst [vmem:[%s149 + $0x20] sm:$0xff] %v158
                %v160 = vld [vmem:[%s148 + $0x50] sm:$0xff]
                %161 = vst [vmem:[%s149 + $0x28] sm:$0xff] %v160
                %v162 = vld [vmem:[%s148 + $0x60] sm:$0xff]
                %163 = vst [vmem:[%s149 + $0x30] sm:$0xff] %v162
                %v164 = vld [vmem:[%s148 + $0x70] sm:$0xff]
                %165 = vst [vmem:[%s149 + $0x38] sm:$0xff] %v164
                %v166 = vld [vmem:[%s148 + $0x80] sm:$0xff]
                %167 = vst [vmem:[%s149 + $0x40] sm:$0xff] %v166
                %v168 = vld [vmem:[%s148 + $0x90] sm:$0xff]
                %169 = vst [vmem:[%s149 + $0x48] sm:$0xff] %v168
                %v170 = vld [vmem:[%s148 + $0xa0] sm:$0xff]
                %171 = vst [vmem:[%s149 + $0x50] sm:$0xff] %v170
                %v172 = vld [vmem:[%s148 + $0xb0] sm:$0xff]
                %173 = vst [vmem:[%s149 + $0x58] sm:$0xff] %v172
                %v174 = vld [vmem:[%s148 + $0xc0] sm:$0xff]
                %175 = vst [vmem:[%s149 + $0x60] sm:$0xff] %v174
                %v176 = vld [vmem:[%s148 + $0xd0] sm:$0xff]
                %177 = vst [vmem:[%s149 + $0x68] sm:$0xff] %v176
                %v178 = vld [vmem:[%s148 + $0xe0] sm:$0xff]
                %179 = vst [vmem:[%s149 + $0x70] sm:$0xff] %v178
                %v180 = vld [vmem:[%s148 + $0xf0] sm:$0xff]
                %181 = vst [vmem:[%s149 + $0x78] sm:$0xff] %v180
              $region37: #{full_transformer_forward.5} parent=31 // loop_footer
                %s147 = sadd.s32 1, %s143
              $region38: #{full_transformer_forward.5} parent=31 // loop_footer_branch
                %142 = sbr.rel target = $region34
              $region39: #{full_transformer_forward.5} parent=31 // loop_exit
                _
            $region32: #{full_transformer_forward.5} parent=23 // pred_fallthru
              _
          $region24: #{full_transformer_forward.5} parent=19 // pred_fallthru
            _
          %226 = vnop
        $region20: #{full_transformer_forward.5} parent=15 // pred_fallthru
          _
        // Predicated region
        $region55: #{full_transformer_forward.5} parent=15 // pred_check
          %p227 = pneg %p71
        $region56: #{full_transformer_forward.5} parent=15 // pred_check_branch
          %229 = sbr.rel (%p227) target = $region58
        $region57: #{full_transformer_forward.5} parent=15 // pred_region
          %p230 = scmp.lt.s32.totalorder %s18, 1
          %s231 = scalar_select %p230, %s18, 1
          %s232 = smul.addr %s231, 16
          %s233 = smul.addr %s232, 8
          %s234 = scalar_lea.vmem %s1, %s233
        $region58: #{full_transformer_forward.5} parent=15 // pred_fallthru
          _
      $region16: #{full_transformer_forward.5} parent=5 // pred_fallthru
        _
      %p235 = scmp.le.s32.totalorder 1, %s11
      %p236 = scmp.lt.s32.totalorder %s11, 5
      %p237 = pnand %p235, %p236
      %p238 = pneg %p237
      // Predicated region
      $region59: #{full_transformer_forward.5} parent=5 // pred_check
        _
      $region60: #{full_transformer_forward.5} parent=5 // pred_check_branch
        %240 = sbr.rel (%p237) target = $region62
      $region61: #{full_transformer_forward.5} parent=5 // pred_region
        %s241 = ssub.s32 %s11, 1
        %s242 = sand.u32 %s38, 1
        %s243 = sand.u32 %s38, 1
        %s244 = smul.addr %s243, 128
        %s245 = scalar_lea.vmem [#allocation2], %s244
        // Predicated region
        $region63: #{full_transformer_forward.5} parent=61 // pred_check
          %p246 = pneg %p51
        $region64: #{full_transformer_forward.5} parent=61 // pred_check_branch
          %248 = sbr.rel (%p246) target = $region66
        $region65: #{full_transformer_forward.5} parent=61 // pred_region
          _
        $region66: #{full_transformer_forward.5} parent=61 // pred_fallthru
          _
        %s249 = sand.u32 %s38, 1
        %s250 = sand.u32 %s38, 1
        %s251 = smul.addr %s250, 128
        %s252 = scalar_lea.vmem [#allocation2], %s251
        %p253 = pneg %p51
        %p254 = pneg %p48
        %p255 = scmp.lt.s32.totalorder %s20, 1
        %s256 = scalar_select %p255, %s20, 1
        %s257 = smul.addr %s256, 16
        %s258 = smul.addr %s257, 8
        %s259 = scalar_lea.vmem %s1, %s258
        %p260 = pneg %p77
        %p261 = pneg %p74
        %p262 = pneg %p105
        %p263 = pneg %p102
        %s264 = sand.u32 %s92, 1
        %s265 = scalar_lea.sflag [#allocation4], %s264
        %s266 = sand.u32 %s92, 1
        %s267 = smul.addr %s266, 128
        %s268 = scalar_lea.vmem [#allocation3], %s267
        %p269 = scmp.lt.s32.totalorder %s20, 1
        %s270 = scalar_select %p269, %s20, 1
        %s271 = smul.addr %s270, 16
        %s272 = smul.addr %s271, 8
        %s273 = scalar_lea.vmem %s1, %s272
        %v274 = vld [vmem:[%s245] sm:$0xff]
        %v275 = vld [vmem:[%s245 + $0x8] sm:$0xff]
        %v276 = vld [vmem:[%s245 + $0x10] sm:$0xff]
        %v277 = vld [vmem:[%s245 + $0x18] sm:$0xff]
        %v278 = vld [vmem:[%s245 + $0x20] sm:$0xff]
        %v279 = vld [vmem:[%s245 + $0x28] sm:$0xff]
        %v280 = vld [vmem:[%s245 + $0x30] sm:$0xff]
        %v281 = vld [vmem:[%s245 + $0x38] sm:$0xff]
        %v282 = vld [vmem:[%s245 + $0x40] sm:$0xff]
        %v283 = vld [vmem:[%s245 + $0x48] sm:$0xff]
        %v284 = vld [vmem:[%s245 + $0x50] sm:$0xff]
        %v285 = vld [vmem:[%s245 + $0x58] sm:$0xff]
        %v286 = vld [vmem:[%s245 + $0x60] sm:$0xff]
        %v287 = vld [vmem:[%s245 + $0x68] sm:$0xff]
        %v288 = vld [vmem:[%s245 + $0x70] sm:$0xff]
        %v289 = vld [vmem:[%s245 + $0x78] sm:$0xff]
        %v290 = vld [vmem:[%s273] sm:$0xff]
        %v291 = vld [vmem:[%s273 + $0x8] sm:$0xff]
        %v292 = vld [vmem:[%s273 + $0x10] sm:$0xff]
        %v293 = vld [vmem:[%s273 + $0x18] sm:$0xff]
        %v294 = vld [vmem:[%s273 + $0x20] sm:$0xff]
        %v295 = vld [vmem:[%s273 + $0x28] sm:$0xff]
        %v296 = vld [vmem:[%s273 + $0x30] sm:$0xff]
        %v297 = vld [vmem:[%s273 + $0x38] sm:$0xff]
        %v298 = vld [vmem:[%s273 + $0x40] sm:$0xff]
        %v299 = vld [vmem:[%s273 + $0x48] sm:$0xff]
        %v300 = vld [vmem:[%s273 + $0x50] sm:$0xff]
        %v301 = vld [vmem:[%s273 + $0x58] sm:$0xff]
        %v302 = vld [vmem:[%s273 + $0x60] sm:$0xff]
        %v303 = vld [vmem:[%s273 + $0x68] sm:$0xff]
        %v304 = vld [vmem:[%s273 + $0x70] sm:$0xff]
        %v305 = vld [vmem:[%s273 + $0x78] sm:$0xff]
        %307 = vset.pattern.permute.xlu0 0
        %308 = vperm.xlu0 %307, %v290
        %v309 = vpop.permute.xlu0 %308
        %312 = vset.pattern.permute.xlu0 0
        %313 = vperm.xlu0 %312, %v291
        %v314 = vpop.permute.xlu0 %313
        %317 = vset.pattern.permute.xlu0 0
        %318 = vperm.xlu0 %317, %v292
        %v319 = vpop.permute.xlu0 %318
        %322 = vset.pattern.permute.xlu0 0
        %323 = vperm.xlu0 %322, %v293
        %v324 = vpop.permute.xlu0 %323
        %327 = vset.pattern.permute.xlu0 0
        %328 = vperm.xlu0 %327, %v294
        %v329 = vpop.permute.xlu0 %328
        %332 = vset.pattern.permute.xlu0 0
        %333 = vperm.xlu0 %332, %v295
        %v334 = vpop.permute.xlu0 %333
        %337 = vset.pattern.permute.xlu0 0
        %338 = vperm.xlu0 %337, %v296
        %v339 = vpop.permute.xlu0 %338
        %342 = vset.pattern.permute.xlu0 0
        %343 = vperm.xlu0 %342, %v297
        %v344 = vpop.permute.xlu0 %343
        %347 = vset.pattern.permute.xlu0 0
        %348 = vperm.xlu0 %347, %v298
        %v349 = vpop.permute.xlu0 %348
        %352 = vset.pattern.permute.xlu0 0
        %353 = vperm.xlu0 %352, %v299
        %v354 = vpop.permute.xlu0 %353
        %357 = vset.pattern.permute.xlu0 0
        %358 = vperm.xlu0 %357, %v300
        %v359 = vpop.permute.xlu0 %358
        %362 = vset.pattern.permute.xlu0 0
        %363 = vperm.xlu0 %362, %v301
        %v364 = vpop.permute.xlu0 %363
        %367 = vset.pattern.permute.xlu0 0
        %368 = vperm.xlu0 %367, %v302
        %v369 = vpop.permute.xlu0 %368
        %372 = vset.pattern.permute.xlu0 0
        %373 = vperm.xlu0 %372, %v303
        %v374 = vpop.permute.xlu0 %373
        %377 = vset.pattern.permute.xlu0 0
        %378 = vperm.xlu0 %377, %v304
        %v379 = vpop.permute.xlu0 %378
        %382 = vset.pattern.permute.xlu0 0
        %383 = vperm.xlu0 %382, %v305
        %v384 = vpop.permute.xlu0 %383
        %v386 = vsub.f32 %v274, %v309
        %v387 = vsub.f32 %v275, %v314
        %v388 = vsub.f32 %v276, %v319
        %v389 = vsub.f32 %v277, %v324
        %v390 = vsub.f32 %v278, %v329
        %v391 = vsub.f32 %v279, %v334
        %v392 = vsub.f32 %v280, %v339
        %v393 = vsub.f32 %v281, %v344
        %v394 = vsub.f32 %v282, %v349
        %v395 = vsub.f32 %v283, %v354
        %v396 = vsub.f32 %v284, %v359
        %v397 = vsub.f32 %v285, %v364
        %v398 = vsub.f32 %v286, %v369
        %v399 = vsub.f32 %v287, %v374
        %v400 = vsub.f32 %v288, %v379
        %v401 = vsub.f32 %v289, %v384
        %402 = vst [vmem:[%s268] sm:$0xff] %v386
        %403 = vst [vmem:[%s268 + $0x8] sm:$0xff] %v387
        %404 = vst [vmem:[%s268 + $0x10] sm:$0xff] %v388
        %405 = vst [vmem:[%s268 + $0x18] sm:$0xff] %v389
        %406 = vst [vmem:[%s268 + $0x20] sm:$0xff] %v390
        %407 = vst [vmem:[%s268 + $0x28] sm:$0xff] %v391
        %408 = vst [vmem:[%s268 + $0x30] sm:$0xff] %v392
        %409 = vst [vmem:[%s268 + $0x38] sm:$0xff] %v393
        %410 = vst [vmem:[%s268 + $0x40] sm:$0xff] %v394
        %411 = vst [vmem:[%s268 + $0x48] sm:$0xff] %v395
        %412 = vst [vmem:[%s268 + $0x50] sm:$0xff] %v396
        %413 = vst [vmem:[%s268 + $0x58] sm:$0xff] %v397
        %414 = vst [vmem:[%s268 + $0x60] sm:$0xff] %v398
        %415 = vst [vmem:[%s268 + $0x68] sm:$0xff] %v399
        %416 = vst [vmem:[%s268 + $0x70] sm:$0xff] %v400
        %417 = vst [vmem:[%s268 + $0x78] sm:$0xff] %v401
        %s418 = sand.u32 %s92, 1
        %s419 = scalar_lea.sflag [#allocation4], %s418
        %s420 = sand.u32 %s92, 1
        %s421 = smul.addr %s420, 128
        %s422 = scalar_lea.vmem [#allocation3], %s421
        // Predicated region
        $region67: #{full_transformer_forward.5} parent=61 // pred_check
          %p423 = pneg %p102
        $region68: #{full_transformer_forward.5} parent=61 // pred_check_branch
          %425 = sbr.rel (%p423) target = $region70
        $region69: #{full_transformer_forward.5} parent=61 // pred_region
          %s427 = ssub.s32 2048, 2048
          %428 = vsyncadd %s419, %s427
          %s429 = smul.addr %s20, 32
          %s430 = sadd.s32 %s21, %s429
          %s431 = smul.addr %s430, 128
          %s432 = scalar_lea.hbm %s2, %s431
          %s433 = sshll.u32 %s422, 4
          %s434 = int_to_ptr.vmem [resolvable:$true] %s433
          %439 = dma.vmem_to_hbm [thread:$0]  %s434, 2048, %s432, %s419, 128, 256, 8
        $region70: #{full_transformer_forward.5} parent=61 // pred_fallthru
          _
      $region62: #{full_transformer_forward.5} parent=5 // pred_fallthru
        _
      %p440 = scmp.le.s32.totalorder 2, %s11
      // Predicated region
      $region71: #{full_transformer_forward.5} parent=5 // pred_check
        %p441 = pneg %p440
      $region72: #{full_transformer_forward.5} parent=5 // pred_check_branch
        %443 = sbr.rel (%p441) target = $region74
      $region73: #{full_transformer_forward.5} parent=5 // pred_region
        %s444 = ssub.s32 %s11, 2
        // Predicated region
        $region75: #{full_transformer_forward.5} parent=73 // pred_check
          %p445 = pneg %p108
        $region76: #{full_transformer_forward.5} parent=73 // pred_check_branch
          %447 = sbr.rel (%p445) target = $region78
        $region77: #{full_transformer_forward.5} parent=73 // pred_region
          %s448 = sand.u32 %s93, 1
          %s449 = scalar_lea.sflag [#allocation4], %s448
          %s450 = sand.u32 %s93, 1
          %s451 = smul.addr %s450, 128
          %s452 = scalar_lea.vmem [#allocation3], %s451
          %453 = dma.done %s449, 2048
        $region78: #{full_transformer_forward.5} parent=73 // pred_fallthru
          _
      $region74: #{full_transformer_forward.5} parent=5 // pred_fallthru
        _
    $region6: #{full_transformer_forward.5} parent=1 // loop_footer
      %s15 = sadd.s32 1, %s11
    $region7: #{full_transformer_forward.5} parent=1 // loop_footer_branch
      %10 = sbr.rel target = $region3
    $region8: #{full_transformer_forward.5} parent=1 // loop_exit
      _
    %454 = vsyncpa [#allocation4], 1
    %s455 = scalar_lea.sflag [#allocation4], 1
    %456 = vsyncpa %s455, 1

// kernel: full_transformer_forward.4
$region0: #{full_transformer_forward.4}
  #allocation0 [shape = 'u32[]', space=smem, size = 0x4, offset = 0x4, fixed_abs, tag = 'smem constant byte address 0x4 - core index']
  #allocation1 [shape = 'u32[144,128]{1,0:T(1,128)}', space=vmem, size = 0x12000, scoped, tag = 'internal scratch']
  #allocation2 [shape = 'bf16[128,128]{1,0:T(16,128)(2,1)}', space=vmem, size = 0x8000, scoped, tag = 'scratch operand']
  #allocation3 [shape = 'f32[128,1]{1,0:T(8,128)}', space=vmem, size = 0x10000, scoped, tag = 'scratch operand']
  #allocation4 [shape = 'f32[128,1]{1,0:T(8,128)}', space=vmem, size = 0x10000, scoped, tag = 'scratch operand']
  %s0 = inlined_call_operand.vmem [shape: f32[2,128,128], index: 0, kind: input, shape index: {}]
  %s1 = inlined_call_operand.vmem [shape: f32[1,128], index: 1, kind: input, shape index: {}]
  %s2 = inlined_call_operand.vmem [shape: f32[1,128], index: 2, kind: input, shape index: {}]
  %s3 = inlined_call_operand.vmem [shape: bf16[128,256], index: 3, kind: input, shape index: {}]
  %s4 = inlined_call_operand.vmem [shape: f32[1,256], index: 4, kind: input, shape index: {}]
  %s5 = inlined_call_operand.vmem [shape: f32[2,128,256], index: 5, kind: output, shape index: {0}]
  %s6 = inlined_call_operand.vmem [shape: f32[2,128,1], index: 6, kind: output, shape index: {1}]
  %7 = xla_tuple %s5, %s6
  %s8 = sld [smem:[#allocation0]]
  $region144: #{full_transformer_forward.4} parent=0
    _
  %s10 = ssub.s32 1, %s8
  %s11 = scalar_select 0, %s10, %s8
  $region1: #{full_transformer_forward.4} parent=0
    #allocation5 [shape = 'u8[65536]{0}', space=vmem, size = 0x10000, scoped, tag = 'input window, operand 3']
    #allocation6 [shape = 'u8[131072]{0}', space=vmem, size = 0x20000, scoped, tag = 'output window, operand 0']
    loop: start=0, step=1, limit=6
    $region2: #{full_transformer_forward.4} parent=1 // loop_pre_header
      _
    $region3: #{full_transformer_forward.4} parent=1 // loop_header
      %s13 = sphi 0, %s17
      %p14 = scmp.ge.s32.totalorder %s13, 6
      %s20 = sphi 0, %s32
      %s21 = sphi 0, %s28
      %s22 = sphi 0, %s20
      %s23 = sphi 0, %s21
      %s24 = sphi 0, %s22
      %s25 = sphi 0, %s23
      %s35 = sphi 0, %s37
      %s38 = sphi 0, %s35
      %s39 = sphi 0, %s38
      %s55 = sphi 0, %s39
      %s59 = sphi 0, %s59
      %s61 = sphi 0, %s59
      %s62 = sphi 0, %s61
      %s76 = sphi 0, %s62
      %s80 = sphi 0, %s80
      %s82 = sphi 0, %s80
      %s83 = sphi 0, %s82
      %s97 = sphi 0, %s83
      %s103 = sphi 0, %s105
      %s106 = sphi 0, %s103
      %s107 = sphi 0, %s106
      %s123 = sphi 0, %s107
      %s129 = sphi 0, %s131
      %s132 = sphi 0, %s129
      %s133 = sphi 0, %s132
      %s149 = sphi 0, %s133
      %s157 = sphi 0, %s159
      %s160 = sphi 0, %s157
      %s161 = sphi 0, %s160
      %s177 = sphi 0, %s161
      %s183 = sphi 0, %s185
      %s186 = sphi 0, %s183
      %s187 = sphi 0, %s186
      %s203 = sphi 0, %s187
    $region4: #{full_transformer_forward.4} parent=1 // loop_header_branch
      %16 = sbr.rel (%p14) target = $region8
    $region5: #{full_transformer_forward.4} parent=1 // loop_body
      %s18 = ssub.s32 %s13, 1
      %s19 = ssub.s32 %s13, 2
      %s26 = sadd.s32 1, %s21
      %p27 = scmp.ge.s32.totalorder %s26, 2
      %s28 = scalar_select %p27, 0, %s26
      %s29 = sadd.s32 1, %s20
      %s30 = scalar_select %p27, %s29, %s20
      %p31 = scmp.ge.s32.totalorder %s30, 2
      %s32 = scalar_select %p31, 0, %s30
      %s33 = ssub.s32 %s20, %s32
      %p34 = scmp.eq.s32.totalorder %s33, 0
      %s36 = sadd.s32 %s35, 1
      %s37 = scalar_select %p34, %s35, %s36
      %p40 = pneg %p34
      %p41 = scmp.eq.s32.totalorder %s13, 3
      %p42 = por %p40, %p41
      %p43 = scmp.ne.s32.totalorder %s35, %s38
      %p44 = scmp.eq.s32.totalorder %s13, 0
      %p45 = por %p43, %p44
      %p46 = scmp.ne.s32.totalorder %s35, %s38
      %p47 = scmp.eq.s32.totalorder %s18, 3
      %p48 = por %p46, %p47
      %p49 = scmp.ne.s32.totalorder %s38, %s39
      %p50 = scmp.eq.s32.totalorder %s18, 0
      %p51 = por %p49, %p50
      %p52 = scmp.ne.s32.totalorder %s38, %s39
      %p53 = scmp.eq.s32.totalorder %s19, 3
      %p54 = por %p52, %p53
      %p56 = scmp.ne.s32.totalorder %s39, %s55
      %p57 = scmp.eq.s32.totalorder %s19, 0
      %p58 = por %p56, %p57
      %s60 = sadd.s32 %s59, 1
      %p63 = scmp.eq.s32.totalorder %s13, 3
      %p64 = scmp.ne.s32.totalorder %s59, %s61
      %p65 = scmp.eq.s32.totalorder %s13, 0
      %p66 = por %p64, %p65
      %p67 = scmp.ne.s32.totalorder %s59, %s61
      %p68 = scmp.eq.s32.totalorder %s18, 3
      %p69 = por %p67, %p68
      %p70 = scmp.ne.s32.totalorder %s61, %s62
      %p71 = scmp.eq.s32.totalorder %s18, 0
      %p72 = por %p70, %p71
      %p73 = scmp.ne.s32.totalorder %s61, %s62
      %p74 = scmp.eq.s32.totalorder %s19, 3
      %p75 = por %p73, %p74
      %p77 = scmp.ne.s32.totalorder %s62, %s76
      %p78 = scmp.eq.s32.totalorder %s19, 0
      %p79 = por %p77, %p78
      %s81 = sadd.s32 %s80, 1
      %p84 = scmp.eq.s32.totalorder %s13, 3
      %p85 = scmp.ne.s32.totalorder %s80, %s82
      %p86 = scmp.eq.s32.totalorder %s13, 0
      %p87 = por %p85, %p86
      %p88 = scmp.ne.s32.totalorder %s80, %s82
      %p89 = scmp.eq.s32.totalorder %s18, 3
      %p90 = por %p88, %p89
      %p91 = scmp.ne.s32.totalorder %s82, %s83
      %p92 = scmp.eq.s32.totalorder %s18, 0
      %p93 = por %p91, %p92
      %p94 = scmp.ne.s32.totalorder %s82, %s83
      %p95 = scmp.eq.s32.totalorder %s19, 3
      %p96 = por %p94, %p95
      %p98 = scmp.ne.s32.totalorder %s83, %s97
      %p99 = scmp.eq.s32.totalorder %s19, 0
      %p100 = por %p98, %p99
      %s101 = ssub.s32 %s21, %s28
      %p102 = scmp.eq.s32.totalorder %s101, 0
      %s104 = sadd.s32 %s103, 1
      %s105 = scalar_select %p102, %s103, %s104
      %p108 = pneg %p102
      %p109 = scmp.eq.s32.totalorder %s13, 3
      %p110 = por %p108, %p109
      %p111 = scmp.ne.s32.totalorder %s103, %s106
      %p112 = scmp.eq.s32.totalorder %s13, 0
      %p113 = por %p111, %p112
      %p114 = scmp.ne.s32.totalorder %s103, %s106
      %p115 = scmp.eq.s32.totalorder %s18, 3
      %p116 = por %p114, %p115
      %p117 = scmp.ne.s32.totalorder %s106, %s107
      %p118 = scmp.eq.s32.totalorder %s18, 0
      %p119 = por %p117, %p118
      %p120 = scmp.ne.s32.totalorder %s106, %s107
      %p121 = scmp.eq.s32.totalorder %s19, 3
      %p122 = por %p120, %p121
      %p124 = scmp.ne.s32.totalorder %s107, %s123
      %p125 = scmp.eq.s32.totalorder %s19, 0
      %p126 = por %p124, %p125
      %s127 = ssub.s32 %s21, %s28
      %p128 = scmp.eq.s32.totalorder %s127, 0
      %s130 = sadd.s32 %s129, 1
      %s131 = scalar_select %p128, %s129, %s130
      %p134 = pneg %p128
      %p135 = scmp.eq.s32.totalorder %s13, 3
      %p136 = por %p134, %p135
      %p137 = scmp.ne.s32.totalorder %s129, %s132
      %p138 = scmp.eq.s32.totalorder %s13, 0
      %p139 = por %p137, %p138
      %p140 = scmp.ne.s32.totalorder %s129, %s132
      %p141 = scmp.eq.s32.totalorder %s18, 3
      %p142 = por %p140, %p141
      %p143 = scmp.ne.s32.totalorder %s132, %s133
      %p144 = scmp.eq.s32.totalorder %s18, 0
      %p145 = por %p143, %p144
      %p146 = scmp.ne.s32.totalorder %s132, %s133
      %p147 = scmp.eq.s32.totalorder %s19, 3
      %p148 = por %p146, %p147
      %p150 = scmp.ne.s32.totalorder %s133, %s149
      %p151 = scmp.eq.s32.totalorder %s19, 0
      %p152 = por %p150, %p151
      %s153 = ssub.s32 %s20, %s32
      %s154 = ssub.s32 %s21, %s28
      %s155 = sor.u32 %s153, %s154
      %p156 = scmp.eq.s32.totalorder %s155, 0
      %s158 = sadd.s32 %s157, 1
      %s159 = scalar_select %p156, %s157, %s158
      %p162 = pneg %p156
      %p163 = scmp.eq.s32.totalorder %s13, 3
      %p164 = por %p162, %p163
      %p165 = scmp.ne.s32.totalorder %s157, %s160
      %p166 = scmp.eq.s32.totalorder %s13, 0
      %p167 = por %p165, %p166
      %p168 = scmp.ne.s32.totalorder %s157, %s160
      %p169 = scmp.eq.s32.totalorder %s18, 3
      %p170 = por %p168, %p169
      %p171 = scmp.ne.s32.totalorder %s160, %s161
      %p172 = scmp.eq.s32.totalorder %s18, 0
      %p173 = por %p171, %p172
      %p174 = scmp.ne.s32.totalorder %s160, %s161
      %p175 = scmp.eq.s32.totalorder %s19, 3
      %p176 = por %p174, %p175
      %p178 = scmp.ne.s32.totalorder %s161, %s177
      %p179 = scmp.eq.s32.totalorder %s19, 0
      %p180 = por %p178, %p179
      %s181 = ssub.s32 %s20, %s32
      %p182 = scmp.eq.s32.totalorder %s181, 0
      %s184 = sadd.s32 %s183, 1
      %s185 = scalar_select %p182, %s183, %s184
      %p188 = pneg %p182
      %p189 = scmp.eq.s32.totalorder %s13, 3
      %p190 = por %p188, %p189
      %p191 = scmp.ne.s32.totalorder %s183, %s186
      %p192 = scmp.eq.s32.totalorder %s13, 0
      %p193 = por %p191, %p192
      %p194 = scmp.ne.s32.totalorder %s183, %s186
      %p195 = scmp.eq.s32.totalorder %s18, 3
      %p196 = por %p194, %p195
      %p197 = scmp.ne.s32.totalorder %s186, %s187
      %p198 = scmp.eq.s32.totalorder %s18, 0
      %p199 = por %p197, %p198
      %p200 = scmp.ne.s32.totalorder %s186, %s187
      %p201 = scmp.eq.s32.totalorder %s19, 3
      %p202 = por %p200, %p201
      %p204 = scmp.ne.s32.totalorder %s187, %s203
      %p205 = scmp.eq.s32.totalorder %s19, 0
      %p206 = por %p204, %p205
      %p207 = scmp.le.s32.totalorder 1, %s13
      %p208 = scmp.lt.s32.totalorder %s13, 5
      %p209 = pnand %p207, %p208
      %p210 = pneg %p209
      // Predicated region
      $region9: #{full_transformer_forward.4} parent=5 // pred_check
        _
      $region10: #{full_transformer_forward.4} parent=5 // pred_check_branch
        %212 = sbr.rel (%p209) target = $region12
      $region11: #{full_transformer_forward.4} parent=5 // pred_region
        %s213 = ssub.s32 %s13, 1
        // Predicated region
        $region13: #{full_transformer_forward.4} parent=11 // pred_check
          %p214 = pneg %p72
        $region14: #{full_transformer_forward.4} parent=11 // pred_check_branch
          %216 = sbr.rel (%p214) target = $region16
        $region15: #{full_transformer_forward.4} parent=11 // pred_region
          _
        $region16: #{full_transformer_forward.4} parent=11 // pred_fallthru
          _
        // Predicated region
        $region17: #{full_transformer_forward.4} parent=11 // pred_check
          %p217 = pneg %p93
        $region18: #{full_transformer_forward.4} parent=11 // pred_check_branch
          %219 = sbr.rel (%p217) target = $region20
        $region19: #{full_transformer_forward.4} parent=11 // pred_region
          _
        $region20: #{full_transformer_forward.4} parent=11 // pred_fallthru
          _
      $region12: #{full_transformer_forward.4} parent=5 // pred_fallthru
        _
      %p220 = scmp.lt.s32.totalorder %s13, 4
      // Predicated region
      $region21: #{full_transformer_forward.4} parent=5 // pred_check
        %p221 = pneg %p220
      $region22: #{full_transformer_forward.4} parent=5 // pred_check_branch
        %223 = sbr.rel (%p221) target = $region24
      $region23: #{full_transformer_forward.4} parent=5 // pred_region
        // Predicated region
        $region25: #{full_transformer_forward.4} parent=23 // pred_check
          %p224 = pneg %p45
        $region26: #{full_transformer_forward.4} parent=23 // pred_check_branch
          %226 = sbr.rel (%p224) target = $region28
        $region27: #{full_transformer_forward.4} parent=23 // pred_region
          %p227 = scmp.lt.s32.totalorder %s20, 1
          %s228 = scalar_select %p227, %s20, 1
          %s229 = smul.addr %s228, 16
          %s230 = smul.addr %s229, 8
          %s231 = scalar_lea.vmem %s0, %s230
        $region28: #{full_transformer_forward.4} parent=23 // pred_fallthru
          _
        // Predicated region
        $region29: #{full_transformer_forward.4} parent=23 // pred_check
          %p232 = pneg %p113
        $region30: #{full_transformer_forward.4} parent=23 // pred_check_branch
          %234 = sbr.rel (%p232) target = $region32
        $region31: #{full_transformer_forward.4} parent=23 // pred_region
          %s235 = sand.u32 %s103, 1
          %s236 = sand.u32 %s103, 1
          %s237 = smul.addr %s236, 64
          %s238 = scalar_lea.vmem [#allocation5], %s237
          %s239 = smul.addr %s21, 4
          %s240 = scalar_lea.vmem %s3, %s239
          // Predicated region
          $region33: #{full_transformer_forward.4} parent=31 // pred_check
            _
          $region34: #{full_transformer_forward.4} parent=31 // pred_check_branch
            %242 = sbr.rel (0) target = $region36
          $region35: #{full_transformer_forward.4} parent=31 // pred_region
            // Predicated region
            $region37: #{full_transformer_forward.4} parent=35 // pred_check
              _
            $region38: #{full_transformer_forward.4} parent=35 // pred_check_branch
              %244 = sbr.rel target = $region40
            $region39: #{full_transformer_forward.4} parent=35 // pred_region
              // Predicated region
              $region52: #{full_transformer_forward.4} parent=39 // pred_check
                _
              $region53: #{full_transformer_forward.4} parent=39 // pred_check_branch
                %289 = sbr.rel (0) target = $region55
              $region54: #{full_transformer_forward.4} parent=39 // pred_region
                loop: start=0, step=1, limit=1
                $region56: #{full_transformer_forward.4} parent=54 // loop_pre_header
                  _
                $region57: #{full_transformer_forward.4} parent=54 // loop_header
                  %s291 = sphi 0, %s295
                  %p292 = scmp.ge.s32.totalorder %s291, 1
                  %s296 = sphi %s240, %s240
                  %s297 = sphi %s238, %s238
                $region58: #{full_transformer_forward.4} parent=54 // loop_header_branch
                  %294 = sbr.rel (%p292) target = $region62
                $region59: #{full_transformer_forward.4} parent=54 // loop_body
                  _
                $region60: #{full_transformer_forward.4} parent=54 // loop_footer
                  %s295 = sadd.s32 1, %s291
                $region61: #{full_transformer_forward.4} parent=54 // loop_footer_branch
                  %290 = sbr.rel target = $region57
                $region62: #{full_transformer_forward.4} parent=54 // loop_exit
                  _
                loop: start=0, step=1, limit=1
                $region63: #{full_transformer_forward.4} parent=54 // loop_pre_header
                  _
                $region64: #{full_transformer_forward.4} parent=54 // loop_header
                  %s300 = sphi 0, %s304
                  %p301 = scmp.ge.s32.totalorder %s300, 1
                  %s305 = sphi %s240, %s240
                  %s306 = sphi %s238, %s238
                $region65: #{full_transformer_forward.4} parent=54 // loop_header_branch
                  %303 = sbr.rel (%p301) target = $region69
                $region66: #{full_transformer_forward.4} parent=54 // loop_body
                  %v307 = vld [vmem:[%s305] sm:$0xf]
                  %308 = vst [vmem:[%s306] sm:$0xf] %v307
                  %v309 = vld [vmem:[%s305 + $0x8] sm:$0xf]
                  %310 = vst [vmem:[%s306 + $0x4] sm:$0xf] %v309
                  %v311 = vld [vmem:[%s305 + $0x10] sm:$0xf]
                  %312 = vst [vmem:[%s306 + $0x8] sm:$0xf] %v311
                  %v313 = vld [vmem:[%s305 + $0x18] sm:$0xf]
                  %314 = vst [vmem:[%s306 + $0xc] sm:$0xf] %v313
                  %v315 = vld [vmem:[%s305 + $0x20] sm:$0xf]
                  %316 = vst [vmem:[%s306 + $0x10] sm:$0xf] %v315
                  %v317 = vld [vmem:[%s305 + $0x28] sm:$0xf]
                  %318 = vst [vmem:[%s306 + $0x14] sm:$0xf] %v317
                  %v319 = vld [vmem:[%s305 + $0x30] sm:$0xf]
                  %320 = vst [vmem:[%s306 + $0x18] sm:$0xf] %v319
                  %v321 = vld [vmem:[%s305 + $0x38] sm:$0xf]
                  %322 = vst [vmem:[%s306 + $0x1c] sm:$0xf] %v321
                  %v323 = vld [vmem:[%s305 + $0x40] sm:$0xf]
                  %324 = vst [vmem:[%s306 + $0x20] sm:$0xf] %v323
                  %v325 = vld [vmem:[%s305 + $0x48] sm:$0xf]
                  %326 = vst [vmem:[%s306 + $0x24] sm:$0xf] %v325
                  %v327 = vld [vmem:[%s305 + $0x50] sm:$0xf]
                  %328 = vst [vmem:[%s306 + $0x28] sm:$0xf] %v327
                  %v329 = vld [vmem:[%s305 + $0x58] sm:$0xf]
                  %330 = vst [vmem:[%s306 + $0x2c] sm:$0xf] %v329
                  %v331 = vld [vmem:[%s305 + $0x60] sm:$0xf]
                  %332 = vst [vmem:[%s306 + $0x30] sm:$0xf] %v331
                  %v333 = vld [vmem:[%s305 + $0x68] sm:$0xf]
                  %334 = vst [vmem:[%s306 + $0x34] sm:$0xf] %v333
                  %v335 = vld [vmem:[%s305 + $0x70] sm:$0xf]
                  %336 = vst [vmem:[%s306 + $0x38] sm:$0xf] %v335
                  %v337 = vld [vmem:[%s305 + $0x78] sm:$0xf]
                  %338 = vst [vmem:[%s306 + $0x3c] sm:$0xf] %v337
                $region67: #{full_transformer_forward.4} parent=54 // loop_footer
                  %s304 = sadd.s32 1, %s300
                $region68: #{full_transformer_forward.4} parent=54 // loop_footer_branch
                  %299 = sbr.rel target = $region64
                $region69: #{full_transformer_forward.4} parent=54 // loop_exit
                  _
              $region55: #{full_transformer_forward.4} parent=39 // pred_fallthru
                _
            $region40: #{full_transformer_forward.4} parent=35 // pred_fallthru
              _
            // Predicated region
            $region41: #{full_transformer_forward.4} parent=35 // pred_check
              _
            $region42: #{full_transformer_forward.4} parent=35 // pred_check_branch
              %246 = sbr.rel (0) target = $region44
            $region43: #{full_transformer_forward.4} parent=35 // pred_region
              loop: start=0, step=1, limit=1
              $region45: #{full_transformer_forward.4} parent=43 // loop_pre_header
                _
              $region46: #{full_transformer_forward.4} parent=43 // loop_header
                %s249 = sphi 0, %s253
                %p250 = scmp.ge.s32.totalorder %s249, 1
                %s254 = sphi %s240, %s240
                %s255 = sphi %s238, %s238
              $region47: #{full_transformer_forward.4} parent=43 // loop_header_branch
                %252 = sbr.rel (%p250) target = $region51
              $region48: #{full_transformer_forward.4} parent=43 // loop_body
                %v256 = vld [vmem:[%s254] sm:$0xf]
                %257 = vst [vmem:[%s255] sm:$0xf] %v256
                %v258 = vld [vmem:[%s254 + $0x8] sm:$0xf]
                %259 = vst [vmem:[%s255 + $0x4] sm:$0xf] %v258
                %v260 = vld [vmem:[%s254 + $0x10] sm:$0xf]
                %261 = vst [vmem:[%s255 + $0x8] sm:$0xf] %v260
                %v262 = vld [vmem:[%s254 + $0x18] sm:$0xf]
                %263 = vst [vmem:[%s255 + $0xc] sm:$0xf] %v262
                %v264 = vld [vmem:[%s254 + $0x20] sm:$0xf]
                %265 = vst [vmem:[%s255 + $0x10] sm:$0xf] %v264
                %v266 = vld [vmem:[%s254 + $0x28] sm:$0xf]
                %267 = vst [vmem:[%s255 + $0x14] sm:$0xf] %v266
                %v268 = vld [vmem:[%s254 + $0x30] sm:$0xf]
                %269 = vst [vmem:[%s255 + $0x18] sm:$0xf] %v268
                %v270 = vld [vmem:[%s254 + $0x38] sm:$0xf]
                %271 = vst [vmem:[%s255 + $0x1c] sm:$0xf] %v270
                %v272 = vld [vmem:[%s254 + $0x40] sm:$0xf]
                %273 = vst [vmem:[%s255 + $0x20] sm:$0xf] %v272
                %v274 = vld [vmem:[%s254 + $0x48] sm:$0xf]
                %275 = vst [vmem:[%s255 + $0x24] sm:$0xf] %v274
                %v276 = vld [vmem:[%s254 + $0x50] sm:$0xf]
                %277 = vst [vmem:[%s255 + $0x28] sm:$0xf] %v276
                %v278 = vld [vmem:[%s254 + $0x58] sm:$0xf]
                %279 = vst [vmem:[%s255 + $0x2c] sm:$0xf] %v278
                %v280 = vld [vmem:[%s254 + $0x60] sm:$0xf]
                %281 = vst [vmem:[%s255 + $0x30] sm:$0xf] %v280
                %v282 = vld [vmem:[%s254 + $0x68] sm:$0xf]
                %283 = vst [vmem:[%s255 + $0x34] sm:$0xf] %v282
                %v284 = vld [vmem:[%s254 + $0x70] sm:$0xf]
                %285 = vst [vmem:[%s255 + $0x38] sm:$0xf] %v284
                %v286 = vld [vmem:[%s254 + $0x78] sm:$0xf]
                %287 = vst [vmem:[%s255 + $0x3c] sm:$0xf] %v286
              $region49: #{full_transformer_forward.4} parent=43 // loop_footer
                %s253 = sadd.s32 1, %s249
              $region50: #{full_transformer_forward.4} parent=43 // loop_footer_branch
                %248 = sbr.rel target = $region46
              $region51: #{full_transformer_forward.4} parent=43 // loop_exit
                _
            $region44: #{full_transformer_forward.4} parent=35 // pred_fallthru
              _
          $region36: #{full_transformer_forward.4} parent=31 // pred_fallthru
            _
          %339 = vnop
        $region32: #{full_transformer_forward.4} parent=23 // pred_fallthru
          _
        // Predicated region
        $region70: #{full_transformer_forward.4} parent=23 // pred_check
          %p340 = pneg %p139
        $region71: #{full_transformer_forward.4} parent=23 // pred_check_branch
          %342 = sbr.rel (%p340) target = $region73
        $region72: #{full_transformer_forward.4} parent=23 // pred_region
          %p343 = scmp.lt.s32.totalorder %s21, 1
          %s344 = scalar_select %p343, %s21, 1
          %s345 = scalar_lea.vmem %s4, %s344
        $region73: #{full_transformer_forward.4} parent=23 // pred_fallthru
          _
      $region24: #{full_transformer_forward.4} parent=5 // pred_fallthru
        _
      %p346 = scmp.le.s32.totalorder 1, %s13
      %p347 = scmp.lt.s32.totalorder %s13, 5
      %p348 = pnand %p346, %p347
      %p349 = pneg %p348
      // Predicated region
      $region74: #{full_transformer_forward.4} parent=5 // pred_check
        _
      $region75: #{full_transformer_forward.4} parent=5 // pred_check_branch
        %351 = sbr.rel (%p348) target = $region77
      $region76: #{full_transformer_forward.4} parent=5 // pred_region
        %s352 = ssub.s32 %s13, 1
        %s353 = sand.u32 %s106, 1
        %s354 = sand.u32 %s106, 1
        %s355 = smul.addr %s354, 64
        %s356 = scalar_lea.vmem [#allocation5], %s355
        // Predicated region
        $region78: #{full_transformer_forward.4} parent=76 // pred_check
          %p357 = pneg %p119
        $region79: #{full_transformer_forward.4} parent=76 // pred_check_branch
          %359 = sbr.rel (%p357) target = $region81
        $region80: #{full_transformer_forward.4} parent=76 // pred_region
          _
        $region81: #{full_transformer_forward.4} parent=76 // pred_fallthru
          _
        %p360 = scmp.lt.s32.totalorder %s22, 1
        %s361 = scalar_select %p360, %s22, 1
        %s362 = smul.addr %s361, 16
        %s363 = smul.addr %s362, 8
        %s364 = scalar_lea.vmem %s0, %s363
        %p365 = pneg %p51
        %p366 = pneg %p48
        %p367 = pneg %p72
        %p368 = pneg %p69
        %p369 = pneg %p93
        %p370 = pneg %p90
        %s371 = sand.u32 %s106, 1
        %s372 = sand.u32 %s106, 1
        %s373 = smul.addr %s372, 64
        %s374 = scalar_lea.vmem [#allocation5], %s373
        %p375 = pneg %p119
        %p376 = pneg %p116
        %p377 = scmp.lt.s32.totalorder %s23, 1
        %s378 = scalar_select %p377, %s23, 1
        %s379 = scalar_lea.vmem %s4, %s378
        %p380 = pneg %p145
        %p381 = pneg %p142
        %p382 = pneg %p173
        %p383 = pneg %p170
        %s384 = sand.u32 %s160, 1
        %s385 = sand.u32 %s160, 1
        %s386 = smul.addr %s385, 128
        %s387 = scalar_lea.vmem [#allocation6], %s386
        %p388 = pneg %p199
        %p389 = pneg %p196
        %p390 = scmp.lt.s32.totalorder %s22, 1
        %s391 = scalar_select %p390, %s22, 1
        %s392 = smul.addr %s391, 16
        %s393 = smul.addr %s392, 8
        %s394 = scalar_lea.vmem %s6, %s393
        %p395 = scmp.lt.s32.totalorder %s22, 1
        %s396 = scalar_select %p395, %s22, 1
        %s397 = smul.addr %s396, 16
        %s398 = smul.addr %s397, 8
        %s399 = scalar_lea.vmem %s0, %s398
        %p400 = scmp.lt.s32.totalorder %s23, 1
        %s401 = scalar_select %p400, %s23, 1
        %s402 = scalar_lea.vmem %s4, %s401
        %p403 = scmp.lt.s32.totalorder %s22, 1
        %s404 = scalar_select %p403, %s22, 1
        %s405 = smul.addr %s404, 16
        %s406 = smul.addr %s405, 8
        %s407 = scalar_lea.vmem %s6, %s406
        %p409 = scmp.eq.s32.totalorder %s23, 0
        // Predicated region
        $region82: #{full_transformer_forward.4} parent=76 // pred_check
          %p410 = pneg %p409
        $region83: #{full_transformer_forward.4} parent=76 // pred_check_branch
          %412 = sbr.rel (%p410) target = $region85
        $region84: #{full_transformer_forward.4} parent=76 // pred_region
          %v413 = vld [vmem:[%s399] sm:$0xff]
          %v414 = vld [vmem:[%s399 + $0x8] sm:$0xff]
          %v415 = vld [vmem:[%s399 + $0x10] sm:$0xff]
          %v416 = vld [vmem:[%s399 + $0x18] sm:$0xff]
          %v417 = vld [vmem:[%s399 + $0x20] sm:$0xff]
          %v418 = vld [vmem:[%s399 + $0x28] sm:$0xff]
          %v419 = vld [vmem:[%s399 + $0x30] sm:$0xff]
          %v420 = vld [vmem:[%s399 + $0x38] sm:$0xff]
          %v421 = vld [vmem:[%s399 + $0x40] sm:$0xff]
          %v422 = vld [vmem:[%s399 + $0x48] sm:$0xff]
          %v423 = vld [vmem:[%s399 + $0x50] sm:$0xff]
          %v424 = vld [vmem:[%s399 + $0x58] sm:$0xff]
          %v425 = vld [vmem:[%s399 + $0x60] sm:$0xff]
          %v426 = vld [vmem:[%s399 + $0x68] sm:$0xff]
          %v427 = vld [vmem:[%s399 + $0x70] sm:$0xff]
          %v428 = vld [vmem:[%s399 + $0x78] sm:$0xff]
          %v429 = vld [vmem:[%s1] sm:$0x1]
          %v430 = vld [vmem:[%s2] sm:$0x1]
          %431 = vadd.xlane.f32.xlu0 %v413
          %v432 = vpop.xlane.xlu0 %431
          %433 = vadd.xlane.f32.xlu0 %v414
          %v434 = vpop.xlane.xlu0 %433
          %435 = vadd.xlane.f32.xlu0 %v415
          %v436 = vpop.xlane.xlu0 %435
          %437 = vadd.xlane.f32.xlu0 %v416
          %v438 = vpop.xlane.xlu0 %437
          %439 = vadd.xlane.f32.xlu0 %v417
          %v440 = vpop.xlane.xlu0 %439
          %441 = vadd.xlane.f32.xlu0 %v418
          %v442 = vpop.xlane.xlu0 %441
          %443 = vadd.xlane.f32.xlu0 %v419
          %v444 = vpop.xlane.xlu0 %443
          %445 = vadd.xlane.f32.xlu0 %v420
          %v446 = vpop.xlane.xlu0 %445
          %447 = vadd.xlane.f32.xlu0 %v421
          %v448 = vpop.xlane.xlu0 %447
          %449 = vadd.xlane.f32.xlu0 %v422
          %v450 = vpop.xlane.xlu0 %449
          %451 = vadd.xlane.f32.xlu0 %v423
          %v452 = vpop.xlane.xlu0 %451
          %453 = vadd.xlane.f32.xlu0 %v424
          %v454 = vpop.xlane.xlu0 %453
          %455 = vadd.xlane.f32.xlu0 %v425
          %v456 = vpop.xlane.xlu0 %455
          %457 = vadd.xlane.f32.xlu0 %v426
          %v458 = vpop.xlane.xlu0 %457
          %459 = vadd.xlane.f32.xlu0 %v427
          %v460 = vpop.xlane.xlu0 %459
          %461 = vadd.xlane.f32.xlu0 %v428
          %v462 = vpop.xlane.xlu0 %461
          %v463 = vrcp.pop 128.0
          %v464 = vmul.f32 %v432, %v463
          %v465 = vmul.f32 %v434, %v463
          %v466 = vmul.f32 %v436, %v463
          %v467 = vmul.f32 %v438, %v463
          %v468 = vmul.f32 %v440, %v463
          %v469 = vmul.f32 %v442, %v463
          %v470 = vmul.f32 %v444, %v463
          %v471 = vmul.f32 %v446, %v463
          %v472 = vmul.f32 %v448, %v463
          %v473 = vmul.f32 %v450, %v463
          %v474 = vmul.f32 %v452, %v463
          %v475 = vmul.f32 %v454, %v463
          %v476 = vmul.f32 %v456, %v463
          %v477 = vmul.f32 %v458, %v463
          %v478 = vmul.f32 %v460, %v463
          %v479 = vmul.f32 %v462, %v463
          %v480 = vsub.f32 %v413, %v464
          %v481 = vsub.f32 %v414, %v465
          %v482 = vsub.f32 %v415, %v466
          %v483 = vsub.f32 %v416, %v467
          %v484 = vsub.f32 %v417, %v468
          %v485 = vsub.f32 %v418, %v469
          %v486 = vsub.f32 %v419, %v470
          %v487 = vsub.f32 %v420, %v471
          %v488 = vsub.f32 %v421, %v472
          %v489 = vsub.f32 %v422, %v473
          %v490 = vsub.f32 %v423, %v474
          %v491 = vsub.f32 %v424, %v475
          %v492 = vsub.f32 %v425, %v476
          %v493 = vsub.f32 %v426, %v477
          %v494 = vsub.f32 %v427, %v478
          %v495 = vsub.f32 %v428, %v479
          %v496 = vmul.f32 %v480, %v480
          %v497 = vmul.f32 %v481, %v481
          %v498 = vmul.f32 %v482, %v482
          %v499 = vmul.f32 %v483, %v483
          %v500 = vmul.f32 %v484, %v484
          %v501 = vmul.f32 %v485, %v485
          %v502 = vmul.f32 %v486, %v486
          %v503 = vmul.f32 %v487, %v487
          %v504 = vmul.f32 %v488, %v488
          %v505 = vmul.f32 %v489, %v489
          %v506 = vmul.f32 %v490, %v490
          %v507 = vmul.f32 %v491, %v491
          %v508 = vmul.f32 %v492, %v492
          %v509 = vmul.f32 %v493, %v493
          %v510 = vmul.f32 %v494, %v494
          %v511 = vmul.f32 %v495, %v495
          %512 = vadd.xlane.f32.xlu0 %v496
          %v513 = vpop.xlane.xlu0 %512
          %514 = vadd.xlane.f32.xlu0 %v497
          %v515 = vpop.xlane.xlu0 %514
          %516 = vadd.xlane.f32.xlu0 %v498
          %v517 = vpop.xlane.xlu0 %516
          %518 = vadd.xlane.f32.xlu0 %v499
          %v519 = vpop.xlane.xlu0 %518
          %520 = vadd.xlane.f32.xlu0 %v500
          %v521 = vpop.xlane.xlu0 %520
          %522 = vadd.xlane.f32.xlu0 %v501
          %v523 = vpop.xlane.xlu0 %522
          %524 = vadd.xlane.f32.xlu0 %v502
          %v525 = vpop.xlane.xlu0 %524
          %526 = vadd.xlane.f32.xlu0 %v503
          %v527 = vpop.xlane.xlu0 %526
          %528 = vadd.xlane.f32.xlu0 %v504
          %v529 = vpop.xlane.xlu0 %528
          %530 = vadd.xlane.f32.xlu0 %v505
          %v531 = vpop.xlane.xlu0 %530
          %532 = vadd.xlane.f32.xlu0 %v506
          %v533 = vpop.xlane.xlu0 %532
          %534 = vadd.xlane.f32.xlu0 %v507
          %v535 = vpop.xlane.xlu0 %534
          %536 = vadd.xlane.f32.xlu0 %v508
          %v537 = vpop.xlane.xlu0 %536
          %538 = vadd.xlane.f32.xlu0 %v509
          %v539 = vpop.xlane.xlu0 %538
          %540 = vadd.xlane.f32.xlu0 %v510
          %v541 = vpop.xlane.xlu0 %540
          %542 = vadd.xlane.f32.xlu0 %v511
          %v543 = vpop.xlane.xlu0 %542
          %v544 = vmul.f32 %v513, %v463
          %v545 = vmul.f32 %v515, %v463
          %v546 = vmul.f32 %v517, %v463
          %v547 = vmul.f32 %v519, %v463
          %v548 = vmul.f32 %v521, %v463
          %v549 = vmul.f32 %v523, %v463
          %v550 = vmul.f32 %v525, %v463
          %v551 = vmul.f32 %v527, %v463
          %v552 = vmul.f32 %v529, %v463
          %v553 = vmul.f32 %v531, %v463
          %v554 = vmul.f32 %v533, %v463
          %v555 = vmul.f32 %v535, %v463
          %v556 = vmul.f32 %v537, %v463
          %v557 = vmul.f32 %v539, %v463
          %v558 = vmul.f32 %v541, %v463
          %v559 = vmul.f32 %v543, %v463
          %v560 = vadd.f32 %v544, 1e-05
          %v561 = vadd.f32 %v545, 1e-05
          %v562 = vadd.f32 %v546, 1e-05
          %v563 = vadd.f32 %v547, 1e-05
          %v564 = vadd.f32 %v548, 1e-05
          %v565 = vadd.f32 %v549, 1e-05
          %v566 = vadd.f32 %v550, 1e-05
          %v567 = vadd.f32 %v551, 1e-05
          %v568 = vadd.f32 %v552, 1e-05
          %v569 = vadd.f32 %v553, 1e-05
          %v570 = vadd.f32 %v554, 1e-05
          %v571 = vadd.f32 %v555, 1e-05
          %v572 = vadd.f32 %v556, 1e-05
          %v573 = vadd.f32 %v557, 1e-05
          %v574 = vadd.f32 %v558, 1e-05
          %v575 = vadd.f32 %v559, 1e-05
          %v576 = vrsqrt.pop %v560
          %v577 = vrsqrt.pop %v561
          %v578 = vrsqrt.pop %v562
          %v579 = vrsqrt.pop %v563
          %v580 = vrsqrt.pop %v564
          %v581 = vrsqrt.pop %v565
          %v582 = vrsqrt.pop %v566
          %v583 = vrsqrt.pop %v567
          %v584 = vrsqrt.pop %v568
          %v585 = vrsqrt.pop %v569
          %v586 = vrsqrt.pop %v570
          %v587 = vrsqrt.pop %v571
          %v588 = vrsqrt.pop %v572
          %v589 = vrsqrt.pop %v573
          %v590 = vrsqrt.pop %v574
          %v591 = vrsqrt.pop %v575
          %v592 = vmul.f32 %v480, %v576
          %v593 = vmul.f32 %v481, %v577
          %v594 = vmul.f32 %v482, %v578
          %v595 = vmul.f32 %v483, %v579
          %v596 = vmul.f32 %v484, %v580
          %v597 = vmul.f32 %v485, %v581
          %v598 = vmul.f32 %v486, %v582
          %v599 = vmul.f32 %v487, %v583
          %v600 = vmul.f32 %v488, %v584
          %v601 = vmul.f32 %v489, %v585
          %v602 = vmul.f32 %v490, %v586
          %v603 = vmul.f32 %v491, %v587
          %v604 = vmul.f32 %v492, %v588
          %v605 = vmul.f32 %v493, %v589
          %v606 = vmul.f32 %v494, %v590
          %v607 = vmul.f32 %v495, %v591
          %v609 = vlaneseq
          %v610 = vshrl.u32 %v609, 7
          %v611 = vsub.s32 0, %v610
          %v612 = vrot.slane %v429, %v611
          %v614 = vmul.f32 %v592, %v612
          %v615 = vmul.f32 %v593, %v612
          %v616 = vmul.f32 %v594, %v612
          %v617 = vmul.f32 %v595, %v612
          %v618 = vmul.f32 %v596, %v612
          %v619 = vmul.f32 %v597, %v612
          %v620 = vmul.f32 %v598, %v612
          %v621 = vmul.f32 %v599, %v612
          %v622 = vmul.f32 %v600, %v612
          %v623 = vmul.f32 %v601, %v612
          %v624 = vmul.f32 %v602, %v612
          %v625 = vmul.f32 %v603, %v612
          %v626 = vmul.f32 %v604, %v612
          %v627 = vmul.f32 %v605, %v612
          %v628 = vmul.f32 %v606, %v612
          %v629 = vmul.f32 %v607, %v612
          %v631 = vlaneseq
          %v632 = vshrl.u32 %v631, 7
          %v633 = vsub.s32 0, %v632
          %v634 = vrot.slane %v430, %v633
          %v636 = vadd.f32 %v614, %v634
          %v637 = vadd.f32 %v615, %v634
          %v638 = vadd.f32 %v616, %v634
          %v639 = vadd.f32 %v617, %v634
          %v640 = vadd.f32 %v618, %v634
          %v641 = vadd.f32 %v619, %v634
          %v642 = vadd.f32 %v620, %v634
          %v643 = vadd.f32 %v621, %v634
          %v644 = vadd.f32 %v622, %v634
          %v645 = vadd.f32 %v623, %v634
          %v646 = vadd.f32 %v624, %v634
          %v647 = vadd.f32 %v625, %v634
          %v648 = vadd.f32 %v626, %v634
          %v649 = vadd.f32 %v627, %v634
          %v650 = vadd.f32 %v628, %v634
          %v651 = vadd.f32 %v629, %v634
          %v652 = vpack.c.bf16 %v637, %v636
          %v653 = vpack.c.bf16 %v639, %v638
          %v654 = vpack.c.bf16 %v641, %v640
          %v655 = vpack.c.bf16 %v643, %v642
          %v656 = vpack.c.bf16 %v645, %v644
          %v657 = vpack.c.bf16 %v647, %v646
          %v658 = vpack.c.bf16 %v649, %v648
          %v659 = vpack.c.bf16 %v651, %v650
          %660 = vst [vmem:[#allocation2] sm:$0xff] %v652
          %661 = vst [vmem:[#allocation2 + $0x8] sm:$0xff] %v653
          %662 = vst [vmem:[#allocation2 + $0x10] sm:$0xff] %v654
          %663 = vst [vmem:[#allocation2 + $0x18] sm:$0xff] %v655
          %664 = vst [vmem:[#allocation2 + $0x20] sm:$0xff] %v656
          %665 = vst [vmem:[#allocation2 + $0x28] sm:$0xff] %v657
          %666 = vst [vmem:[#allocation2 + $0x30] sm:$0xff] %v658
          %667 = vst [vmem:[#allocation2 + $0x38] sm:$0xff] %v659
          %vm668 = vcmask 7168
          %669 = vst.msk [vmem:[#allocation3] sm:$0xff] %vm668, -inf
          %670 = vst.msk [vmem:[#allocation3 + $0x8] sm:$0xff] %vm668, -inf
          %671 = vst.msk [vmem:[#allocation3 + $0x10] sm:$0xff] %vm668, -inf
          %672 = vst.msk [vmem:[#allocation3 + $0x18] sm:$0xff] %vm668, -inf
          %673 = vst.msk [vmem:[#allocation3 + $0x20] sm:$0xff] %vm668, -inf
          %674 = vst.msk [vmem:[#allocation3 + $0x28] sm:$0xff] %vm668, -inf
          %675 = vst.msk [vmem:[#allocation3 + $0x30] sm:$0xff] %vm668, -inf
          %676 = vst.msk [vmem:[#allocation3 + $0x38] sm:$0xff] %vm668, -inf
          %677 = vst.msk [vmem:[#allocation3 + $0x40] sm:$0xff] %vm668, -inf
          %678 = vst.msk [vmem:[#allocation3 + $0x48] sm:$0xff] %vm668, -inf
          %679 = vst.msk [vmem:[#allocation3 + $0x50] sm:$0xff] %vm668, -inf
          %680 = vst.msk [vmem:[#allocation3 + $0x58] sm:$0xff] %vm668, -inf
          %681 = vst.msk [vmem:[#allocation3 + $0x60] sm:$0xff] %vm668, -inf
          %682 = vst.msk [vmem:[#allocation3 + $0x68] sm:$0xff] %vm668, -inf
          %683 = vst.msk [vmem:[#allocation3 + $0x70] sm:$0xff] %vm668, -inf
          %684 = vst.msk [vmem:[#allocation3 + $0x78] sm:$0xff] %vm668, -inf
          %685 = vst.msk [vmem:[#allocation4] sm:$0xff] %vm668, 0.0
          %686 = vst.msk [vmem:[#allocation4 + $0x8] sm:$0xff] %vm668, 0.0
          %687 = vst.msk [vmem:[#allocation4 + $0x10] sm:$0xff] %vm668, 0.0
          %688 = vst.msk [vmem:[#allocation4 + $0x18] sm:$0xff] %vm668, 0.0
          %689 = vst.msk [vmem:[#allocation4 + $0x20] sm:$0xff] %vm668, 0.0
          %690 = vst.msk [vmem:[#allocation4 + $0x28] sm:$0xff] %vm668, 0.0
          %691 = vst.msk [vmem:[#allocation4 + $0x30] sm:$0xff] %vm668, 0.0
          %692 = vst.msk [vmem:[#allocation4 + $0x38] sm:$0xff] %vm668, 0.0
          %693 = vst.msk [vmem:[#allocation4 + $0x40] sm:$0xff] %vm668, 0.0
          %694 = vst.msk [vmem:[#allocation4 + $0x48] sm:$0xff] %vm668, 0.0
          %695 = vst.msk [vmem:[#allocation4 + $0x50] sm:$0xff] %vm668, 0.0
          %696 = vst.msk [vmem:[#allocation4 + $0x58] sm:$0xff] %vm668, 0.0
          %697 = vst.msk [vmem:[#allocation4 + $0x60] sm:$0xff] %vm668, 0.0
          %698 = vst.msk [vmem:[#allocation4 + $0x68] sm:$0xff] %vm668, 0.0
          %699 = vst.msk [vmem:[#allocation4 + $0x70] sm:$0xff] %vm668, 0.0
          %700 = vst.msk [vmem:[#allocation4 + $0x78] sm:$0xff] %vm668, 0.0
        $region85: #{full_transformer_forward.4} parent=76 // pred_fallthru
          _
        %v701 = vld [vmem:[#allocation2] sm:$0xff]
        %v702 = vld [vmem:[#allocation2 + $0x8] sm:$0xff]
        %v703 = vld [vmem:[#allocation2 + $0x10] sm:$0xff]
        %v704 = vld [vmem:[#allocation2 + $0x18] sm:$0xff]
        %v705 = vld [vmem:[#allocation2 + $0x20] sm:$0xff]
        %v706 = vld [vmem:[#allocation2 + $0x28] sm:$0xff]
        %v707 = vld [vmem:[#allocation2 + $0x30] sm:$0xff]
        %v708 = vld [vmem:[#allocation2 + $0x38] sm:$0xff]
        %v709 = vld [vmem:[%s356] sm:$0xf]
        %v710 = vld [vmem:[%s356 + $0x4] sm:$0xf]
        %v711 = vld [vmem:[%s356 + $0x8] sm:$0xf]
        %v712 = vld [vmem:[%s356 + $0xc] sm:$0xf]
        %v713 = vld [vmem:[%s356 + $0x10] sm:$0xf]
        %v714 = vld [vmem:[%s356 + $0x14] sm:$0xf]
        %v715 = vld [vmem:[%s356 + $0x18] sm:$0xf]
        %v716 = vld [vmem:[%s356 + $0x1c] sm:$0xf]
        %v717 = vld [vmem:[%s356 + $0x20] sm:$0xf]
        %v718 = vld [vmem:[%s356 + $0x24] sm:$0xf]
        %v719 = vld [vmem:[%s356 + $0x28] sm:$0xf]
        %v720 = vld [vmem:[%s356 + $0x2c] sm:$0xf]
        %v721 = vld [vmem:[%s356 + $0x30] sm:$0xf]
        %v722 = vld [vmem:[%s356 + $0x34] sm:$0xf]
        %v723 = vld [vmem:[%s356 + $0x38] sm:$0xf]
        %v724 = vld [vmem:[%s356 + $0x3c] sm:$0xf]
        %v725 = vld [vmem:[%s402] sm:$0x1]
        %v727 = vlaneseq
        %v728 = vshrl.u32 %v727, 7
        %v729 = vsub.s32 0, %v728
        %v730 = vrot.slane %v725, %v729
        %v748 = vunpack.c.l.b16 %v709
        %v749 = vunpack.c.l.b16 %v710
        %v750 = vunpack.c.l.b16 %v711
        %v751 = vunpack.c.l.b16 %v712
        %v752 = vunpack.c.l.b16 %v713
        %v753 = vunpack.c.l.b16 %v714
        %v754 = vunpack.c.l.b16 %v715
        %v755 = vunpack.c.l.b16 %v716
        %v756 = vunpack.c.l.b16 %v717
        %v757 = vunpack.c.l.b16 %v718
        %v758 = vunpack.c.l.b16 %v719
        %v759 = vunpack.c.l.b16 %v720
        %v760 = vunpack.c.l.b16 %v721
        %v761 = vunpack.c.l.b16 %v722
        %v762 = vunpack.c.l.b16 %v723
        %v763 = vunpack.c.l.b16 %v724
        %v764 = vpack.c.b16 %v749, %v748
        %v765 = vpack.c.b16 %v751, %v750
        %v766 = vpack.c.b16 %v753, %v752
        %v767 = vpack.c.b16 %v755, %v754
        %v768 = vpack.c.b16 %v757, %v756
        %v769 = vpack.c.b16 %v759, %v758
        %v770 = vpack.c.b16 %v761, %v760
        %v771 = vpack.c.b16 %v763, %v762
        %780 = vmatprep.subr.bf16.mxu0 0
        %781 = vmatpush1.bf16.msra.mxu0 %v764
        %782 = vmatprep.subr.bf16.mxu0 0
        %783 = vmatpush1.bf16.msra.mxu0 %v765
        %784 = vmatprep.subr.bf16.mxu0 0
        %785 = vmatpush1.bf16.msra.mxu0 %v766
        %786 = vmatprep.subr.bf16.mxu0 0
        %787 = vmatpush1.bf16.msra.mxu0 %v767
        %788 = vmatprep.subr.bf16.mxu0 0
        %789 = vmatpush1.bf16.msra.mxu0 %v768
        %790 = vmatprep.subr.bf16.mxu0 0
        %791 = vmatpush1.bf16.msra.mxu0 %v769
        %792 = vmatprep.subr.bf16.mxu0 0
        %793 = vmatpush1.bf16.msra.mxu0 %v770
        %794 = vmatprep.subr.bf16.mxu0 0
        %795 = vmatpush1.bf16.msra.mxu0 %v771
        %796 = vmatprep.subr.bf16.mxu0 0
        %797 = vmatpush1.bf16.msra.mxu0 0
        %798 = vmatprep.subr.bf16.mxu0 0
        %799 = vmatpush1.bf16.msra.mxu0 0
        %800 = vmatprep.subr.bf16.mxu0 0
        %801 = vmatpush1.bf16.msra.mxu0 0
        %802 = vmatprep.subr.bf16.mxu0 0
        %803 = vmatpush1.bf16.msra.mxu0 0
        %804 = vmatprep.subr.bf16.mxu0 0
        %805 = vmatpush1.bf16.msra.mxu0 0
        %806 = vmatprep.subr.bf16.mxu0 0
        %807 = vmatpush1.bf16.msra.mxu0 0
        %808 = vmatprep.subr.bf16.mxu0 0
        %809 = vmatpush1.bf16.msra.mxu0 0
        %810 = vmatprep.subr.bf16.mxu0 0
        %811 = vmatpush1.bf16.msra.mxu0 0
        %812 = vmatprep.mubr.bf16.mxu0 0
        %813 = vmatmul.mubr.bf16.gmra.mrb[0].mxu0 %v701
        %v814 = vpop.f32.mrb[0].mxu0
        %v815 = vadd.f32 %v730, %v814
        %v816 = vpop.f32.mrb[0].mxu0
        %v817 = vpop.f32.mrb[0].mxu0
        %v818 = vadd.f32 %v730, %v817
        %v819 = vpop.f32.mrb[0].mxu0
        %820 = vmatprep.mubr.bf16.mxu0 0
        %821 = vmatmul.mubr.bf16.gmra.mrb[0].mxu0 %v702
        %v822 = vpop.f32.mrb[0].mxu0
        %v823 = vadd.f32 %v730, %v822
        %v824 = vpop.f32.mrb[0].mxu0
        %v825 = vpop.f32.mrb[0].mxu0
        %v826 = vadd.f32 %v730, %v825
        %v827 = vpop.f32.mrb[0].mxu0
        %828 = vmatprep.mubr.bf16.mxu0 0
        %829 = vmatmul.mubr.bf16.gmra.mrb[0].mxu0 %v703
        %v830 = vpop.f32.mrb[0].mxu0
        %v831 = vadd.f32 %v730, %v830
        %v832 = vpop.f32.mrb[0].mxu0
        %v833 = vpop.f32.mrb[0].mxu0
        %v834 = vadd.f32 %v730, %v833
        %v835 = vpop.f32.mrb[0].mxu0
        %836 = vmatprep.mubr.bf16.mxu0 0
        %837 = vmatmul.mubr.bf16.gmra.mrb[0].mxu0 %v704
        %v838 = vpop.f32.mrb[0].mxu0
        %v839 = vadd.f32 %v730, %v838
        %v840 = vpop.f32.mrb[0].mxu0
        %v841 = vpop.f32.mrb[0].mxu0
        %v842 = vadd.f32 %v730, %v841
        %v843 = vpop.f32.mrb[0].mxu0
        %844 = vmatprep.mubr.bf16.mxu0 0
        %845 = vmatmul.mubr.bf16.gmra.mrb[0].mxu0 %v705
        %v846 = vpop.f32.mrb[0].mxu0
        %v847 = vadd.f32 %v730, %v846
        %v848 = vpop.f32.mrb[0].mxu0
        %v849 = vpop.f32.mrb[0].mxu0
        %v850 = vadd.f32 %v730, %v849
        %v851 = vpop.f32.mrb[0].mxu0
        %852 = vmatprep.mubr.bf16.mxu0 0
        %853 = vmatmul.mubr.bf16.gmra.mrb[0].mxu0 %v706
        %v854 = vpop.f32.mrb[0].mxu0
        %v855 = vadd.f32 %v730, %v854
        %v856 = vpop.f32.mrb[0].mxu0
        %v857 = vpop.f32.mrb[0].mxu0
        %v858 = vadd.f32 %v730, %v857
        %v859 = vpop.f32.mrb[0].mxu0
        %860 = vmatprep.mubr.bf16.mxu0 0
        %861 = vmatmul.mubr.bf16.gmra.mrb[0].mxu0 %v707
        %v862 = vpop.f32.mrb[0].mxu0
        %v863 = vadd.f32 %v730, %v862
        %v864 = vpop.f32.mrb[0].mxu0
        %v865 = vpop.f32.mrb[0].mxu0
        %v866 = vadd.f32 %v730, %v865
        %v867 = vpop.f32.mrb[0].mxu0
        %868 = vmatprep.mubr.bf16.mxu0 0
        %869 = vmatmul.mubr.bf16.gmra.mrb[0].mxu0 %v708
        %v870 = vpop.f32.mrb[0].mxu0
        %v871 = vadd.f32 %v730, %v870
        %v872 = vpop.f32.mrb[0].mxu0
        %v873 = vpop.f32.mrb[0].mxu0
        %v874 = vadd.f32 %v730, %v873
        %v875 = vpop.f32.mrb[0].mxu0
        %876 = vdwg.mxu0
        %877 = vst [vmem:[%s387] sm:$0xff] %v815
        %878 = vst [vmem:[%s387 + $0x8] sm:$0xff] %v818
        %879 = vst [vmem:[%s387 + $0x10] sm:$0xff] %v823
        %880 = vst [vmem:[%s387 + $0x18] sm:$0xff] %v826
        %881 = vst [vmem:[%s387 + $0x20] sm:$0xff] %v831
        %882 = vst [vmem:[%s387 + $0x28] sm:$0xff] %v834
        %883 = vst [vmem:[%s387 + $0x30] sm:$0xff] %v839
        %884 = vst [vmem:[%s387 + $0x38] sm:$0xff] %v842
        %885 = vst [vmem:[%s387 + $0x40] sm:$0xff] %v847
        %886 = vst [vmem:[%s387 + $0x48] sm:$0xff] %v850
        %887 = vst [vmem:[%s387 + $0x50] sm:$0xff] %v855
        %888 = vst [vmem:[%s387 + $0x58] sm:$0xff] %v858
        %889 = vst [vmem:[%s387 + $0x60] sm:$0xff] %v863
        %890 = vst [vmem:[%s387 + $0x68] sm:$0xff] %v866
        %891 = vst [vmem:[%s387 + $0x70] sm:$0xff] %v871
        %892 = vst [vmem:[%s387 + $0x78] sm:$0xff] %v874
        %v893 = vld [vmem:[#allocation3] sm:$0xff]
        %v894 = vld [vmem:[#allocation3 + $0x8] sm:$0xff]
        %v895 = vld [vmem:[#allocation3 + $0x10] sm:$0xff]
        %v896 = vld [vmem:[#allocation3 + $0x18] sm:$0xff]
        %v897 = vld [vmem:[#allocation3 + $0x20] sm:$0xff]
        %v898 = vld [vmem:[#allocation3 + $0x28] sm:$0xff]
        %v899 = vld [vmem:[#allocation3 + $0x30] sm:$0xff]
        %v900 = vld [vmem:[#allocation3 + $0x38] sm:$0xff]
        %v901 = vld [vmem:[#allocation3 + $0x40] sm:$0xff]
        %v902 = vld [vmem:[#allocation3 + $0x48] sm:$0xff]
        %v903 = vld [vmem:[#allocation3 + $0x50] sm:$0xff]
        %v904 = vld [vmem:[#allocation3 + $0x58] sm:$0xff]
        %v905 = vld [vmem:[#allocation3 + $0x60] sm:$0xff]
        %v906 = vld [vmem:[#allocation3 + $0x68] sm:$0xff]
        %v907 = vld [vmem:[#allocation3 + $0x70] sm:$0xff]
        %v908 = vld [vmem:[#allocation3 + $0x78] sm:$0xff]
        %909 = vmax.xlane.f32.xlu0 %v815
        %v910 = vpop.xlane.xlu0 %909
        %911 = vmax.xlane.f32.xlu0 %v818
        %v912 = vpop.xlane.xlu0 %911
        %913 = vmax.xlane.f32.xlu0 %v823
        %v914 = vpop.xlane.xlu0 %913
        %915 = vmax.xlane.f32.xlu0 %v826
        %v916 = vpop.xlane.xlu0 %915
        %917 = vmax.xlane.f32.xlu0 %v831
        %v918 = vpop.xlane.xlu0 %917
        %919 = vmax.xlane.f32.xlu0 %v834
        %v920 = vpop.xlane.xlu0 %919
        %921 = vmax.xlane.f32.xlu0 %v839
        %v922 = vpop.xlane.xlu0 %921
        %923 = vmax.xlane.f32.xlu0 %v842
        %v924 = vpop.xlane.xlu0 %923
        %925 = vmax.xlane.f32.xlu0 %v847
        %v926 = vpop.xlane.xlu0 %925
        %927 = vmax.xlane.f32.xlu0 %v850
        %v928 = vpop.xlane.xlu0 %927
        %929 = vmax.xlane.f32.xlu0 %v855
        %v930 = vpop.xlane.xlu0 %929
        %931 = vmax.xlane.f32.xlu0 %v858
        %v932 = vpop.xlane.xlu0 %931
        %933 = vmax.xlane.f32.xlu0 %v863
        %v934 = vpop.xlane.xlu0 %933
        %935 = vmax.xlane.f32.xlu0 %v866
        %v936 = vpop.xlane.xlu0 %935
        %937 = vmax.xlane.f32.xlu0 %v871
        %v938 = vpop.xlane.xlu0 %937
        %939 = vmax.xlane.f32.xlu0 %v874
        %v940 = vpop.xlane.xlu0 %939
        %v941 = vmax.f32 %v893, %v910
        %v942 = vmax.f32 %v894, %v912
        %v943 = vmax.f32 %v895, %v914
        %v944 = vmax.f32 %v896, %v916
        %v945 = vmax.f32 %v897, %v918
        %v946 = vmax.f32 %v898, %v920
        %v947 = vmax.f32 %v899, %v922
        %v948 = vmax.f32 %v900, %v924
        %v949 = vmax.f32 %v901, %v926
        %v950 = vmax.f32 %v902, %v928
        %v951 = vmax.f32 %v903, %v930
        %v952 = vmax.f32 %v904, %v932
        %v953 = vmax.f32 %v905, %v934
        %v954 = vmax.f32 %v906, %v936
        %v955 = vmax.f32 %v907, %v938
        %v956 = vmax.f32 %v908, %v940
        %v957 = vld [vmem:[#allocation4] sm:$0xff]
        %v958 = vld [vmem:[#allocation4 + $0x8] sm:$0xff]
        %v959 = vld [vmem:[#allocation4 + $0x10] sm:$0xff]
        %v960 = vld [vmem:[#allocation4 + $0x18] sm:$0xff]
        %v961 = vld [vmem:[#allocation4 + $0x20] sm:$0xff]
        %v962 = vld [vmem:[#allocation4 + $0x28] sm:$0xff]
        %v963 = vld [vmem:[#allocation4 + $0x30] sm:$0xff]
        %v964 = vld [vmem:[#allocation4 + $0x38] sm:$0xff]
        %v965 = vld [vmem:[#allocation4 + $0x40] sm:$0xff]
        %v966 = vld [vmem:[#allocation4 + $0x48] sm:$0xff]
        %v967 = vld [vmem:[#allocation4 + $0x50] sm:$0xff]
        %v968 = vld [vmem:[#allocation4 + $0x58] sm:$0xff]
        %v969 = vld [vmem:[#allocation4 + $0x60] sm:$0xff]
        %v970 = vld [vmem:[#allocation4 + $0x68] sm:$0xff]
        %v971 = vld [vmem:[#allocation4 + $0x70] sm:$0xff]
        %v972 = vld [vmem:[#allocation4 + $0x78] sm:$0xff]
        %v973 = vsub.f32 %v893, %v941
        %v974 = vsub.f32 %v894, %v942
        %v975 = vsub.f32 %v895, %v943
        %v976 = vsub.f32 %v896, %v944
        %v977 = vsub.f32 %v897, %v945
        %v978 = vsub.f32 %v898, %v946
        %v979 = vsub.f32 %v899, %v947
        %v980 = vsub.f32 %v900, %v948
        %v981 = vsub.f32 %v901, %v949
        %v982 = vsub.f32 %v902, %v950
        %v983 = vsub.f32 %v903, %v951
        %v984 = vsub.f32 %v904, %v952
        %v985 = vsub.f32 %v905, %v953
        %v986 = vsub.f32 %v906, %v954
        %v987 = vsub.f32 %v907, %v955
        %v988 = vsub.f32 %v908, %v956
        %v989 = vmul.f32 %v973, 1.442695
        %v990 = vpow.pop %v989
        %v991 = vmul.f32 %v974, 1.442695
        %v992 = vpow.pop %v991
        %v993 = vmul.f32 %v975, 1.442695
        %v994 = vpow.pop %v993
        %v995 = vmul.f32 %v976, 1.442695
        %v996 = vpow.pop %v995
        %v997 = vmul.f32 %v977, 1.442695
        %v998 = vpow.pop %v997
        %v999 = vmul.f32 %v978, 1.442695
        %v1000 = vpow.pop %v999
        %v1001 = vmul.f32 %v979, 1.442695
        %v1002 = vpow.pop %v1001
        %v1003 = vmul.f32 %v980, 1.442695
        %v1004 = vpow.pop %v1003
        %v1005 = vmul.f32 %v981, 1.442695
        %v1006 = vpow.pop %v1005
        %v1007 = vmul.f32 %v982, 1.442695
        %v1008 = vpow.pop %v1007
        %v1009 = vmul.f32 %v983, 1.442695
        %v1010 = vpow.pop %v1009
        %v1011 = vmul.f32 %v984, 1.442695
        %v1012 = vpow.pop %v1011
        %v1013 = vmul.f32 %v985, 1.442695
        %v1014 = vpow.pop %v1013
        %v1015 = vmul.f32 %v986, 1.442695
        %v1016 = vpow.pop %v1015
        %v1017 = vmul.f32 %v987, 1.442695
        %v1018 = vpow.pop %v1017
        %v1019 = vmul.f32 %v988, 1.442695
        %v1020 = vpow.pop %v1019
        %v1021 = vmul.f32 %v957, %v990
        %v1022 = vmul.f32 %v958, %v992
        %v1023 = vmul.f32 %v959, %v994
        %v1024 = vmul.f32 %v960, %v996
        %v1025 = vmul.f32 %v961, %v998
        %v1026 = vmul.f32 %v962, %v1000
        %v1027 = vmul.f32 %v963, %v1002
        %v1028 = vmul.f32 %v964, %v1004
        %v1029 = vmul.f32 %v965, %v1006
        %v1030 = vmul.f32 %v966, %v1008
        %v1031 = vmul.f32 %v967, %v1010
        %v1032 = vmul.f32 %v968, %v1012
        %v1033 = vmul.f32 %v969, %v1014
        %v1034 = vmul.f32 %v970, %v1016
        %v1035 = vmul.f32 %v971, %v1018
        %v1036 = vmul.f32 %v972, %v1020
        %1038 = vset.pattern.permute.xlu0 0
        %1039 = vperm.xlu0 %1038, %v941
        %v1040 = vpop.permute.xlu0 %1039
        %1043 = vset.pattern.permute.xlu0 0
        %1044 = vperm.xlu0 %1043, %v942
        %v1045 = vpop.permute.xlu0 %1044
        %1048 = vset.pattern.permute.xlu0 0
        %1049 = vperm.xlu0 %1048, %v943
        %v1050 = vpop.permute.xlu0 %1049
        %1053 = vset.pattern.permute.xlu0 0
        %1054 = vperm.xlu0 %1053, %v944
        %v1055 = vpop.permute.xlu0 %1054
        %1058 = vset.pattern.permute.xlu0 0
        %1059 = vperm.xlu0 %1058, %v945
        %v1060 = vpop.permute.xlu0 %1059
        %1063 = vset.pattern.permute.xlu0 0
        %1064 = vperm.xlu0 %1063, %v946
        %v1065 = vpop.permute.xlu0 %1064
        %1068 = vset.pattern.permute.xlu0 0
        %1069 = vperm.xlu0 %1068, %v947
        %v1070 = vpop.permute.xlu0 %1069
        %1073 = vset.pattern.permute.xlu0 0
        %1074 = vperm.xlu0 %1073, %v948
        %v1075 = vpop.permute.xlu0 %1074
        %1078 = vset.pattern.permute.xlu0 0
        %1079 = vperm.xlu0 %1078, %v949
        %v1080 = vpop.permute.xlu0 %1079
        %1083 = vset.pattern.permute.xlu0 0
        %1084 = vperm.xlu0 %1083, %v950
        %v1085 = vpop.permute.xlu0 %1084
        %1088 = vset.pattern.permute.xlu0 0
        %1089 = vperm.xlu0 %1088, %v951
        %v1090 = vpop.permute.xlu0 %1089
        %1093 = vset.pattern.permute.xlu0 0
        %1094 = vperm.xlu0 %1093, %v952
        %v1095 = vpop.permute.xlu0 %1094
        %1098 = vset.pattern.permute.xlu0 0
        %1099 = vperm.xlu0 %1098, %v953
        %v1100 = vpop.permute.xlu0 %1099
        %1103 = vset.pattern.permute.xlu0 0
        %1104 = vperm.xlu0 %1103, %v954
        %v1105 = vpop.permute.xlu0 %1104
        %1108 = vset.pattern.permute.xlu0 0
        %1109 = vperm.xlu0 %1108, %v955
        %v1110 = vpop.permute.xlu0 %1109
        %1113 = vset.pattern.permute.xlu0 0
        %1114 = vperm.xlu0 %1113, %v956
        %v1115 = vpop.permute.xlu0 %1114
        %v1117 = vsub.f32 %v815, %v1040
        %v1118 = vsub.f32 %v818, %v1045
        %v1119 = vsub.f32 %v823, %v1050
        %v1120 = vsub.f32 %v826, %v1055
        %v1121 = vsub.f32 %v831, %v1060
        %v1122 = vsub.f32 %v834, %v1065
        %v1123 = vsub.f32 %v839, %v1070
        %v1124 = vsub.f32 %v842, %v1075
        %v1125 = vsub.f32 %v847, %v1080
        %v1126 = vsub.f32 %v850, %v1085
        %v1127 = vsub.f32 %v855, %v1090
        %v1128 = vsub.f32 %v858, %v1095
        %v1129 = vsub.f32 %v863, %v1100
        %v1130 = vsub.f32 %v866, %v1105
        %v1131 = vsub.f32 %v871, %v1110
        %v1132 = vsub.f32 %v874, %v1115
        %v1133 = vmul.f32 %v1117, 1.442695
        %v1134 = vpow.pop %v1133
        %v1135 = vmul.f32 %v1118, 1.442695
        %v1136 = vpow.pop %v1135
        %v1137 = vmul.f32 %v1119, 1.442695
        %v1138 = vpow.pop %v1137
        %v1139 = vmul.f32 %v1120, 1.442695
        %v1140 = vpow.pop %v1139
        %v1141 = vmul.f32 %v1121, 1.442695
        %v1142 = vpow.pop %v1141
        %v1143 = vmul.f32 %v1122, 1.442695
        %v1144 = vpow.pop %v1143
        %v1145 = vmul.f32 %v1123, 1.442695
        %v1146 = vpow.pop %v1145
        %v1147 = vmul.f32 %v1124, 1.442695
        %v1148 = vpow.pop %v1147
        %v1149 = vmul.f32 %v1125, 1.442695
        %v1150 = vpow.pop %v1149
        %v1151 = vmul.f32 %v1126, 1.442695
        %v1152 = vpow.pop %v1151
        %v1153 = vmul.f32 %v1127, 1.442695
        %v1154 = vpow.pop %v1153
        %v1155 = vmul.f32 %v1128, 1.442695
        %v1156 = vpow.pop %v1155
        %v1157 = vmul.f32 %v1129, 1.442695
        %v1158 = vpow.pop %v1157
        %v1159 = vmul.f32 %v1130, 1.442695
        %v1160 = vpow.pop %v1159
        %v1161 = vmul.f32 %v1131, 1.442695
        %v1162 = vpow.pop %v1161
        %v1163 = vmul.f32 %v1132, 1.442695
        %v1164 = vpow.pop %v1163
        %1165 = vadd.xlane.f32.xlu0 %v1134
        %v1166 = vpop.xlane.xlu0 %1165
        %1167 = vadd.xlane.f32.xlu0 %v1136
        %v1168 = vpop.xlane.xlu0 %1167
        %1169 = vadd.xlane.f32.xlu0 %v1138
        %v1170 = vpop.xlane.xlu0 %1169
        %1171 = vadd.xlane.f32.xlu0 %v1140
        %v1172 = vpop.xlane.xlu0 %1171
        %1173 = vadd.xlane.f32.xlu0 %v1142
        %v1174 = vpop.xlane.xlu0 %1173
        %1175 = vadd.xlane.f32.xlu0 %v1144
        %v1176 = vpop.xlane.xlu0 %1175
        %1177 = vadd.xlane.f32.xlu0 %v1146
        %v1178 = vpop.xlane.xlu0 %1177
        %1179 = vadd.xlane.f32.xlu0 %v1148
        %v1180 = vpop.xlane.xlu0 %1179
        %1181 = vadd.xlane.f32.xlu0 %v1150
        %v1182 = vpop.xlane.xlu0 %1181
        %1183 = vadd.xlane.f32.xlu0 %v1152
        %v1184 = vpop.xlane.xlu0 %1183
        %1185 = vadd.xlane.f32.xlu0 %v1154
        %v1186 = vpop.xlane.xlu0 %1185
        %1187 = vadd.xlane.f32.xlu0 %v1156
        %v1188 = vpop.xlane.xlu0 %1187
        %1189 = vadd.xlane.f32.xlu0 %v1158
        %v1190 = vpop.xlane.xlu0 %1189
        %1191 = vadd.xlane.f32.xlu0 %v1160
        %v1192 = vpop.xlane.xlu0 %1191
        %1193 = vadd.xlane.f32.xlu0 %v1162
        %v1194 = vpop.xlane.xlu0 %1193
        %1195 = vadd.xlane.f32.xlu0 %v1164
        %v1196 = vpop.xlane.xlu0 %1195
        %v1197 = vadd.f32 %v1021, %v1166
        %v1198 = vadd.f32 %v1022, %v1168
        %v1199 = vadd.f32 %v1023, %v1170
        %v1200 = vadd.f32 %v1024, %v1172
        %v1201 = vadd.f32 %v1025, %v1174
        %v1202 = vadd.f32 %v1026, %v1176
        %v1203 = vadd.f32 %v1027, %v1178
        %v1204 = vadd.f32 %v1028, %v1180
        %v1205 = vadd.f32 %v1029, %v1182
        %v1206 = vadd.f32 %v1030, %v1184
        %v1207 = vadd.f32 %v1031, %v1186
        %v1208 = vadd.f32 %v1032, %v1188
        %v1209 = vadd.f32 %v1033, %v1190
        %v1210 = vadd.f32 %v1034, %v1192
        %v1211 = vadd.f32 %v1035, %v1194
        %v1212 = vadd.f32 %v1036, %v1196
        %vm1213 = vcmask 7168
        %1214 = vst.msk [vmem:[#allocation4] sm:$0xff] %vm1213, %v1197
        %1215 = vst.msk [vmem:[#allocation4 + $0x8] sm:$0xff] %vm1213, %v1198
        %1216 = vst.msk [vmem:[#allocation4 + $0x10] sm:$0xff] %vm1213, %v1199
        %1217 = vst.msk [vmem:[#allocation4 + $0x18] sm:$0xff] %vm1213, %v1200
        %1218 = vst.msk [vmem:[#allocation4 + $0x20] sm:$0xff] %vm1213, %v1201
        %1219 = vst.msk [vmem:[#allocation4 + $0x28] sm:$0xff] %vm1213, %v1202
        %1220 = vst.msk [vmem:[#allocation4 + $0x30] sm:$0xff] %vm1213, %v1203
        %1221 = vst.msk [vmem:[#allocation4 + $0x38] sm:$0xff] %vm1213, %v1204
        %1222 = vst.msk [vmem:[#allocation4 + $0x40] sm:$0xff] %vm1213, %v1205
        %1223 = vst.msk [vmem:[#allocation4 + $0x48] sm:$0xff] %vm1213, %v1206
        %1224 = vst.msk [vmem:[#allocation4 + $0x50] sm:$0xff] %vm1213, %v1207
        %1225 = vst.msk [vmem:[#allocation4 + $0x58] sm:$0xff] %vm1213, %v1208
        %1226 = vst.msk [vmem:[#allocation4 + $0x60] sm:$0xff] %vm1213, %v1209
        %1227 = vst.msk [vmem:[#allocation4 + $0x68] sm:$0xff] %vm1213, %v1210
        %1228 = vst.msk [vmem:[#allocation4 + $0x70] sm:$0xff] %vm1213, %v1211
        %1229 = vst.msk [vmem:[#allocation4 + $0x78] sm:$0xff] %vm1213, %v1212
        %1230 = vst.msk [vmem:[#allocation3] sm:$0xff] %vm1213, %v941
        %1231 = vst.msk [vmem:[#allocation3 + $0x8] sm:$0xff] %vm1213, %v942
        %1232 = vst.msk [vmem:[#allocation3 + $0x10] sm:$0xff] %vm1213, %v943
        %1233 = vst.msk [vmem:[#allocation3 + $0x18] sm:$0xff] %vm1213, %v944
        %1234 = vst.msk [vmem:[#allocation3 + $0x20] sm:$0xff] %vm1213, %v945
        %1235 = vst.msk [vmem:[#allocation3 + $0x28] sm:$0xff] %vm1213, %v946
        %1236 = vst.msk [vmem:[#allocation3 + $0x30] sm:$0xff] %vm1213, %v947
        %1237 = vst.msk [vmem:[#allocation3 + $0x38] sm:$0xff] %vm1213, %v948
        %1238 = vst.msk [vmem:[#allocation3 + $0x40] sm:$0xff] %vm1213, %v949
        %1239 = vst.msk [vmem:[#allocation3 + $0x48] sm:$0xff] %vm1213, %v950
        %1240 = vst.msk [vmem:[#allocation3 + $0x50] sm:$0xff] %vm1213, %v951
        %1241 = vst.msk [vmem:[#allocation3 + $0x58] sm:$0xff] %vm1213, %v952
        %1242 = vst.msk [vmem:[#allocation3 + $0x60] sm:$0xff] %vm1213, %v953
        %1243 = vst.msk [vmem:[#allocation3 + $0x68] sm:$0xff] %vm1213, %v954
        %1244 = vst.msk [vmem:[#allocation3 + $0x70] sm:$0xff] %vm1213, %v955
        %1245 = vst.msk [vmem:[#allocation3 + $0x78] sm:$0xff] %vm1213, %v956
        %p1246 = scmp.eq.s32.totalorder %s23, 1
        // Predicated region
        $region86: #{full_transformer_forward.4} parent=76 // pred_check
          %p1247 = pneg %p1246
        $region87: #{full_transformer_forward.4} parent=76 // pred_check_branch
          %1249 = sbr.rel (%p1247) target = $region89
        $region88: #{full_transformer_forward.4} parent=76 // pred_region
          %v1250 = vld [vmem:[#allocation3] sm:$0xff]
          %v1251 = vld [vmem:[#allocation3 + $0x8] sm:$0xff]
          %v1252 = vld [vmem:[#allocation3 + $0x10] sm:$0xff]
          %v1253 = vld [vmem:[#allocation3 + $0x18] sm:$0xff]
          %v1254 = vld [vmem:[#allocation3 + $0x20] sm:$0xff]
          %v1255 = vld [vmem:[#allocation3 + $0x28] sm:$0xff]
          %v1256 = vld [vmem:[#allocation3 + $0x30] sm:$0xff]
          %v1257 = vld [vmem:[#allocation3 + $0x38] sm:$0xff]
          %v1258 = vld [vmem:[#allocation3 + $0x40] sm:$0xff]
          %v1259 = vld [vmem:[#allocation3 + $0x48] sm:$0xff]
          %v1260 = vld [vmem:[#allocation3 + $0x50] sm:$0xff]
          %v1261 = vld [vmem:[#allocation3 + $0x58] sm:$0xff]
          %v1262 = vld [vmem:[#allocation3 + $0x60] sm:$0xff]
          %v1263 = vld [vmem:[#allocation3 + $0x68] sm:$0xff]
          %v1264 = vld [vmem:[#allocation3 + $0x70] sm:$0xff]
          %v1265 = vld [vmem:[#allocation3 + $0x78] sm:$0xff]
          %v1266 = vld [vmem:[#allocation4] sm:$0xff]
          %v1267 = vld [vmem:[#allocation4 + $0x8] sm:$0xff]
          %v1268 = vld [vmem:[#allocation4 + $0x10] sm:$0xff]
          %v1269 = vld [vmem:[#allocation4 + $0x18] sm:$0xff]
          %v1270 = vld [vmem:[#allocation4 + $0x20] sm:$0xff]
          %v1271 = vld [vmem:[#allocation4 + $0x28] sm:$0xff]
          %v1272 = vld [vmem:[#allocation4 + $0x30] sm:$0xff]
          %v1273 = vld [vmem:[#allocation4 + $0x38] sm:$0xff]
          %v1274 = vld [vmem:[#allocation4 + $0x40] sm:$0xff]
          %v1275 = vld [vmem:[#allocation4 + $0x48] sm:$0xff]
          %v1276 = vld [vmem:[#allocation4 + $0x50] sm:$0xff]
          %v1277 = vld [vmem:[#allocation4 + $0x58] sm:$0xff]
          %v1278 = vld [vmem:[#allocation4 + $0x60] sm:$0xff]
          %v1279 = vld [vmem:[#allocation4 + $0x68] sm:$0xff]
          %v1280 = vld [vmem:[#allocation4 + $0x70] sm:$0xff]
          %v1281 = vld [vmem:[#allocation4 + $0x78] sm:$0xff]
          %v1282 = vlog2.pop %v1266
          %v1283 = vmul.f32 %v1282, 0.6931472
          %v1284 = vlog2.pop %v1267
          %v1285 = vmul.f32 %v1284, 0.6931472
          %v1286 = vlog2.pop %v1268
          %v1287 = vmul.f32 %v1286, 0.6931472
          %v1288 = vlog2.pop %v1269
          %v1289 = vmul.f32 %v1288, 0.6931472
          %v1290 = vlog2.pop %v1270
          %v1291 = vmul.f32 %v1290, 0.6931472
          %v1292 = vlog2.pop %v1271
          %v1293 = vmul.f32 %v1292, 0.6931472
          %v1294 = vlog2.pop %v1272
          %v1295 = vmul.f32 %v1294, 0.6931472
          %v1296 = vlog2.pop %v1273
          %v1297 = vmul.f32 %v1296, 0.6931472
          %v1298 = vlog2.pop %v1274
          %v1299 = vmul.f32 %v1298, 0.6931472
          %v1300 = vlog2.pop %v1275
          %v1301 = vmul.f32 %v1300, 0.6931472
          %v1302 = vlog2.pop %v1276
          %v1303 = vmul.f32 %v1302, 0.6931472
          %v1304 = vlog2.pop %v1277
          %v1305 = vmul.f32 %v1304, 0.6931472
          %v1306 = vlog2.pop %v1278
          %v1307 = vmul.f32 %v1306, 0.6931472
          %v1308 = vlog2.pop %v1279
          %v1309 = vmul.f32 %v1308, 0.6931472
          %v1310 = vlog2.pop %v1280
          %v1311 = vmul.f32 %v1310, 0.6931472
          %v1312 = vlog2.pop %v1281
          %v1313 = vmul.f32 %v1312, 0.6931472
          %v1314 = vadd.f32 %v1250, %v1283
          %v1315 = vadd.f32 %v1251, %v1285
          %v1316 = vadd.f32 %v1252, %v1287
          %v1317 = vadd.f32 %v1253, %v1289
          %v1318 = vadd.f32 %v1254, %v1291
          %v1319 = vadd.f32 %v1255, %v1293
          %v1320 = vadd.f32 %v1256, %v1295
          %v1321 = vadd.f32 %v1257, %v1297
          %v1322 = vadd.f32 %v1258, %v1299
          %v1323 = vadd.f32 %v1259, %v1301
          %v1324 = vadd.f32 %v1260, %v1303
          %v1325 = vadd.f32 %v1261, %v1305
          %v1326 = vadd.f32 %v1262, %v1307
          %v1327 = vadd.f32 %v1263, %v1309
          %v1328 = vadd.f32 %v1264, %v1311
          %v1329 = vadd.f32 %v1265, %v1313
          %1330 = vst.msk [vmem:[%s407] sm:$0xff] %vm1213, %v1314
          %1331 = vst.msk [vmem:[%s407 + $0x8] sm:$0xff] %vm1213, %v1315
          %1332 = vst.msk [vmem:[%s407 + $0x10] sm:$0xff] %vm1213, %v1316
          %1333 = vst.msk [vmem:[%s407 + $0x18] sm:$0xff] %vm1213, %v1317
          %1334 = vst.msk [vmem:[%s407 + $0x20] sm:$0xff] %vm1213, %v1318
          %1335 = vst.msk [vmem:[%s407 + $0x28] sm:$0xff] %vm1213, %v1319
          %1336 = vst.msk [vmem:[%s407 + $0x30] sm:$0xff] %vm1213, %v1320
          %1337 = vst.msk [vmem:[%s407 + $0x38] sm:$0xff] %vm1213, %v1321
          %1338 = vst.msk [vmem:[%s407 + $0x40] sm:$0xff] %vm1213, %v1322
          %1339 = vst.msk [vmem:[%s407 + $0x48] sm:$0xff] %vm1213, %v1323
          %1340 = vst.msk [vmem:[%s407 + $0x50] sm:$0xff] %vm1213, %v1324
          %1341 = vst.msk [vmem:[%s407 + $0x58] sm:$0xff] %vm1213, %v1325
          %1342 = vst.msk [vmem:[%s407 + $0x60] sm:$0xff] %vm1213, %v1326
          %1343 = vst.msk [vmem:[%s407 + $0x68] sm:$0xff] %vm1213, %v1327
          %1344 = vst.msk [vmem:[%s407 + $0x70] sm:$0xff] %vm1213, %v1328
          %1345 = vst.msk [vmem:[%s407 + $0x78] sm:$0xff] %vm1213, %v1329
        $region89: #{full_transformer_forward.4} parent=76 // pred_fallthru
          _
        %s1346 = sand.u32 %s160, 1
        %s1347 = sand.u32 %s160, 1
        %s1348 = smul.addr %s1347, 128
        %s1349 = scalar_lea.vmem [#allocation6], %s1348
        %p1350 = scmp.lt.s32.totalorder %s22, 1
        %s1351 = scalar_select %p1350, %s22, 1
        %s1352 = smul.addr %s1351, 16
        %s1353 = smul.addr %s1352, 8
        %s1354 = scalar_lea.vmem %s6, %s1353
        // Predicated region
        $region90: #{full_transformer_forward.4} parent=76 // pred_check
          %p1355 = pneg %p170
        $region91: #{full_transformer_forward.4} parent=76 // pred_check_branch
          %1357 = sbr.rel (%p1355) target = $region93
        $region92: #{full_transformer_forward.4} parent=76 // pred_region
          %s1358 = smul.addr %s22, 32
          %s1359 = sadd.s32 %s23, %s1358
          %s1360 = smul.addr %s1359, 8
          %s1361 = scalar_lea.vmem %s5, %s1360
          // Predicated region
          $region94: #{full_transformer_forward.4} parent=92 // pred_check
            _
          $region95: #{full_transformer_forward.4} parent=92 // pred_check_branch
            %1363 = sbr.rel (0) target = $region97
          $region96: #{full_transformer_forward.4} parent=92 // pred_region
            // Predicated region
            $region98: #{full_transformer_forward.4} parent=96 // pred_check
              _
            $region99: #{full_transformer_forward.4} parent=96 // pred_check_branch
              %1365 = sbr.rel (0) target = $region101
            $region100: #{full_transformer_forward.4} parent=96 // pred_region
              // Predicated region
              $region113: #{full_transformer_forward.4} parent=100 // pred_check
                _
              $region114: #{full_transformer_forward.4} parent=100 // pred_check_branch
                %1410 = sbr.rel (0) target = $region116
              $region115: #{full_transformer_forward.4} parent=100 // pred_region
                loop: start=0, step=1, limit=1
                $region117: #{full_transformer_forward.4} parent=115 // loop_pre_header
                  _
                $region118: #{full_transformer_forward.4} parent=115 // loop_header
                  %s1412 = sphi 0, %s1416
                  %p1413 = scmp.ge.s32.totalorder %s1412, 1
                  %s1417 = sphi %s1349, %s1349
                  %s1418 = sphi %s1361, %s1361
                $region119: #{full_transformer_forward.4} parent=115 // loop_header_branch
                  %1415 = sbr.rel (%p1413) target = $region123
                $region120: #{full_transformer_forward.4} parent=115 // loop_body
                  %v1419 = vld [vmem:[%s1417] sm:$0xff]
                  %1420 = vst [vmem:[%s1418] sm:$0xff] %v1419
                  %v1421 = vld [vmem:[%s1417 + $0x8] sm:$0xff]
                  %1422 = vst [vmem:[%s1418 + $0x10] sm:$0xff] %v1421
                  %v1423 = vld [vmem:[%s1417 + $0x10] sm:$0xff]
                  %1424 = vst [vmem:[%s1418 + $0x20] sm:$0xff] %v1423
                  %v1425 = vld [vmem:[%s1417 + $0x18] sm:$0xff]
                  %1426 = vst [vmem:[%s1418 + $0x30] sm:$0xff] %v1425
                  %v1427 = vld [vmem:[%s1417 + $0x20] sm:$0xff]
                  %1428 = vst [vmem:[%s1418 + $0x40] sm:$0xff] %v1427
                  %v1429 = vld [vmem:[%s1417 + $0x28] sm:$0xff]
                  %1430 = vst [vmem:[%s1418 + $0x50] sm:$0xff] %v1429
                  %v1431 = vld [vmem:[%s1417 + $0x30] sm:$0xff]
                  %1432 = vst [vmem:[%s1418 + $0x60] sm:$0xff] %v1431
                  %v1433 = vld [vmem:[%s1417 + $0x38] sm:$0xff]
                  %1434 = vst [vmem:[%s1418 + $0x70] sm:$0xff] %v1433
                  %v1435 = vld [vmem:[%s1417 + $0x40] sm:$0xff]
                  %1436 = vst [vmem:[%s1418 + $0x80] sm:$0xff] %v1435
                  %v1437 = vld [vmem:[%s1417 + $0x48] sm:$0xff]
                  %1438 = vst [vmem:[%s1418 + $0x90] sm:$0xff] %v1437
                  %v1439 = vld [vmem:[%s1417 + $0x50] sm:$0xff]
                  %1440 = vst [vmem:[%s1418 + $0xa0] sm:$0xff] %v1439
                  %v1441 = vld [vmem:[%s1417 + $0x58] sm:$0xff]
                  %1442 = vst [vmem:[%s1418 + $0xb0] sm:$0xff] %v1441
                  %v1443 = vld [vmem:[%s1417 + $0x60] sm:$0xff]
                  %1444 = vst [vmem:[%s1418 + $0xc0] sm:$0xff] %v1443
                  %v1445 = vld [vmem:[%s1417 + $0x68] sm:$0xff]
                  %1446 = vst [vmem:[%s1418 + $0xd0] sm:$0xff] %v1445
                  %v1447 = vld [vmem:[%s1417 + $0x70] sm:$0xff]
                  %1448 = vst [vmem:[%s1418 + $0xe0] sm:$0xff] %v1447
                  %v1449 = vld [vmem:[%s1417 + $0x78] sm:$0xff]
                  %1450 = vst [vmem:[%s1418 + $0xf0] sm:$0xff] %v1449
                $region121: #{full_transformer_forward.4} parent=115 // loop_footer
                  %s1416 = sadd.s32 1, %s1412
                $region122: #{full_transformer_forward.4} parent=115 // loop_footer_branch
                  %1411 = sbr.rel target = $region118
                $region123: #{full_transformer_forward.4} parent=115 // loop_exit
                  _
              $region116: #{full_transformer_forward.4} parent=100 // pred_fallthru
                _
              // Predicated region
              $region124: #{full_transformer_forward.4} parent=100 // pred_check
                _
              $region125: #{full_transformer_forward.4} parent=100 // pred_check_branch
                %1452 = sbr.rel target = $region127
              $region126: #{full_transformer_forward.4} parent=100 // pred_region
                _
              $region127: #{full_transformer_forward.4} parent=100 // pred_fallthru
                _
            $region101: #{full_transformer_forward.4} parent=96 // pred_fallthru
              _
            // Predicated region
            $region102: #{full_transformer_forward.4} parent=96 // pred_check
              _
            $region103: #{full_transformer_forward.4} parent=96 // pred_check_branch
              %1367 = sbr.rel target = $region105
            $region104: #{full_transformer_forward.4} parent=96 // pred_region
              loop: start=0, step=1, limit=1
              $region106: #{full_transformer_forward.4} parent=104 // loop_pre_header
                _
              $region107: #{full_transformer_forward.4} parent=104 // loop_header
                %s1370 = sphi 0, %s1374
                %p1371 = scmp.ge.s32.totalorder %s1370, 1
                %s1375 = sphi %s1349, %s1349
                %s1376 = sphi %s1361, %s1361
              $region108: #{full_transformer_forward.4} parent=104 // loop_header_branch
                %1373 = sbr.rel (%p1371) target = $region112
              $region109: #{full_transformer_forward.4} parent=104 // loop_body
                %v1377 = vld [vmem:[%s1375] sm:$0xff]
                %1378 = vst [vmem:[%s1376] sm:$0xff] %v1377
                %v1379 = vld [vmem:[%s1375 + $0x8] sm:$0xff]
                %1380 = vst [vmem:[%s1376 + $0x10] sm:$0xff] %v1379
                %v1381 = vld [vmem:[%s1375 + $0x10] sm:$0xff]
                %1382 = vst [vmem:[%s1376 + $0x20] sm:$0xff] %v1381
                %v1383 = vld [vmem:[%s1375 + $0x18] sm:$0xff]
                %1384 = vst [vmem:[%s1376 + $0x30] sm:$0xff] %v1383
                %v1385 = vld [vmem:[%s1375 + $0x20] sm:$0xff]
                %1386 = vst [vmem:[%s1376 + $0x40] sm:$0xff] %v1385
                %v1387 = vld [vmem:[%s1375 + $0x28] sm:$0xff]
                %1388 = vst [vmem:[%s1376 + $0x50] sm:$0xff] %v1387
                %v1389 = vld [vmem:[%s1375 + $0x30] sm:$0xff]
                %1390 = vst [vmem:[%s1376 + $0x60] sm:$0xff] %v1389
                %v1391 = vld [vmem:[%s1375 + $0x38] sm:$0xff]
                %1392 = vst [vmem:[%s1376 + $0x70] sm:$0xff] %v1391
                %v1393 = vld [vmem:[%s1375 + $0x40] sm:$0xff]
                %1394 = vst [vmem:[%s1376 + $0x80] sm:$0xff] %v1393
                %v1395 = vld [vmem:[%s1375 + $0x48] sm:$0xff]
                %1396 = vst [vmem:[%s1376 + $0x90] sm:$0xff] %v1395
                %v1397 = vld [vmem:[%s1375 + $0x50] sm:$0xff]
                %1398 = vst [vmem:[%s1376 + $0xa0] sm:$0xff] %v1397
                %v1399 = vld [vmem:[%s1375 + $0x58] sm:$0xff]
                %1400 = vst [vmem:[%s1376 + $0xb0] sm:$0xff] %v1399
                %v1401 = vld [vmem:[%s1375 + $0x60] sm:$0xff]
                %1402 = vst [vmem:[%s1376 + $0xc0] sm:$0xff] %v1401
                %v1403 = vld [vmem:[%s1375 + $0x68] sm:$0xff]
                %1404 = vst [vmem:[%s1376 + $0xd0] sm:$0xff] %v1403
                %v1405 = vld [vmem:[%s1375 + $0x70] sm:$0xff]
                %1406 = vst [vmem:[%s1376 + $0xe0] sm:$0xff] %v1405
                %v1407 = vld [vmem:[%s1375 + $0x78] sm:$0xff]
                %1408 = vst [vmem:[%s1376 + $0xf0] sm:$0xff] %v1407
              $region110: #{full_transformer_forward.4} parent=104 // loop_footer
                %s1374 = sadd.s32 1, %s1370
              $region111: #{full_transformer_forward.4} parent=104 // loop_footer_branch
                %1369 = sbr.rel target = $region107
              $region112: #{full_transformer_forward.4} parent=104 // loop_exit
                _
            $region105: #{full_transformer_forward.4} parent=96 // pred_fallthru
              _
          $region97: #{full_transformer_forward.4} parent=92 // pred_fallthru
            _
          %1453 = vnop
        $region93: #{full_transformer_forward.4} parent=76 // pred_fallthru
          _
        // Predicated region
        $region128: #{full_transformer_forward.4} parent=76 // pred_check
          %p1454 = pneg %p196
        $region129: #{full_transformer_forward.4} parent=76 // pred_check_branch
          %1456 = sbr.rel (%p1454) target = $region131
        $region130: #{full_transformer_forward.4} parent=76 // pred_region
          _
        $region131: #{full_transformer_forward.4} parent=76 // pred_fallthru
          _
      $region77: #{full_transformer_forward.4} parent=5 // pred_fallthru
        _
      %p1457 = scmp.le.s32.totalorder 2, %s13
      // Predicated region
      $region132: #{full_transformer_forward.4} parent=5 // pred_check
        %p1458 = pneg %p1457
      $region133: #{full_transformer_forward.4} parent=5 // pred_check_branch
        %1460 = sbr.rel (%p1458) target = $region135
      $region134: #{full_transformer_forward.4} parent=5 // pred_region
        %s1461 = ssub.s32 %s13, 2
        // Predicated region
        $region136: #{full_transformer_forward.4} parent=134 // pred_check
          %p1462 = pneg %p176
        $region137: #{full_transformer_forward.4} parent=134 // pred_check_branch
          %1464 = sbr.rel (%p1462) target = $region139
        $region138: #{full_transformer_forward.4} parent=134 // pred_region
          %s1465 = sand.u32 %s161, 1
          %s1466 = sand.u32 %s161, 1
          %s1467 = smul.addr %s1466, 128
          %s1468 = scalar_lea.vmem [#allocation6], %s1467
        $region139: #{full_transformer_forward.4} parent=134 // pred_fallthru
          _
        // Predicated region
        $region140: #{full_transformer_forward.4} parent=134 // pred_check
          %p1469 = pneg %p202
        $region141: #{full_transformer_forward.4} parent=134 // pred_check_branch
          %1471 = sbr.rel (%p1469) target = $region143
        $region142: #{full_transformer_forward.4} parent=134 // pred_region
          %p1472 = scmp.lt.s32.totalorder %s24, 1
          %s1473 = scalar_select %p1472, %s24, 1
          %s1474 = smul.addr %s1473, 16
          %s1475 = smul.addr %s1474, 8
          %s1476 = scalar_lea.vmem %s6, %s1475
        $region143: #{full_transformer_forward.4} parent=134 // pred_fallthru
          _
      $region135: #{full_transformer_forward.4} parent=5 // pred_fallthru
        _
    $region6: #{full_transformer_forward.4} parent=1 // loop_footer
      %s17 = sadd.s32 1, %s13
    $region7: #{full_transformer_forward.4} parent=1 // loop_footer_branch
      %12 = sbr.rel target = $region3
    $region8: #{full_transformer_forward.4} parent=1 // loop_exit
      _

// kernel: full_transformer_forward.3
$region0: #{full_transformer_forward.3}
  #allocation0 [shape = 'u32[]', space=smem, size = 0x4, offset = 0x4, fixed_abs, tag = 'smem constant byte address 0x4 - core index']
  #allocation1 [shape = 'u32[144,128]{1,0:T(1,128)}', space=vmem, size = 0x12000, scoped, tag = 'internal scratch']
  #allocation2 [shape = 'f32[128,128]{1,0:T(8,128)}', space=vmem, size = 0x10000, scoped, tag = 'scratch operand']
  %s0 = inlined_call_operand.vmem [shape: f32[2,128,128], index: 0, kind: input, shape index: {}]
  %s1 = inlined_call_operand.vmem [shape: s8[2,128,128], index: 1, kind: input, shape index: {}]
  %s2 = inlined_call_operand.vmem [shape: f32[2,1,128], index: 2, kind: input, shape index: {}]
  %s3 = inlined_call_operand.vmem [shape: f32[2,1,128], index: 3, kind: input, shape index: {}]
  %s4 = inlined_call_operand.vmem [shape: bf16[2,128,384], index: 4, kind: input, shape index: {}]
  %s5 = inlined_call_operand.vmem [shape: f32[2,1,384], index: 5, kind: input, shape index: {}]
  %s6 = inlined_call_operand.vmem [shape: bf16[2,128,128], index: 6, kind: input, shape index: {}]
  %s7 = inlined_call_operand.vmem [shape: f32[2,1,128], index: 7, kind: input, shape index: {}]
  %s8 = inlined_call_operand.vmem [shape: f32[2,1,128], index: 8, kind: input, shape index: {}]
  %s9 = inlined_call_operand.vmem [shape: f32[2,1,128], index: 9, kind: input, shape index: {}]
  %s10 = inlined_call_operand.vmem [shape: bf16[2,128,512], index: 10, kind: input, shape index: {}]
  %s11 = inlined_call_operand.vmem [shape: f32[2,1,512], index: 11, kind: input, shape index: {}]
  %s12 = inlined_call_operand.vmem [shape: bf16[2,512,128], index: 12, kind: input, shape index: {}]
  %s13 = inlined_call_operand.vmem [shape: f32[2,1,128], index: 13, kind: input, shape index: {}]
  %s14 = inlined_call_operand.vmem [shape: f32[2,128,128], index: 14, kind: output, shape index: {}]
  %s15 = sld [smem:[#allocation0]]
  $region97: #{full_transformer_forward.3} parent=0
    _
  %s17 = ssub.s32 1, %s15
  %s18 = scalar_select 0, %s17, %s15
  loop: start=0, step=1, limit=6
  $region2: #{full_transformer_forward.3} parent=0 // loop_pre_header
    _
  $region3: #{full_transformer_forward.3} parent=0 // loop_header
    %s20 = sphi 0, %s24
    %p21 = scmp.ge.s32.totalorder %s20, 6
    %s27 = sphi 0, %s39
    %s28 = sphi 0, %s35
    %s29 = sphi 0, %s27
    %s30 = sphi 0, %s28
    %s31 = sphi 0, %s29
    %s32 = sphi 0, %s30
    %s42 = sphi 0, %s44
    %s45 = sphi 0, %s42
    %s46 = sphi 0, %s45
    %s62 = sphi 0, %s46
    %s68 = sphi 0, %s70
    %s71 = sphi 0, %s68
    %s72 = sphi 0, %s71
    %s88 = sphi 0, %s72
    %s94 = sphi 0, %s96
    %s97 = sphi 0, %s94
    %s98 = sphi 0, %s97
    %s114 = sphi 0, %s98
    %s120 = sphi 0, %s122
    %s123 = sphi 0, %s120
    %s124 = sphi 0, %s123
    %s140 = sphi 0, %s124
    %s146 = sphi 0, %s148
    %s149 = sphi 0, %s146
    %s150 = sphi 0, %s149
    %s166 = sphi 0, %s150
    %s172 = sphi 0, %s174
    %s175 = sphi 0, %s172
    %s176 = sphi 0, %s175
    %s192 = sphi 0, %s176
    %s198 = sphi 0, %s200
    %s201 = sphi 0, %s198
    %s202 = sphi 0, %s201
    %s218 = sphi 0, %s202
    %s224 = sphi 0, %s226
    %s227 = sphi 0, %s224
    %s228 = sphi 0, %s227
    %s244 = sphi 0, %s228
    %s250 = sphi 0, %s252
    %s253 = sphi 0, %s250
    %s254 = sphi 0, %s253
    %s270 = sphi 0, %s254
    %s276 = sphi 0, %s278
    %s279 = sphi 0, %s276
    %s280 = sphi 0, %s279
    %s296 = sphi 0, %s280
    %s302 = sphi 0, %s304
    %s305 = sphi 0, %s302
    %s306 = sphi 0, %s305
    %s322 = sphi 0, %s306
    %s328 = sphi 0, %s330
    %s331 = sphi 0, %s328
    %s332 = sphi 0, %s331
    %s348 = sphi 0, %s332
    %s354 = sphi 0, %s356
    %s357 = sphi 0, %s354
    %s358 = sphi 0, %s357
    %s374 = sphi 0, %s358
    %s380 = sphi 0, %s382
    %s383 = sphi 0, %s380
    %s384 = sphi 0, %s383
    %s400 = sphi 0, %s384
    %s406 = sphi 0, %s408
    %s409 = sphi 0, %s406
    %s410 = sphi 0, %s409
    %s426 = sphi 0, %s410
  $region4: #{full_transformer_forward.3} parent=0 // loop_header_branch
    %23 = sbr.rel (%p21) target = $region8
  $region5: #{full_transformer_forward.3} parent=0 // loop_body
    %s25 = ssub.s32 %s20, 1
    %s26 = ssub.s32 %s20, 2
    %s33 = sadd.s32 1, %s28
    %p34 = scmp.ge.s32.totalorder %s33, 2
    %s35 = scalar_select %p34, 0, %s33
    %s36 = sadd.s32 1, %s27
    %s37 = scalar_select %p34, %s36, %s27
    %p38 = scmp.ge.s32.totalorder %s37, 2
    %s39 = scalar_select %p38, 0, %s37
    %s40 = ssub.s32 %s27, %s39
    %p41 = scmp.eq.s32.totalorder %s40, 0
    %s43 = sadd.s32 %s42, 1
    %s44 = scalar_select %p41, %s42, %s43
    %p47 = pneg %p41
    %p48 = scmp.eq.s32.totalorder %s20, 3
    %p49 = por %p47, %p48
    %p50 = scmp.ne.s32.totalorder %s42, %s45
    %p51 = scmp.eq.s32.totalorder %s20, 0
    %p52 = por %p50, %p51
    %p53 = scmp.ne.s32.totalorder %s42, %s45
    %p54 = scmp.eq.s32.totalorder %s25, 3
    %p55 = por %p53, %p54
    %p56 = scmp.ne.s32.totalorder %s45, %s46
    %p57 = scmp.eq.s32.totalorder %s25, 0
    %p58 = por %p56, %p57
    %p59 = scmp.ne.s32.totalorder %s45, %s46
    %p60 = scmp.eq.s32.totalorder %s26, 3
    %p61 = por %p59, %p60
    %p63 = scmp.ne.s32.totalorder %s46, %s62
    %p64 = scmp.eq.s32.totalorder %s26, 0
    %p65 = por %p63, %p64
    %s66 = ssub.s32 %s27, %s39
    %p67 = scmp.eq.s32.totalorder %s66, 0
    %s69 = sadd.s32 %s68, 1
    %s70 = scalar_select %p67, %s68, %s69
    %p73 = pneg %p67
    %p74 = scmp.eq.s32.totalorder %s20, 3
    %p75 = por %p73, %p74
    %p76 = scmp.ne.s32.totalorder %s68, %s71
    %p77 = scmp.eq.s32.totalorder %s20, 0
    %p78 = por %p76, %p77
    %p79 = scmp.ne.s32.totalorder %s68, %s71
    %p80 = scmp.eq.s32.totalorder %s25, 3
    %p81 = por %p79, %p80
    %p82 = scmp.ne.s32.totalorder %s71, %s72
    %p83 = scmp.eq.s32.totalorder %s25, 0
    %p84 = por %p82, %p83
    %p85 = scmp.ne.s32.totalorder %s71, %s72
    %p86 = scmp.eq.s32.totalorder %s26, 3
    %p87 = por %p85, %p86
    %p89 = scmp.ne.s32.totalorder %s72, %s88
    %p90 = scmp.eq.s32.totalorder %s26, 0
    %p91 = por %p89, %p90
    %s92 = ssub.s32 %s28, %s35
    %p93 = scmp.eq.s32.totalorder %s92, 0
    %s95 = sadd.s32 %s94, 1
    %s96 = scalar_select %p93, %s94, %s95
    %p99 = pneg %p93
    %p100 = scmp.eq.s32.totalorder %s20, 3
    %p101 = por %p99, %p100
    %p102 = scmp.ne.s32.totalorder %s94, %s97
    %p103 = scmp.eq.s32.totalorder %s20, 0
    %p104 = por %p102, %p103
    %p105 = scmp.ne.s32.totalorder %s94, %s97
    %p106 = scmp.eq.s32.totalorder %s25, 3
    %p107 = por %p105, %p106
    %p108 = scmp.ne.s32.totalorder %s97, %s98
    %p109 = scmp.eq.s32.totalorder %s25, 0
    %p110 = por %p108, %p109
    %p111 = scmp.ne.s32.totalorder %s97, %s98
    %p112 = scmp.eq.s32.totalorder %s26, 3
    %p113 = por %p111, %p112
    %p115 = scmp.ne.s32.totalorder %s98, %s114
    %p116 = scmp.eq.s32.totalorder %s26, 0
    %p117 = por %p115, %p116
    %s118 = ssub.s32 %s28, %s35
    %p119 = scmp.eq.s32.totalorder %s118, 0
    %s121 = sadd.s32 %s120, 1
    %s122 = scalar_select %p119, %s120, %s121
    %p125 = pneg %p119
    %p126 = scmp.eq.s32.totalorder %s20, 3
    %p127 = por %p125, %p126
    %p128 = scmp.ne.s32.totalorder %s120, %s123
    %p129 = scmp.eq.s32.totalorder %s20, 0
    %p130 = por %p128, %p129
    %p131 = scmp.ne.s32.totalorder %s120, %s123
    %p132 = scmp.eq.s32.totalorder %s25, 3
    %p133 = por %p131, %p132
    %p134 = scmp.ne.s32.totalorder %s123, %s124
    %p135 = scmp.eq.s32.totalorder %s25, 0
    %p136 = por %p134, %p135
    %p137 = scmp.ne.s32.totalorder %s123, %s124
    %p138 = scmp.eq.s32.totalorder %s26, 3
    %p139 = por %p137, %p138
    %p141 = scmp.ne.s32.totalorder %s124, %s140
    %p142 = scmp.eq.s32.totalorder %s26, 0
    %p143 = por %p141, %p142
    %s144 = ssub.s32 %s28, %s35
    %p145 = scmp.eq.s32.totalorder %s144, 0
    %s147 = sadd.s32 %s146, 1
    %s148 = scalar_select %p145, %s146, %s147
    %p151 = pneg %p145
    %p152 = scmp.eq.s32.totalorder %s20, 3
    %p153 = por %p151, %p152
    %p154 = scmp.ne.s32.totalorder %s146, %s149
    %p155 = scmp.eq.s32.totalorder %s20, 0
    %p156 = por %p154, %p155
    %p157 = scmp.ne.s32.totalorder %s146, %s149
    %p158 = scmp.eq.s32.totalorder %s25, 3
    %p159 = por %p157, %p158
    %p160 = scmp.ne.s32.totalorder %s149, %s150
    %p161 = scmp.eq.s32.totalorder %s25, 0
    %p162 = por %p160, %p161
    %p163 = scmp.ne.s32.totalorder %s149, %s150
    %p164 = scmp.eq.s32.totalorder %s26, 3
    %p165 = por %p163, %p164
    %p167 = scmp.ne.s32.totalorder %s150, %s166
    %p168 = scmp.eq.s32.totalorder %s26, 0
    %p169 = por %p167, %p168
    %s170 = ssub.s32 %s28, %s35
    %p171 = scmp.eq.s32.totalorder %s170, 0
    %s173 = sadd.s32 %s172, 1
    %s174 = scalar_select %p171, %s172, %s173
    %p177 = pneg %p171
    %p178 = scmp.eq.s32.totalorder %s20, 3
    %p179 = por %p177, %p178
    %p180 = scmp.ne.s32.totalorder %s172, %s175
    %p181 = scmp.eq.s32.totalorder %s20, 0
    %p182 = por %p180, %p181
    %p183 = scmp.ne.s32.totalorder %s172, %s175
    %p184 = scmp.eq.s32.totalorder %s25, 3
    %p185 = por %p183, %p184
    %p186 = scmp.ne.s32.totalorder %s175, %s176
    %p187 = scmp.eq.s32.totalorder %s25, 0
    %p188 = por %p186, %p187
    %p189 = scmp.ne.s32.totalorder %s175, %s176
    %p190 = scmp.eq.s32.totalorder %s26, 3
    %p191 = por %p189, %p190
    %p193 = scmp.ne.s32.totalorder %s176, %s192
    %p194 = scmp.eq.s32.totalorder %s26, 0
    %p195 = por %p193, %p194
    %s196 = ssub.s32 %s28, %s35
    %p197 = scmp.eq.s32.totalorder %s196, 0
    %s199 = sadd.s32 %s198, 1
    %s200 = scalar_select %p197, %s198, %s199
    %p203 = pneg %p197
    %p204 = scmp.eq.s32.totalorder %s20, 3
    %p205 = por %p203, %p204
    %p206 = scmp.ne.s32.totalorder %s198, %s201
    %p207 = scmp.eq.s32.totalorder %s20, 0
    %p208 = por %p206, %p207
    %p209 = scmp.ne.s32.totalorder %s198, %s201
    %p210 = scmp.eq.s32.totalorder %s25, 3
    %p211 = por %p209, %p210
    %p212 = scmp.ne.s32.totalorder %s201, %s202
    %p213 = scmp.eq.s32.totalorder %s25, 0
    %p214 = por %p212, %p213
    %p215 = scmp.ne.s32.totalorder %s201, %s202
    %p216 = scmp.eq.s32.totalorder %s26, 3
    %p217 = por %p215, %p216
    %p219 = scmp.ne.s32.totalorder %s202, %s218
    %p220 = scmp.eq.s32.totalorder %s26, 0
    %p221 = por %p219, %p220
    %s222 = ssub.s32 %s28, %s35
    %p223 = scmp.eq.s32.totalorder %s222, 0
    %s225 = sadd.s32 %s224, 1
    %s226 = scalar_select %p223, %s224, %s225
    %p229 = pneg %p223
    %p230 = scmp.eq.s32.totalorder %s20, 3
    %p231 = por %p229, %p230
    %p232 = scmp.ne.s32.totalorder %s224, %s227
    %p233 = scmp.eq.s32.totalorder %s20, 0
    %p234 = por %p232, %p233
    %p235 = scmp.ne.s32.totalorder %s224, %s227
    %p236 = scmp.eq.s32.totalorder %s25, 3
    %p237 = por %p235, %p236
    %p238 = scmp.ne.s32.totalorder %s227, %s228
    %p239 = scmp.eq.s32.totalorder %s25, 0
    %p240 = por %p238, %p239
    %p241 = scmp.ne.s32.totalorder %s227, %s228
    %p242 = scmp.eq.s32.totalorder %s26, 3
    %p243 = por %p241, %p242
    %p245 = scmp.ne.s32.totalorder %s228, %s244
    %p246 = scmp.eq.s32.totalorder %s26, 0
    %p247 = por %p245, %p246
    %s248 = ssub.s32 %s28, %s35
    %p249 = scmp.eq.s32.totalorder %s248, 0
    %s251 = sadd.s32 %s250, 1
    %s252 = scalar_select %p249, %s250, %s251
    %p255 = pneg %p249
    %p256 = scmp.eq.s32.totalorder %s20, 3
    %p257 = por %p255, %p256
    %p258 = scmp.ne.s32.totalorder %s250, %s253
    %p259 = scmp.eq.s32.totalorder %s20, 0
    %p260 = por %p258, %p259
    %p261 = scmp.ne.s32.totalorder %s250, %s253
    %p262 = scmp.eq.s32.totalorder %s25, 3
    %p263 = por %p261, %p262
    %p264 = scmp.ne.s32.totalorder %s253, %s254
    %p265 = scmp.eq.s32.totalorder %s25, 0
    %p266 = por %p264, %p265
    %p267 = scmp.ne.s32.totalorder %s253, %s254
    %p268 = scmp.eq.s32.totalorder %s26, 3
    %p269 = por %p267, %p268
    %p271 = scmp.ne.s32.totalorder %s254, %s270
    %p272 = scmp.eq.s32.totalorder %s26, 0
    %p273 = por %p271, %p272
    %s274 = ssub.s32 %s28, %s35
    %p275 = scmp.eq.s32.totalorder %s274, 0
    %s277 = sadd.s32 %s276, 1
    %s278 = scalar_select %p275, %s276, %s277
    %p281 = pneg %p275
    %p282 = scmp.eq.s32.totalorder %s20, 3
    %p283 = por %p281, %p282
    %p284 = scmp.ne.s32.totalorder %s276, %s279
    %p285 = scmp.eq.s32.totalorder %s20, 0
    %p286 = por %p284, %p285
    %p287 = scmp.ne.s32.totalorder %s276, %s279
    %p288 = scmp.eq.s32.totalorder %s25, 3
    %p289 = por %p287, %p288
    %p290 = scmp.ne.s32.totalorder %s279, %s280
    %p291 = scmp.eq.s32.totalorder %s25, 0
    %p292 = por %p290, %p291
    %p293 = scmp.ne.s32.totalorder %s279, %s280
    %p294 = scmp.eq.s32.totalorder %s26, 3
    %p295 = por %p293, %p294
    %p297 = scmp.ne.s32.totalorder %s280, %s296
    %p298 = scmp.eq.s32.totalorder %s26, 0
    %p299 = por %p297, %p298
    %s300 = ssub.s32 %s28, %s35
    %p301 = scmp.eq.s32.totalorder %s300, 0
    %s303 = sadd.s32 %s302, 1
    %s304 = scalar_select %p301, %s302, %s303
    %p307 = pneg %p301
    %p308 = scmp.eq.s32.totalorder %s20, 3
    %p309 = por %p307, %p308
    %p310 = scmp.ne.s32.totalorder %s302, %s305
    %p311 = scmp.eq.s32.totalorder %s20, 0
    %p312 = por %p310, %p311
    %p313 = scmp.ne.s32.totalorder %s302, %s305
    %p314 = scmp.eq.s32.totalorder %s25, 3
    %p315 = por %p313, %p314
    %p316 = scmp.ne.s32.totalorder %s305, %s306
    %p317 = scmp.eq.s32.totalorder %s25, 0
    %p318 = por %p316, %p317
    %p319 = scmp.ne.s32.totalorder %s305, %s306
    %p320 = scmp.eq.s32.totalorder %s26, 3
    %p321 = por %p319, %p320
    %p323 = scmp.ne.s32.totalorder %s306, %s322
    %p324 = scmp.eq.s32.totalorder %s26, 0
    %p325 = por %p323, %p324
    %s326 = ssub.s32 %s28, %s35
    %p327 = scmp.eq.s32.totalorder %s326, 0
    %s329 = sadd.s32 %s328, 1
    %s330 = scalar_select %p327, %s328, %s329
    %p333 = pneg %p327
    %p334 = scmp.eq.s32.totalorder %s20, 3
    %p335 = por %p333, %p334
    %p336 = scmp.ne.s32.totalorder %s328, %s331
    %p337 = scmp.eq.s32.totalorder %s20, 0
    %p338 = por %p336, %p337
    %p339 = scmp.ne.s32.totalorder %s328, %s331
    %p340 = scmp.eq.s32.totalorder %s25, 3
    %p341 = por %p339, %p340
    %p342 = scmp.ne.s32.totalorder %s331, %s332
    %p343 = scmp.eq.s32.totalorder %s25, 0
    %p344 = por %p342, %p343
    %p345 = scmp.ne.s32.totalorder %s331, %s332
    %p346 = scmp.eq.s32.totalorder %s26, 3
    %p347 = por %p345, %p346
    %p349 = scmp.ne.s32.totalorder %s332, %s348
    %p350 = scmp.eq.s32.totalorder %s26, 0
    %p351 = por %p349, %p350
    %s352 = ssub.s32 %s28, %s35
    %p353 = scmp.eq.s32.totalorder %s352, 0
    %s355 = sadd.s32 %s354, 1
    %s356 = scalar_select %p353, %s354, %s355
    %p359 = pneg %p353
    %p360 = scmp.eq.s32.totalorder %s20, 3
    %p361 = por %p359, %p360
    %p362 = scmp.ne.s32.totalorder %s354, %s357
    %p363 = scmp.eq.s32.totalorder %s20, 0
    %p364 = por %p362, %p363
    %p365 = scmp.ne.s32.totalorder %s354, %s357
    %p366 = scmp.eq.s32.totalorder %s25, 3
    %p367 = por %p365, %p366
    %p368 = scmp.ne.s32.totalorder %s357, %s358
    %p369 = scmp.eq.s32.totalorder %s25, 0
    %p370 = por %p368, %p369
    %p371 = scmp.ne.s32.totalorder %s357, %s358
    %p372 = scmp.eq.s32.totalorder %s26, 3
    %p373 = por %p371, %p372
    %p375 = scmp.ne.s32.totalorder %s358, %s374
    %p376 = scmp.eq.s32.totalorder %s26, 0
    %p377 = por %p375, %p376
    %s378 = ssub.s32 %s28, %s35
    %p379 = scmp.eq.s32.totalorder %s378, 0
    %s381 = sadd.s32 %s380, 1
    %s382 = scalar_select %p379, %s380, %s381
    %p385 = pneg %p379
    %p386 = scmp.eq.s32.totalorder %s20, 3
    %p387 = por %p385, %p386
    %p388 = scmp.ne.s32.totalorder %s380, %s383
    %p389 = scmp.eq.s32.totalorder %s20, 0
    %p390 = por %p388, %p389
    %p391 = scmp.ne.s32.totalorder %s380, %s383
    %p392 = scmp.eq.s32.totalorder %s25, 3
    %p393 = por %p391, %p392
    %p394 = scmp.ne.s32.totalorder %s383, %s384
    %p395 = scmp.eq.s32.totalorder %s25, 0
    %p396 = por %p394, %p395
    %p397 = scmp.ne.s32.totalorder %s383, %s384
    %p398 = scmp.eq.s32.totalorder %s26, 3
    %p399 = por %p397, %p398
    %p401 = scmp.ne.s32.totalorder %s384, %s400
    %p402 = scmp.eq.s32.totalorder %s26, 0
    %p403 = por %p401, %p402
    %s404 = ssub.s32 %s27, %s39
    %p405 = scmp.eq.s32.totalorder %s404, 0
    %s407 = sadd.s32 %s406, 1
    %s408 = scalar_select %p405, %s406, %s407
    %p411 = pneg %p405
    %p412 = scmp.eq.s32.totalorder %s20, 3
    %p413 = por %p411, %p412
    %p414 = scmp.ne.s32.totalorder %s406, %s409
    %p415 = scmp.eq.s32.totalorder %s20, 0
    %p416 = por %p414, %p415
    %p417 = scmp.ne.s32.totalorder %s406, %s409
    %p418 = scmp.eq.s32.totalorder %s25, 3
    %p419 = por %p417, %p418
    %p420 = scmp.ne.s32.totalorder %s409, %s410
    %p421 = scmp.eq.s32.totalorder %s25, 0
    %p422 = por %p420, %p421
    %p423 = scmp.ne.s32.totalorder %s409, %s410
    %p424 = scmp.eq.s32.totalorder %s26, 3
    %p425 = por %p423, %p424
    %p427 = scmp.ne.s32.totalorder %s410, %s426
    %p428 = scmp.eq.s32.totalorder %s26, 0
    %p429 = por %p427, %p428
    %p430 = scmp.le.s32.totalorder 1, %s20
    %p431 = scmp.lt.s32.totalorder %s20, 5
    %p432 = pnand %p430, %p431
    %p433 = pneg %p432
    // Predicated region
    $region9: #{full_transformer_forward.3} parent=5 // pred_check
      _
    $region10: #{full_transformer_forward.3} parent=5 // pred_check_branch
      %435 = sbr.rel (%p432) target = $region12
    $region11: #{full_transformer_forward.3} parent=5 // pred_region
      %s436 = ssub.s32 %s20, 1
    $region12: #{full_transformer_forward.3} parent=5 // pred_fallthru
      _
    %p437 = scmp.lt.s32.totalorder %s20, 4
    // Predicated region
    $region13: #{full_transformer_forward.3} parent=5 // pred_check
      %p438 = pneg %p437
    $region14: #{full_transformer_forward.3} parent=5 // pred_check_branch
      %440 = sbr.rel (%p438) target = $region16
    $region15: #{full_transformer_forward.3} parent=5 // pred_region
      // Predicated region
      $region17: #{full_transformer_forward.3} parent=15 // pred_check
        %p441 = pneg %p52
      $region18: #{full_transformer_forward.3} parent=15 // pred_check_branch
        %443 = sbr.rel (%p441) target = $region20
      $region19: #{full_transformer_forward.3} parent=15 // pred_region
        %p444 = scmp.lt.s32.totalorder %s27, 1
        %s445 = scalar_select %p444, %s27, 1
        %s446 = smul.addr %s445, 16
        %s447 = smul.addr %s446, 8
        %s448 = scalar_lea.vmem %s0, %s447
      $region20: #{full_transformer_forward.3} parent=15 // pred_fallthru
        _
      // Predicated region
      $region21: #{full_transformer_forward.3} parent=15 // pred_check
        %p449 = pneg %p78
      $region22: #{full_transformer_forward.3} parent=15 // pred_check_branch
        %451 = sbr.rel (%p449) target = $region24
      $region23: #{full_transformer_forward.3} parent=15 // pred_region
        %p452 = scmp.lt.s32.totalorder %s27, 1
        %s453 = scalar_select %p452, %s27, 1
        %s454 = smul.addr %s453, 4
        %s455 = smul.addr %s454, 8
        %s456 = scalar_lea.vmem %s1, %s455
      $region24: #{full_transformer_forward.3} parent=15 // pred_fallthru
        _
      // Predicated region
      $region25: #{full_transformer_forward.3} parent=15 // pred_check
        %p457 = pneg %p104
      $region26: #{full_transformer_forward.3} parent=15 // pred_check_branch
        %459 = sbr.rel (%p457) target = $region28
      $region27: #{full_transformer_forward.3} parent=15 // pred_region
        %p460 = scmp.lt.s32.totalorder %s28, 1
        %s461 = scalar_select %p460, %s28, 1
        %s462 = scalar_lea.vmem %s2, %s461
      $region28: #{full_transformer_forward.3} parent=15 // pred_fallthru
        _
      // Predicated region
      $region29: #{full_transformer_forward.3} parent=15 // pred_check
        %p463 = pneg %p130
      $region30: #{full_transformer_forward.3} parent=15 // pred_check_branch
        %465 = sbr.rel (%p463) target = $region32
      $region31: #{full_transformer_forward.3} parent=15 // pred_region
        %p466 = scmp.lt.s32.totalorder %s28, 1
        %s467 = scalar_select %p466, %s28, 1
        %s468 = scalar_lea.vmem %s3, %s467
      $region32: #{full_transformer_forward.3} parent=15 // pred_fallthru
        _
      // Predicated region
      $region33: #{full_transformer_forward.3} parent=15 // pred_check
        %p469 = pneg %p156
      $region34: #{full_transformer_forward.3} parent=15 // pred_check_branch
        %471 = sbr.rel (%p469) target = $region36
      $region35: #{full_transformer_forward.3} parent=15 // pred_region
        %p472 = scmp.lt.s32.totalorder %s28, 1
        %s473 = scalar_select %p472, %s28, 1
        %s474 = smul.addr %s473, 48
        %s475 = smul.addr %s474, 4
        %s476 = scalar_lea.vmem %s4, %s475
      $region36: #{full_transformer_forward.3} parent=15 // pred_fallthru
        _
      // Predicated region
      $region37: #{full_transformer_forward.3} parent=15 // pred_check
        %p477 = pneg %p182
      $region38: #{full_transformer_forward.3} parent=15 // pred_check_branch
        %479 = sbr.rel (%p477) target = $region40
      $region39: #{full_transformer_forward.3} parent=15 // pred_region
        %p480 = scmp.lt.s32.totalorder %s28, 1
        %s481 = scalar_select %p480, %s28, 1
        %s482 = smul.addr %s481, 3
        %s483 = scalar_lea.vmem %s5, %s482
      $region40: #{full_transformer_forward.3} parent=15 // pred_fallthru
        _
      // Predicated region
      $region41: #{full_transformer_forward.3} parent=15 // pred_check
        %p484 = pneg %p208
      $region42: #{full_transformer_forward.3} parent=15 // pred_check_branch
        %486 = sbr.rel (%p484) target = $region44
      $region43: #{full_transformer_forward.3} parent=15 // pred_region
        %p487 = scmp.lt.s32.totalorder %s28, 1
        %s488 = scalar_select %p487, %s28, 1
        %s489 = smul.addr %s488, 16
        %s490 = smul.addr %s489, 4
        %s491 = scalar_lea.vmem %s6, %s490
      $region44: #{full_transformer_forward.3} parent=15 // pred_fallthru
        _
      // Predicated region
      $region45: #{full_transformer_forward.3} parent=15 // pred_check
        %p492 = pneg %p234
      $region46: #{full_transformer_forward.3} parent=15 // pred_check_branch
        %494 = sbr.rel (%p492) target = $region48
      $region47: #{full_transformer_forward.3} parent=15 // pred_region
        %p495 = scmp.lt.s32.totalorder %s28, 1
        %s496 = scalar_select %p495, %s28, 1
        %s497 = scalar_lea.vmem %s7, %s496
      $region48: #{full_transformer_forward.3} parent=15 // pred_fallthru
        _
      // Predicated region
      $region49: #{full_transformer_forward.3} parent=15 // pred_check
        %p498 = pneg %p260
      $region50: #{full_transformer_forward.3} parent=15 // pred_check_branch
        %500 = sbr.rel (%p498) target = $region52
      $region51: #{full_transformer_forward.3} parent=15 // pred_region
        %p501 = scmp.lt.s32.totalorder %s28, 1
        %s502 = scalar_select %p501, %s28, 1
        %s503 = scalar_lea.vmem %s8, %s502
      $region52: #{full_transformer_forward.3} parent=15 // pred_fallthru
        _
      // Predicated region
      $region53: #{full_transformer_forward.3} parent=15 // pred_check
        %p504 = pneg %p286
      $region54: #{full_transformer_forward.3} parent=15 // pred_check_branch
        %506 = sbr.rel (%p504) target = $region56
      $region55: #{full_transformer_forward.3} parent=15 // pred_region
        %p507 = scmp.lt.s32.totalorder %s28, 1
        %s508 = scalar_select %p507, %s28, 1
        %s509 = scalar_lea.vmem %s9, %s508
      $region56: #{full_transformer_forward.3} parent=15 // pred_fallthru
        _
      // Predicated region
      $region57: #{full_transformer_forward.3} parent=15 // pred_check
        %p510 = pneg %p312
      $region58: #{full_transformer_forward.3} parent=15 // pred_check_branch
        %512 = sbr.rel (%p510) target = $region60
      $region59: #{full_transformer_forward.3} parent=15 // pred_region
        %p513 = scmp.lt.s32.totalorder %s28, 1
        %s514 = scalar_select %p513, %s28, 1
        %s515 = smul.addr %s514, 64
        %s516 = smul.addr %s515, 4
        %s517 = scalar_lea.vmem %s10, %s516
      $region60: #{full_transformer_forward.3} parent=15 // pred_fallthru
        _
      // Predicated region
      $region61: #{full_transformer_forward.3} parent=15 // pred_check
        %p518 = pneg %p338
      $region62: #{full_transformer_forward.3} parent=15 // pred_check_branch
        %520 = sbr.rel (%p518) target = $region64
      $region63: #{full_transformer_forward.3} parent=15 // pred_region
        %p521 = scmp.lt.s32.totalorder %s28, 1
        %s522 = scalar_select %p521, %s28, 1
        %s523 = smul.addr %s522, 4
        %s524 = scalar_lea.vmem %s11, %s523
      $region64: #{full_transformer_forward.3} parent=15 // pred_fallthru
        _
      // Predicated region
      $region65: #{full_transformer_forward.3} parent=15 // pred_check
        %p525 = pneg %p364
      $region66: #{full_transformer_forward.3} parent=15 // pred_check_branch
        %527 = sbr.rel (%p525) target = $region68
      $region67: #{full_transformer_forward.3} parent=15 // pred_region
        %p528 = scmp.lt.s32.totalorder %s28, 1
        %s529 = scalar_select %p528, %s28, 1
        %s530 = smul.addr %s529, 64
        %s531 = smul.addr %s530, 4
        %s532 = scalar_lea.vmem %s12, %s531
      $region68: #{full_transformer_forward.3} parent=15 // pred_fallthru
        _
      // Predicated region
      $region69: #{full_transformer_forward.3} parent=15 // pred_check
        %p533 = pneg %p390
      $region70: #{full_transformer_forward.3} parent=15 // pred_check_branch
        %535 = sbr.rel (%p533) target = $region72
      $region71: #{full_transformer_forward.3} parent=15 // pred_region
        %p536 = scmp.lt.s32.totalorder %s28, 1
        %s537 = scalar_select %p536, %s28, 1
        %s538 = scalar_lea.vmem %s13, %s537
      $region72: #{full_transformer_forward.3} parent=15 // pred_fallthru
        _
    $region16: #{full_transformer_forward.3} parent=5 // pred_fallthru
      _
    %p539 = scmp.le.s32.totalorder 1, %s20
    %p540 = scmp.lt.s32.totalorder %s20, 5
    %p541 = pnand %p539, %p540
    %p542 = pneg %p541
    // Predicated region
    $region73: #{full_transformer_forward.3} parent=5 // pred_check
      _
    $region74: #{full_transformer_forward.3} parent=5 // pred_check_branch
      %544 = sbr.rel (%p541) target = $region76
    $region75: #{full_transformer_forward.3} parent=5 // pred_region
      %s545 = ssub.s32 %s20, 1
      %p546 = scmp.lt.s32.totalorder %s29, 1
      %s547 = scalar_select %p546, %s29, 1
      %s548 = smul.addr %s547, 16
      %s549 = smul.addr %s548, 8
      %s550 = scalar_lea.vmem %s0, %s549
      %p551 = pneg %p58
      %p552 = pneg %p55
      %p553 = scmp.lt.s32.totalorder %s29, 1
      %s554 = scalar_select %p553, %s29, 1
      %s555 = smul.addr %s554, 4
      %s556 = smul.addr %s555, 8
      %s557 = scalar_lea.vmem %s1, %s556
      %p558 = pneg %p84
      %p559 = pneg %p81
      %p560 = scmp.lt.s32.totalorder %s30, 1
      %s561 = scalar_select %p560, %s30, 1
      %s562 = scalar_lea.vmem %s2, %s561
      %p563 = pneg %p110
      %p564 = pneg %p107
      %p565 = scmp.lt.s32.totalorder %s30, 1
      %s566 = scalar_select %p565, %s30, 1
      %s567 = scalar_lea.vmem %s3, %s566
      %p568 = pneg %p136
      %p569 = pneg %p133
      %p570 = scmp.lt.s32.totalorder %s30, 1
      %s571 = scalar_select %p570, %s30, 1
      %s572 = smul.addr %s571, 48
      %s573 = smul.addr %s572, 4
      %s574 = scalar_lea.vmem %s4, %s573
      %p575 = pneg %p162
      %p576 = pneg %p159
      %p577 = scmp.lt.s32.totalorder %s30, 1
      %s578 = scalar_select %p577, %s30, 1
      %s579 = smul.addr %s578, 3
      %s580 = scalar_lea.vmem %s5, %s579
      %p581 = pneg %p188
      %p582 = pneg %p185
      %p583 = scmp.lt.s32.totalorder %s30, 1
      %s584 = scalar_select %p583, %s30, 1
      %s585 = smul.addr %s584, 16
      %s586 = smul.addr %s585, 4
      %s587 = scalar_lea.vmem %s6, %s586
      %p588 = pneg %p214
      %p589 = pneg %p211
      %p590 = scmp.lt.s32.totalorder %s30, 1
      %s591 = scalar_select %p590, %s30, 1
      %s592 = scalar_lea.vmem %s7, %s591
      %p593 = pneg %p240
      %p594 = pneg %p237
      %p595 = scmp.lt.s32.totalorder %s30, 1
      %s596 = scalar_select %p595, %s30, 1
      %s597 = scalar_lea.vmem %s8, %s596
      %p598 = pneg %p266
      %p599 = pneg %p263
      %p600 = scmp.lt.s32.totalorder %s30, 1
      %s601 = scalar_select %p600, %s30, 1
      %s602 = scalar_lea.vmem %s9, %s601
      %p603 = pneg %p292
      %p604 = pneg %p289
      %p605 = scmp.lt.s32.totalorder %s30, 1
      %s606 = scalar_select %p605, %s30, 1
      %s607 = smul.addr %s606, 64
      %s608 = smul.addr %s607, 4
      %s609 = scalar_lea.vmem %s10, %s608
      %p610 = pneg %p318
      %p611 = pneg %p315
      %p612 = scmp.lt.s32.totalorder %s30, 1
      %s613 = scalar_select %p612, %s30, 1
      %s614 = smul.addr %s613, 4
      %s615 = scalar_lea.vmem %s11, %s614
      %p616 = pneg %p344
      %p617 = pneg %p341
      %p618 = scmp.lt.s32.totalorder %s30, 1
      %s619 = scalar_select %p618, %s30, 1
      %s620 = smul.addr %s619, 64
      %s621 = smul.addr %s620, 4
      %s622 = scalar_lea.vmem %s12, %s621
      %p623 = pneg %p370
      %p624 = pneg %p367
      %p625 = scmp.lt.s32.totalorder %s30, 1
      %s626 = scalar_select %p625, %s30, 1
      %s627 = scalar_lea.vmem %s13, %s626
      %p628 = pneg %p396
      %p629 = pneg %p393
      %p630 = pneg %p422
      %p631 = pneg %p419
      %p632 = scmp.lt.s32.totalorder %s29, 1
      %s633 = scalar_select %p632, %s29, 1
      %s634 = smul.addr %s633, 16
      %s635 = smul.addr %s634, 8
      %s636 = scalar_lea.vmem %s14, %s635
      %p637 = scmp.lt.s32.totalorder %s29, 1
      %s638 = scalar_select %p637, %s29, 1
      %s639 = smul.addr %s638, 16
      %s640 = smul.addr %s639, 8
      %s641 = scalar_lea.vmem %s0, %s640
      %p642 = scmp.lt.s32.totalorder %s29, 1
      %s643 = scalar_select %p642, %s29, 1
      %s644 = smul.addr %s643, 4
      %s645 = smul.addr %s644, 8
      %s646 = scalar_lea.vmem %s1, %s645
      %p647 = scmp.lt.s32.totalorder %s30, 1
      %s648 = scalar_select %p647, %s30, 1
      %s649 = scalar_lea.vmem %s2, %s648
      %p650 = scmp.lt.s32.totalorder %s30, 1
      %s651 = scalar_select %p650, %s30, 1
      %s652 = scalar_lea.vmem %s3, %s651
      %p653 = scmp.lt.s32.totalorder %s30, 1
      %s654 = scalar_select %p653, %s30, 1
      %s655 = smul.addr %s654, 48
      %s656 = smul.addr %s655, 4
      %s657 = scalar_lea.vmem %s4, %s656
      %p658 = scmp.lt.s32.totalorder %s30, 1
      %s659 = scalar_select %p658, %s30, 1
      %s660 = smul.addr %s659, 3
      %s661 = scalar_lea.vmem %s5, %s660
      %p662 = scmp.lt.s32.totalorder %s30, 1
      %s663 = scalar_select %p662, %s30, 1
      %s664 = smul.addr %s663, 16
      %s665 = smul.addr %s664, 4
      %s666 = scalar_lea.vmem %s6, %s665
      %p667 = scmp.lt.s32.totalorder %s30, 1
      %s668 = scalar_select %p667, %s30, 1
      %s669 = scalar_lea.vmem %s7, %s668
      %p670 = scmp.lt.s32.totalorder %s30, 1
      %s671 = scalar_select %p670, %s30, 1
      %s672 = scalar_lea.vmem %s8, %s671
      %p673 = scmp.lt.s32.totalorder %s30, 1
      %s674 = scalar_select %p673, %s30, 1
      %s675 = scalar_lea.vmem %s9, %s674
      %p676 = scmp.lt.s32.totalorder %s30, 1
      %s677 = scalar_select %p676, %s30, 1
      %s678 = smul.addr %s677, 64
      %s679 = smul.addr %s678, 4
      %s680 = scalar_lea.vmem %s10, %s679
      %p681 = scmp.lt.s32.totalorder %s30, 1
      %s682 = scalar_select %p681, %s30, 1
      %s683 = smul.addr %s682, 4
      %s684 = scalar_lea.vmem %s11, %s683
      %p685 = scmp.lt.s32.totalorder %s30, 1
      %s686 = scalar_select %p685, %s30, 1
      %s687 = smul.addr %s686, 64
      %s688 = smul.addr %s687, 4
      %s689 = scalar_lea.vmem %s12, %s688
      %p690 = scmp.lt.s32.totalorder %s30, 1
      %s691 = scalar_select %p690, %s30, 1
      %s692 = scalar_lea.vmem %s13, %s691
      %p693 = scmp.lt.s32.totalorder %s29, 1
      %s694 = scalar_select %p693, %s29, 1
      %s695 = smul.addr %s694, 16
      %s696 = smul.addr %s695, 8
      %s697 = scalar_lea.vmem %s14, %s696
      %p701 = scmp.eq.s32.totalorder %s30, 0
      // Predicated region
      $region77: #{full_transformer_forward.3} parent=75 // pred_check
        %p702 = pneg %p701
      $region78: #{full_transformer_forward.3} parent=75 // pred_check_branch
        %704 = sbr.rel (%p702) target = $region80
      $region79: #{full_transformer_forward.3} parent=75 // pred_region
        %v705 = vld [vmem:[%s641] sm:$0xff]
        %v706 = vld [vmem:[%s641 + $0x8] sm:$0xff]
        %v707 = vld [vmem:[%s641 + $0x10] sm:$0xff]
        %v708 = vld [vmem:[%s641 + $0x18] sm:$0xff]
        %v709 = vld [vmem:[%s641 + $0x20] sm:$0xff]
        %v710 = vld [vmem:[%s641 + $0x28] sm:$0xff]
        %v711 = vld [vmem:[%s641 + $0x30] sm:$0xff]
        %v712 = vld [vmem:[%s641 + $0x38] sm:$0xff]
        %v713 = vld [vmem:[%s641 + $0x40] sm:$0xff]
        %v714 = vld [vmem:[%s641 + $0x48] sm:$0xff]
        %v715 = vld [vmem:[%s641 + $0x50] sm:$0xff]
        %v716 = vld [vmem:[%s641 + $0x58] sm:$0xff]
        %v717 = vld [vmem:[%s641 + $0x60] sm:$0xff]
        %v718 = vld [vmem:[%s641 + $0x68] sm:$0xff]
        %v719 = vld [vmem:[%s641 + $0x70] sm:$0xff]
        %v720 = vld [vmem:[%s641 + $0x78] sm:$0xff]
        %721 = vst [vmem:[#allocation2] sm:$0xff] %v705
        %722 = vst [vmem:[#allocation2 + $0x8] sm:$0xff] %v706
        %723 = vst [vmem:[#allocation2 + $0x10] sm:$0xff] %v707
        %724 = vst [vmem:[#allocation2 + $0x18] sm:$0xff] %v708
        %725 = vst [vmem:[#allocation2 + $0x20] sm:$0xff] %v709
        %726 = vst [vmem:[#allocation2 + $0x28] sm:$0xff] %v710
        %727 = vst [vmem:[#allocation2 + $0x30] sm:$0xff] %v711
        %728 = vst [vmem:[#allocation2 + $0x38] sm:$0xff] %v712
        %729 = vst [vmem:[#allocation2 + $0x40] sm:$0xff] %v713
        %730 = vst [vmem:[#allocation2 + $0x48] sm:$0xff] %v714
        %731 = vst [vmem:[#allocation2 + $0x50] sm:$0xff] %v715
        %732 = vst [vmem:[#allocation2 + $0x58] sm:$0xff] %v716
        %733 = vst [vmem:[#allocation2 + $0x60] sm:$0xff] %v717
        %734 = vst [vmem:[#allocation2 + $0x68] sm:$0xff] %v718
        %735 = vst [vmem:[#allocation2 + $0x70] sm:$0xff] %v719
        %736 = vst [vmem:[#allocation2 + $0x78] sm:$0xff] %v720
      $region80: #{full_transformer_forward.3} parent=75 // pred_fallthru
        _
      %v737 = vld [vmem:[#allocation2] sm:$0xff]
      %v738 = vld [vmem:[#allocation2 + $0x8] sm:$0xff]
      %v739 = vld [vmem:[#allocation2 + $0x10] sm:$0xff]
      %v740 = vld [vmem:[#allocation2 + $0x18] sm:$0xff]
      %v741 = vld [vmem:[#allocation2 + $0x20] sm:$0xff]
      %v742 = vld [vmem:[#allocation2 + $0x28] sm:$0xff]
      %v743 = vld [vmem:[#allocation2 + $0x30] sm:$0xff]
      %v744 = vld [vmem:[#allocation2 + $0x38] sm:$0xff]
      %v745 = vld [vmem:[#allocation2 + $0x40] sm:$0xff]
      %v746 = vld [vmem:[#allocation2 + $0x48] sm:$0xff]
      %v747 = vld [vmem:[#allocation2 + $0x50] sm:$0xff]
      %v748 = vld [vmem:[#allocation2 + $0x58] sm:$0xff]
      %v749 = vld [vmem:[#allocation2 + $0x60] sm:$0xff]
      %v750 = vld [vmem:[#allocation2 + $0x68] sm:$0xff]
      %v751 = vld [vmem:[#allocation2 + $0x70] sm:$0xff]
      %v752 = vld [vmem:[#allocation2 + $0x78] sm:$0xff]
      %v753 = vld [vmem:[%s646] sm:$0xff]
      %v754 = vld [vmem:[%s646 + $0x8] sm:$0xff]
      %v755 = vld [vmem:[%s646 + $0x10] sm:$0xff]
      %v756 = vld [vmem:[%s646 + $0x18] sm:$0xff]
      %v757 = vld [vmem:[%s649] sm:$0x1]
      %v758 = vld [vmem:[%s652] sm:$0x1]
      %759 = vadd.xlane.f32.xlu0 %v737
      %v760 = vpop.xlane.xlu0 %759
      %761 = vadd.xlane.f32.xlu0 %v738
      %v762 = vpop.xlane.xlu0 %761
      %763 = vadd.xlane.f32.xlu0 %v739
      %v764 = vpop.xlane.xlu0 %763
      %765 = vadd.xlane.f32.xlu0 %v740
      %v766 = vpop.xlane.xlu0 %765
      %767 = vadd.xlane.f32.xlu0 %v741
      %v768 = vpop.xlane.xlu0 %767
      %769 = vadd.xlane.f32.xlu0 %v742
      %v770 = vpop.xlane.xlu0 %769
      %771 = vadd.xlane.f32.xlu0 %v743
      %v772 = vpop.xlane.xlu0 %771
      %773 = vadd.xlane.f32.xlu0 %v744
      %v774 = vpop.xlane.xlu0 %773
      %775 = vadd.xlane.f32.xlu0 %v745
      %v776 = vpop.xlane.xlu0 %775
      %777 = vadd.xlane.f32.xlu0 %v746
      %v778 = vpop.xlane.xlu0 %777
      %779 = vadd.xlane.f32.xlu0 %v747
      %v780 = vpop.xlane.xlu0 %779
      %781 = vadd.xlane.f32.xlu0 %v748
      %v782 = vpop.xlane.xlu0 %781
      %783 = vadd.xlane.f32.xlu0 %v749
      %v784 = vpop.xlane.xlu0 %783
      %785 = vadd.xlane.f32.xlu0 %v750
      %v786 = vpop.xlane.xlu0 %785
      %787 = vadd.xlane.f32.xlu0 %v751
      %v788 = vpop.xlane.xlu0 %787
      %789 = vadd.xlane.f32.xlu0 %v752
      %v790 = vpop.xlane.xlu0 %789
      %v791 = vrcp.pop 128.0
      %v792 = vmul.f32 %v760, %v791
      %v793 = vmul.f32 %v762, %v791
      %v794 = vmul.f32 %v764, %v791
      %v795 = vmul.f32 %v766, %v791
      %v796 = vmul.f32 %v768, %v791
      %v797 = vmul.f32 %v770, %v791
      %v798 = vmul.f32 %v772, %v791
      %v799 = vmul.f32 %v774, %v791
      %v800 = vmul.f32 %v776, %v791
      %v801 = vmul.f32 %v778, %v791
      %v802 = vmul.f32 %v780, %v791
      %v803 = vmul.f32 %v782, %v791
      %v804 = vmul.f32 %v784, %v791
      %v805 = vmul.f32 %v786, %v791
      %v806 = vmul.f32 %v788, %v791
      %v807 = vmul.f32 %v790, %v791
      %v808 = vsub.f32 %v737, %v792
      %v809 = vsub.f32 %v738, %v793
      %v810 = vsub.f32 %v739, %v794
      %v811 = vsub.f32 %v740, %v795
      %v812 = vsub.f32 %v741, %v796
      %v813 = vsub.f32 %v742, %v797
      %v814 = vsub.f32 %v743, %v798
      %v815 = vsub.f32 %v744, %v799
      %v816 = vsub.f32 %v745, %v800
      %v817 = vsub.f32 %v746, %v801
      %v818 = vsub.f32 %v747, %v802
      %v819 = vsub.f32 %v748, %v803
      %v820 = vsub.f32 %v749, %v804
      %v821 = vsub.f32 %v750, %v805
      %v822 = vsub.f32 %v751, %v806
      %v823 = vsub.f32 %v752, %v807
      %v824 = vmul.f32 %v808, %v808
      %v825 = vmul.f32 %v809, %v809
      %v826 = vmul.f32 %v810, %v810
      %v827 = vmul.f32 %v811, %v811
      %v828 = vmul.f32 %v812, %v812
      %v829 = vmul.f32 %v813, %v813
      %v830 = vmul.f32 %v814, %v814
      %v831 = vmul.f32 %v815, %v815
      %v832 = vmul.f32 %v816, %v816
      %v833 = vmul.f32 %v817, %v817
      %v834 = vmul.f32 %v818, %v818
      %v835 = vmul.f32 %v819, %v819
      %v836 = vmul.f32 %v820, %v820
      %v837 = vmul.f32 %v821, %v821
      %v838 = vmul.f32 %v822, %v822
      %v839 = vmul.f32 %v823, %v823
      %840 = vadd.xlane.f32.xlu0 %v824
      %v841 = vpop.xlane.xlu0 %840
      %842 = vadd.xlane.f32.xlu0 %v825
      %v843 = vpop.xlane.xlu0 %842
      %844 = vadd.xlane.f32.xlu0 %v826
      %v845 = vpop.xlane.xlu0 %844
      %846 = vadd.xlane.f32.xlu0 %v827
      %v847 = vpop.xlane.xlu0 %846
      %848 = vadd.xlane.f32.xlu0 %v828
      %v849 = vpop.xlane.xlu0 %848
      %850 = vadd.xlane.f32.xlu0 %v829
      %v851 = vpop.xlane.xlu0 %850
      %852 = vadd.xlane.f32.xlu0 %v830
      %v853 = vpop.xlane.xlu0 %852
      %854 = vadd.xlane.f32.xlu0 %v831
      %v855 = vpop.xlane.xlu0 %854
      %856 = vadd.xlane.f32.xlu0 %v832
      %v857 = vpop.xlane.xlu0 %856
      %858 = vadd.xlane.f32.xlu0 %v833
      %v859 = vpop.xlane.xlu0 %858
      %860 = vadd.xlane.f32.xlu0 %v834
      %v861 = vpop.xlane.xlu0 %860
      %862 = vadd.xlane.f32.xlu0 %v835
      %v863 = vpop.xlane.xlu0 %862
      %864 = vadd.xlane.f32.xlu0 %v836
      %v865 = vpop.xlane.xlu0 %864
      %866 = vadd.xlane.f32.xlu0 %v837
      %v867 = vpop.xlane.xlu0 %866
      %868 = vadd.xlane.f32.xlu0 %v838
      %v869 = vpop.xlane.xlu0 %868
      %870 = vadd.xlane.f32.xlu0 %v839
      %v871 = vpop.xlane.xlu0 %870
      %v872 = vmul.f32 %v841, %v791
      %v873 = vmul.f32 %v843, %v791
      %v874 = vmul.f32 %v845, %v791
      %v875 = vmul.f32 %v847, %v791
      %v876 = vmul.f32 %v849, %v791
      %v877 = vmul.f32 %v851, %v791
      %v878 = vmul.f32 %v853, %v791
      %v879 = vmul.f32 %v855, %v791
      %v880 = vmul.f32 %v857, %v791
      %v881 = vmul.f32 %v859, %v791
      %v882 = vmul.f32 %v861, %v791
      %v883 = vmul.f32 %v863, %v791
      %v884 = vmul.f32 %v865, %v791
      %v885 = vmul.f32 %v867, %v791
      %v886 = vmul.f32 %v869, %v791
      %v887 = vmul.f32 %v871, %v791
      %v888 = vadd.f32 %v872, 1e-05
      %v889 = vadd.f32 %v873, 1e-05
      %v890 = vadd.f32 %v874, 1e-05
      %v891 = vadd.f32 %v875, 1e-05
      %v892 = vadd.f32 %v876, 1e-05
      %v893 = vadd.f32 %v877, 1e-05
      %v894 = vadd.f32 %v878, 1e-05
      %v895 = vadd.f32 %v879, 1e-05
      %v896 = vadd.f32 %v880, 1e-05
      %v897 = vadd.f32 %v881, 1e-05
      %v898 = vadd.f32 %v882, 1e-05
      %v899 = vadd.f32 %v883, 1e-05
      %v900 = vadd.f32 %v884, 1e-05
      %v901 = vadd.f32 %v885, 1e-05
      %v902 = vadd.f32 %v886, 1e-05
      %v903 = vadd.f32 %v887, 1e-05
      %v904 = vrsqrt.pop %v888
      %v905 = vrsqrt.pop %v889
      %v906 = vrsqrt.pop %v890
      %v907 = vrsqrt.pop %v891
      %v908 = vrsqrt.pop %v892
      %v909 = vrsqrt.pop %v893
      %v910 = vrsqrt.pop %v894
      %v911 = vrsqrt.pop %v895
      %v912 = vrsqrt.pop %v896
      %v913 = vrsqrt.pop %v897
      %v914 = vrsqrt.pop %v898
      %v915 = vrsqrt.pop %v899
      %v916 = vrsqrt.pop %v900
      %v917 = vrsqrt.pop %v901
      %v918 = vrsqrt.pop %v902
      %v919 = vrsqrt.pop %v903
      %v920 = vmul.f32 %v808, %v904
      %v921 = vmul.f32 %v809, %v905
      %v922 = vmul.f32 %v810, %v906
      %v923 = vmul.f32 %v811, %v907
      %v924 = vmul.f32 %v812, %v908
      %v925 = vmul.f32 %v813, %v909
      %v926 = vmul.f32 %v814, %v910
      %v927 = vmul.f32 %v815, %v911
      %v928 = vmul.f32 %v816, %v912
      %v929 = vmul.f32 %v817, %v913
      %v930 = vmul.f32 %v818, %v914
      %v931 = vmul.f32 %v819, %v915
      %v932 = vmul.f32 %v820, %v916
      %v933 = vmul.f32 %v821, %v917
      %v934 = vmul.f32 %v822, %v918
      %v935 = vmul.f32 %v823, %v919
      %v937 = vlaneseq
      %v938 = vshrl.u32 %v937, 7
      %v939 = vsub.s32 0, %v938
      %v940 = vrot.slane %v757, %v939
      %v942 = vmul.f32 %v920, %v940
      %v943 = vmul.f32 %v921, %v940
      %v944 = vmul.f32 %v922, %v940
      %v945 = vmul.f32 %v923, %v940
      %v946 = vmul.f32 %v924, %v940
      %v947 = vmul.f32 %v925, %v940
      %v948 = vmul.f32 %v926, %v940
      %v949 = vmul.f32 %v927, %v940
      %v950 = vmul.f32 %v928, %v940
      %v951 = vmul.f32 %v929, %v940
      %v952 = vmul.f32 %v930, %v940
      %v953 = vmul.f32 %v931, %v940
      %v954 = vmul.f32 %v932, %v940
      %v955 = vmul.f32 %v933, %v940
      %v956 = vmul.f32 %v934, %v940
      %v957 = vmul.f32 %v935, %v940
      %v959 = vlaneseq
      %v960 = vshrl.u32 %v959, 7
      %v961 = vsub.s32 0, %v960
      %v962 = vrot.slane %v758, %v961
      %v964 = vadd.f32 %v942, %v962
      %v965 = vadd.f32 %v943, %v962
      %v966 = vadd.f32 %v944, %v962
      %v967 = vadd.f32 %v945, %v962
      %v968 = vadd.f32 %v946, %v962
      %v969 = vadd.f32 %v947, %v962
      %v970 = vadd.f32 %v948, %v962
      %v971 = vadd.f32 %v949, %v962
      %v972 = vadd.f32 %v950, %v962
      %v973 = vadd.f32 %v951, %v962
      %v974 = vadd.f32 %v952, %v962
      %v975 = vadd.f32 %v953, %v962
      %v976 = vadd.f32 %v954, %v962
      %v977 = vadd.f32 %v955, %v962
      %v978 = vadd.f32 %v956, %v962
      %v979 = vadd.f32 %v957, %v962
      %v980 = vpack.c.bf16 %v965, %v964
      %v981 = vpack.c.bf16 %v967, %v966
      %v982 = vpack.c.bf16 %v969, %v968
      %v983 = vpack.c.bf16 %v971, %v970
      %v984 = vpack.c.bf16 %v973, %v972
      %v985 = vpack.c.bf16 %v975, %v974
      %v986 = vpack.c.bf16 %v977, %v976
      %v987 = vpack.c.bf16 %v979, %v978
      %v988 = vld [vmem:[%s657] sm:$0xff]
      %v989 = vld [vmem:[%s657 + $0x8] sm:$0xf]
      %v990 = vld [vmem:[%s657 + $0xc] sm:$0xff]
      %v991 = vld [vmem:[%s657 + $0x14] sm:$0xf]
      %v992 = vld [vmem:[%s657 + $0x18] sm:$0xff]
      %v993 = vld [vmem:[%s657 + $0x20] sm:$0xf]
      %v994 = vld [vmem:[%s657 + $0x24] sm:$0xff]
      %v995 = vld [vmem:[%s657 + $0x2c] sm:$0xf]
      %v996 = vld [vmem:[%s657 + $0x30] sm:$0xff]
      %v997 = vld [vmem:[%s657 + $0x38] sm:$0xf]
      %v998 = vld [vmem:[%s657 + $0x3c] sm:$0xff]
      %v999 = vld [vmem:[%s657 + $0x44] sm:$0xf]
      %v1000 = vld [vmem:[%s657 + $0x48] sm:$0xff]
      %v1001 = vld [vmem:[%s657 + $0x50] sm:$0xf]
      %v1002 = vld [vmem:[%s657 + $0x54] sm:$0xff]
      %v1003 = vld [vmem:[%s657 + $0x5c] sm:$0xf]
      %v1004 = vld [vmem:[%s657 + $0x60] sm:$0xff]
      %v1005 = vld [vmem:[%s657 + $0x68] sm:$0xf]
      %v1006 = vld [vmem:[%s657 + $0x6c] sm:$0xff]
      %v1007 = vld [vmem:[%s657 + $0x74] sm:$0xf]
      %v1008 = vld [vmem:[%s657 + $0x78] sm:$0xff]
      %v1009 = vld [vmem:[%s657 + $0x80] sm:$0xf]
      %v1010 = vld [vmem:[%s657 + $0x84] sm:$0xff]
      %v1011 = vld [vmem:[%s657 + $0x8c] sm:$0xf]
      %v1012 = vld [vmem:[%s657 + $0x90] sm:$0xff]
      %v1013 = vld [vmem:[%s657 + $0x98] sm:$0xf]
      %v1014 = vld [vmem:[%s657 + $0x9c] sm:$0xff]
      %v1015 = vld [vmem:[%s657 + $0xa4] sm:$0xf]
      %v1016 = vld [vmem:[%s657 + $0xa8] sm:$0xff]
      %v1017 = vld [vmem:[%s657 + $0xb0] sm:$0xf]
      %v1018 = vld [vmem:[%s657 + $0xb4] sm:$0xff]
      %v1019 = vld [vmem:[%s657 + $0xbc] sm:$0xf]
      %v1020 = vld [vmem:[%s661] sm:$0x7]
      %v1022 = vlaneseq
      %v1023 = vshrl.u32 %v1022, 7
      %v1024 = vsub.s32 0, %v1023
      %v1025 = vrot.slane %v1020, %v1024
      %v1026 = vlaneseq
      %v1027 = vshrl.u32 %v1026, 7
      %v1028 = vsub.s32 1, %v1027
      %v1029 = vrot.slane %v1020, %v1028
      %v1030 = vlaneseq
      %v1031 = vshrl.u32 %v1030, 7
      %v1032 = vsub.s32 2, %v1031
      %v1033 = vrot.slane %v1020, %v1032
      %v1069 = vunpack.c.l.b16 %v988
      %v1070 = vunpack.c.h.b16 %v988
      %v1071 = vunpack.c.l.b16 %v989
      %v1072 = vunpack.c.l.b16 %v990
      %v1073 = vunpack.c.h.b16 %v990
      %v1074 = vunpack.c.l.b16 %v991
      %v1075 = vunpack.c.l.b16 %v992
      %v1076 = vunpack.c.h.b16 %v992
      %v1077 = vunpack.c.l.b16 %v993
      %v1078 = vunpack.c.l.b16 %v994
      %v1079 = vunpack.c.h.b16 %v994
      %v1080 = vunpack.c.l.b16 %v995
      %v1081 = vunpack.c.l.b16 %v996
      %v1082 = vunpack.c.h.b16 %v996
      %v1083 = vunpack.c.l.b16 %v997
      %v1084 = vunpack.c.l.b16 %v998
      %v1085 = vunpack.c.h.b16 %v998
      %v1086 = vunpack.c.l.b16 %v999
      %v1087 = vunpack.c.l.b16 %v1000
      %v1088 = vunpack.c.h.b16 %v1000
      %v1089 = vunpack.c.l.b16 %v1001
      %v1090 = vunpack.c.l.b16 %v1002
      %v1091 = vunpack.c.h.b16 %v1002
      %v1092 = vunpack.c.l.b16 %v1003
      %v1093 = vunpack.c.l.b16 %v1004
      %v1094 = vunpack.c.h.b16 %v1004
      %v1095 = vunpack.c.l.b16 %v1005
      %v1096 = vunpack.c.l.b16 %v1006
      %v1097 = vunpack.c.h.b16 %v1006
      %v1098 = vunpack.c.l.b16 %v1007
      %v1099 = vunpack.c.l.b16 %v1008
      %v1100 = vunpack.c.h.b16 %v1008
      %v1101 = vunpack.c.l.b16 %v1009
      %v1102 = vunpack.c.l.b16 %v1010
      %v1103 = vunpack.c.h.b16 %v1010
      %v1104 = vunpack.c.l.b16 %v1011
      %v1105 = vunpack.c.l.b16 %v1012
      %v1106 = vunpack.c.h.b16 %v1012
      %v1107 = vunpack.c.l.b16 %v1013
      %v1108 = vunpack.c.l.b16 %v1014
      %v1109 = vunpack.c.h.b16 %v1014
      %v1110 = vunpack.c.l.b16 %v1015
      %v1111 = vunpack.c.l.b16 %v1016
      %v1112 = vunpack.c.h.b16 %v1016
      %v1113 = vunpack.c.l.b16 %v1017
      %v1114 = vunpack.c.l.b16 %v1018
      %v1115 = vunpack.c.h.b16 %v1018
      %v1116 = vunpack.c.l.b16 %v1019
      %v1117 = vpack.c.b16 %v1072, %v1069
      %v1118 = vpack.c.b16 %v1073, %v1070
      %v1119 = vpack.c.b16 %v1074, %v1071
      %v1120 = vpack.c.b16 %v1078, %v1075
      %v1121 = vpack.c.b16 %v1079, %v1076
      %v1122 = vpack.c.b16 %v1080, %v1077
      %v1123 = vpack.c.b16 %v1084, %v1081
      %v1124 = vpack.c.b16 %v1085, %v1082
      %v1125 = vpack.c.b16 %v1086, %v1083
      %v1126 = vpack.c.b16 %v1090, %v1087
      %v1127 = vpack.c.b16 %v1091, %v1088
      %v1128 = vpack.c.b16 %v1092, %v1089
      %v1129 = vpack.c.b16 %v1096, %v1093
      %v1130 = vpack.c.b16 %v1097, %v1094
      %v1131 = vpack.c.b16 %v1098, %v1095
      %v1132 = vpack.c.b16 %v1102, %v1099
      %v1133 = vpack.c.b16 %v1103, %v1100
      %v1134 = vpack.c.b16 %v1104, %v1101
      %v1135 = vpack.c.b16 %v1108, %v1105
      %v1136 = vpack.c.b16 %v1109, %v1106
      %v1137 = vpack.c.b16 %v1110, %v1107
      %v1138 = vpack.c.b16 %v1114, %v1111
      %v1139 = vpack.c.b16 %v1115, %v1112
      %v1140 = vpack.c.b16 %v1116, %v1113
      %1165 = vmatprep.subr.bf16.mxu0 %v1118
      %1166 = vmatpush1.bf16.msra.mxu0 %v1117
      %1167 = vmatprep.subr.bf16.mxu0 %v1121
      %1168 = vmatpush1.bf16.msra.mxu0 %v1120
      %1169 = vmatprep.subr.bf16.mxu0 %v1124
      %1170 = vmatpush1.bf16.msra.mxu0 %v1123
      %1171 = vmatprep.subr.bf16.mxu0 %v1127
      %1172 = vmatpush1.bf16.msra.mxu0 %v1126
      %1173 = vmatprep.subr.bf16.mxu0 %v1130
      %1174 = vmatpush1.bf16.msra.mxu0 %v1129
      %1175 = vmatprep.subr.bf16.mxu0 %v1133
      %1176 = vmatpush1.bf16.msra.mxu0 %v1132
      %1177 = vmatprep.subr.bf16.mxu0 %v1136
      %1178 = vmatpush1.bf16.msra.mxu0 %v1135
      %1179 = vmatprep.subr.bf16.mxu0 %v1139
      %1180 = vmatpush1.bf16.msra.mxu0 %v1138
      %1181 = vmatprep.subr.bf16.mxu0 0
      %1182 = vmatpush1.bf16.msra.mxu0 0
      %1183 = vmatprep.subr.bf16.mxu0 0
      %1184 = vmatpush1.bf16.msra.mxu0 0
      %1185 = vmatprep.subr.bf16.mxu0 0
      %1186 = vmatpush1.bf16.msra.mxu0 0
      %1187 = vmatprep.subr.bf16.mxu0 0
      %1188 = vmatpush1.bf16.msra.mxu0 0
      %1189 = vmatprep.subr.bf16.mxu0 0
      %1190 = vmatpush1.bf16.msra.mxu0 0
      %1191 = vmatprep.subr.bf16.mxu0 0
      %1192 = vmatpush1.bf16.msra.mxu0 0
      %1193 = vmatprep.subr.bf16.mxu0 0
      %1194 = vmatpush1.bf16.msra.mxu0 0
      %1195 = vmatprep.subr.bf16.mxu0 0
      %1196 = vmatpush1.bf16.msra.mxu0 0
      %1197 = vmatprep.mubr.bf16.mxu0 0
      %1198 = vmatmul.mubr.bf16.gmra.mrb[0].mxu0 %v980
      %v1199 = vpop.f32.mrb[0].mxu0
      %v1200 = vadd.f32 %v1025, %v1199
      %v1201 = vpop.f32.mrb[0].mxu0
      %v1202 = vadd.f32 %v1029, %v1201
      %v1203 = vpop.f32.mrb[0].mxu0
      %v1204 = vadd.f32 %v1025, %v1203
      %v1205 = vpop.f32.mrb[0].mxu0
      %v1206 = vadd.f32 %v1029, %v1205
      %1207 = vmatprep.mubr.bf16.mxu0 0
      %1208 = vmatmul.mubr.bf16.gmra.mrb[0].mxu0 %v981
      %v1209 = vpop.f32.mrb[0].mxu0
      %v1210 = vadd.f32 %v1025, %v1209
      %v1211 = vpop.f32.mrb[0].mxu0
      %v1212 = vadd.f32 %v1029, %v1211
      %v1213 = vpop.f32.mrb[0].mxu0
      %v1214 = vadd.f32 %v1025, %v1213
      %v1215 = vpop.f32.mrb[0].mxu0
      %v1216 = vadd.f32 %v1029, %v1215
      %1217 = vmatprep.mubr.bf16.mxu0 0
      %1218 = vmatmul.mubr.bf16.gmra.mrb[0].mxu0 %v982
      %v1219 = vpop.f32.mrb[0].mxu0
      %v1220 = vadd.f32 %v1025, %v1219
      %v1221 = vpop.f32.mrb[0].mxu0
      %v1222 = vadd.f32 %v1029, %v1221
      %v1223 = vpop.f32.mrb[0].mxu0
      %v1224 = vadd.f32 %v1025, %v1223
      %v1225 = vpop.f32.mrb[0].mxu0
      %v1226 = vadd.f32 %v1029, %v1225
      %1227 = vmatprep.mubr.bf16.mxu0 0
      %1228 = vmatmul.mubr.bf16.gmra.mrb[0].mxu0 %v983
      %v1229 = vpop.f32.mrb[0].mxu0
      %v1230 = vadd.f32 %v1025, %v1229
      %v1231 = vpop.f32.mrb[0].mxu0
      %v1232 = vadd.f32 %v1029, %v1231
      %v1233 = vpop.f32.mrb[0].mxu0
      %v1234 = vadd.f32 %v1025, %v1233
      %v1235 = vpop.f32.mrb[0].mxu0
      %v1236 = vadd.f32 %v1029, %v1235
      %1237 = vmatprep.mubr.bf16.mxu0 0
      %1238 = vmatmul.mubr.bf16.gmra.mrb[0].mxu0 %v984
      %v1239 = vpop.f32.mrb[0].mxu0
      %v1240 = vadd.f32 %v1025, %v1239
      %v1241 = vpop.f32.mrb[0].mxu0
      %v1242 = vadd.f32 %v1029, %v1241
      %v1243 = vpop.f32.mrb[0].mxu0
      %v1244 = vadd.f32 %v1025, %v1243
      %v1245 = vpop.f32.mrb[0].mxu0
      %v1246 = vadd.f32 %v1029, %v1245
      %1247 = vmatprep.mubr.bf16.mxu0 0
      %1248 = vmatmul.mubr.bf16.gmra.mrb[0].mxu0 %v985
      %v1249 = vpop.f32.mrb[0].mxu0
      %v1250 = vadd.f32 %v1025, %v1249
      %v1251 = vpop.f32.mrb[0].mxu0
      %v1252 = vadd.f32 %v1029, %v1251
      %v1253 = vpop.f32.mrb[0].mxu0
      %v1254 = vadd.f32 %v1025, %v1253
      %v1255 = vpop.f32.mrb[0].mxu0
      %v1256 = vadd.f32 %v1029, %v1255
      %1257 = vmatprep.mubr.bf16.mxu0 0
      %1258 = vmatmul.mubr.bf16.gmra.mrb[0].mxu0 %v986
      %v1259 = vpop.f32.mrb[0].mxu0
      %v1260 = vadd.f32 %v1025, %v1259
      %v1261 = vpop.f32.mrb[0].mxu0
      %v1262 = vadd.f32 %v1029, %v1261
      %v1263 = vpop.f32.mrb[0].mxu0
      %v1264 = vadd.f32 %v1025, %v1263
      %v1265 = vpop.f32.mrb[0].mxu0
      %v1266 = vadd.f32 %v1029, %v1265
      %1267 = vmatprep.mubr.bf16.mxu0 0
      %1268 = vmatmul.mubr.bf16.gmra.mrb[0].mxu0 %v987
      %v1269 = vpop.f32.mrb[0].mxu0
      %v1270 = vadd.f32 %v1025, %v1269
      %v1271 = vpop.f32.mrb[0].mxu0
      %v1272 = vadd.f32 %v1029, %v1271
      %v1273 = vpop.f32.mrb[0].mxu0
      %v1274 = vadd.f32 %v1025, %v1273
      %v1275 = vpop.f32.mrb[0].mxu0
      %v1276 = vadd.f32 %v1029, %v1275
      %1277 = vdwg.mxu0
      %1278 = vmatprep.subr.bf16.mxu0 0
      %1279 = vmatpush1.bf16.msra.mxu0 %v1119
      %1280 = vmatprep.subr.bf16.mxu0 0
      %1281 = vmatpush1.bf16.msra.mxu0 %v1122
      %1282 = vmatprep.subr.bf16.mxu0 0
      %1283 = vmatpush1.bf16.msra.mxu0 %v1125
      %1284 = vmatprep.subr.bf16.mxu0 0
      %1285 = vmatpush1.bf16.msra.mxu0 %v1128
      %1286 = vmatprep.subr.bf16.mxu0 0
      %1287 = vmatpush1.bf16.msra.mxu0 %v1131
      %1288 = vmatprep.subr.bf16.mxu0 0
      %1289 = vmatpush1.bf16.msra.mxu0 %v1134
      %1290 = vmatprep.subr.bf16.mxu0 0
      %1291 = vmatpush1.bf16.msra.mxu0 %v1137
      %1292 = vmatprep.subr.bf16.mxu0 0
      %1293 = vmatpush1.bf16.msra.mxu0 %v1140
      %1294 = vmatprep.subr.bf16.mxu0 0
      %1295 = vmatpush1.bf16.msra.mxu0 0
      %1296 = vmatprep.subr.bf16.mxu0 0
      %1297 = vmatpush1.bf16.msra.mxu0 0
      %1298 = vmatprep.subr.bf16.mxu0 0
      %1299 = vmatpush1.bf16.msra.mxu0 0
      %1300 = vmatprep.subr.bf16.mxu0 0
      %1301 = vmatpush1.bf16.msra.mxu0 0
      %1302 = vmatprep.subr.bf16.mxu0 0
      %1303 = vmatpush1.bf16.msra.mxu0 0
      %1304 = vmatprep.subr.bf16.mxu0 0
      %1305 = vmatpush1.bf16.msra.mxu0 0
      %1306 = vmatprep.subr.bf16.mxu0 0
      %1307 = vmatpush1.bf16.msra.mxu0 0
      %1308 = vmatprep.subr.bf16.mxu0 0
      %1309 = vmatpush1.bf16.msra.mxu0 0
      %1310 = vmatprep.mubr.bf16.mxu0 0
      %1311 = vmatmul.mubr.bf16.gmra.mrb[0].mxu0 %v980
      %v1312 = vpop.f32.mrb[0].mxu0
      %v1313 = vadd.f32 %v1033, %v1312
      %v1314 = vpop.f32.mrb[0].mxu0
      %v1315 = vpop.f32.mrb[0].mxu0
      %v1316 = vadd.f32 %v1033, %v1315
      %v1317 = vpop.f32.mrb[0].mxu0
      %1318 = vmatprep.mubr.bf16.mxu0 0
      %1319 = vmatmul.mubr.bf16.gmra.mrb[0].mxu0 %v981
      %v1320 = vpop.f32.mrb[0].mxu0
      %v1321 = vadd.f32 %v1033, %v1320
      %v1322 = vpop.f32.mrb[0].mxu0
      %v1323 = vpop.f32.mrb[0].mxu0
      %v1324 = vadd.f32 %v1033, %v1323
      %v1325 = vpop.f32.mrb[0].mxu0
      %1326 = vmatprep.mubr.bf16.mxu0 0
      %1327 = vmatmul.mubr.bf16.gmra.mrb[0].mxu0 %v982
      %v1328 = vpop.f32.mrb[0].mxu0
      %v1329 = vadd.f32 %v1033, %v1328
      %v1330 = vpop.f32.mrb[0].mxu0
      %v1331 = vpop.f32.mrb[0].mxu0
      %v1332 = vadd.f32 %v1033, %v1331
      %v1333 = vpop.f32.mrb[0].mxu0
      %1334 = vmatprep.mubr.bf16.mxu0 0
      %1335 = vmatmul.mubr.bf16.gmra.mrb[0].mxu0 %v983
      %v1336 = vpop.f32.mrb[0].mxu0
      %v1337 = vadd.f32 %v1033, %v1336
      %v1338 = vpop.f32.mrb[0].mxu0
      %v1339 = vpop.f32.mrb[0].mxu0
      %v1340 = vadd.f32 %v1033, %v1339
      %v1341 = vpop.f32.mrb[0].mxu0
      %1342 = vmatprep.mubr.bf16.mxu0 0
      %1343 = vmatmul.mubr.bf16.gmra.mrb[0].mxu0 %v984
      %v1344 = vpop.f32.mrb[0].mxu0
      %v1345 = vadd.f32 %v1033, %v1344
      %v1346 = vpop.f32.mrb[0].mxu0
      %v1347 = vpop.f32.mrb[0].mxu0
      %v1348 = vadd.f32 %v1033, %v1347
      %v1349 = vpop.f32.mrb[0].mxu0
      %1350 = vmatprep.mubr.bf16.mxu0 0
      %1351 = vmatmul.mubr.bf16.gmra.mrb[0].mxu0 %v985
      %v1352 = vpop.f32.mrb[0].mxu0
      %v1353 = vadd.f32 %v1033, %v1352
      %v1354 = vpop.f32.mrb[0].mxu0
      %v1355 = vpop.f32.mrb[0].mxu0
      %v1356 = vadd.f32 %v1033, %v1355
      %v1357 = vpop.f32.mrb[0].mxu0
      %1358 = vmatprep.mubr.bf16.mxu0 0
      %1359 = vmatmul.mubr.bf16.gmra.mrb[0].mxu0 %v986
      %v1360 = vpop.f32.mrb[0].mxu0
      %v1361 = vadd.f32 %v1033, %v1360
      %v1362 = vpop.f32.mrb[0].mxu0
      %v1363 = vpop.f32.mrb[0].mxu0
      %v1364 = vadd.f32 %v1033, %v1363
      %v1365 = vpop.f32.mrb[0].mxu0
      %1366 = vmatprep.mubr.bf16.mxu0 0
      %1367 = vmatmul.mubr.bf16.gmra.mrb[0].mxu0 %v987
      %v1368 = vpop.f32.mrb[0].mxu0
      %v1369 = vadd.f32 %v1033, %v1368
      %v1370 = vpop.f32.mrb[0].mxu0
      %v1371 = vpop.f32.mrb[0].mxu0
      %v1372 = vadd.f32 %v1033, %v1371
      %v1373 = vpop.f32.mrb[0].mxu0
      %1374 = vdwg.mxu0
      %v1375 = vpack.c.bf16 %v1204, %v1200
      %v1376 = vpack.c.bf16 %v1214, %v1210
      %v1377 = vpack.c.bf16 %v1224, %v1220
      %v1378 = vpack.c.bf16 %v1234, %v1230
      %v1379 = vpack.c.bf16 %v1244, %v1240
      %v1380 = vpack.c.bf16 %v1254, %v1250
      %v1381 = vpack.c.bf16 %v1264, %v1260
      %v1382 = vpack.c.bf16 %v1274, %v1270
      %v1383 = vpack.c.bf16 %v1206, %v1202
      %v1384 = vpack.c.bf16 %v1216, %v1212
      %v1385 = vpack.c.bf16 %v1226, %v1222
      %v1386 = vpack.c.bf16 %v1236, %v1232
      %v1387 = vpack.c.bf16 %v1246, %v1242
      %v1388 = vpack.c.bf16 %v1256, %v1252
      %v1389 = vpack.c.bf16 %v1266, %v1262
      %v1390 = vpack.c.bf16 %v1276, %v1272
      %v1391 = vpack.c.bf16 %v1316, %v1313
      %v1392 = vpack.c.bf16 %v1324, %v1321
      %v1393 = vpack.c.bf16 %v1332, %v1329
      %v1394 = vpack.c.bf16 %v1340, %v1337
      %v1395 = vpack.c.bf16 %v1348, %v1345
      %v1396 = vpack.c.bf16 %v1356, %v1353
      %v1397 = vpack.c.bf16 %v1364, %v1361
      %v1398 = vpack.c.bf16 %v1372, %v1369
      %1399 = vmatprep.subr.bf16.mxu0 0
      %1400 = vmatpush1.bf16.xpose.msra.mxu0 %v1383
      %1401 = vmatprep.subr.bf16.mxu0 0
      %1402 = vmatpush1.bf16.xpose.msra.mxu0 %v1384
      %1403 = vmatprep.subr.bf16.mxu0 0
      %1404 = vmatpush1.bf16.xpose.msra.mxu0 %v1385
      %1405 = vmatprep.subr.bf16.mxu0 0
      %1406 = vmatpush1.bf16.xpose.msra.mxu0 %v1386
      %1407 = vmatprep.subr.bf16.mxu0 0
      %1408 = vmatpush1.bf16.xpose.msra.mxu0 %v1387
      %1409 = vmatprep.subr.bf16.mxu0 0
      %1410 = vmatpush1.bf16.xpose.msra.mxu0 %v1388
      %1411 = vmatprep.subr.bf16.mxu0 0
      %1412 = vmatpush1.bf16.xpose.msra.mxu0 %v1389
      %1413 = vmatprep.subr.bf16.mxu0 0
      %1414 = vmatpush1.bf16.xpose.msra.mxu0 %v1390
      %1415 = vmatprep.subr.bf16.mxu0 0
      %1416 = vmatpush1.bf16.xpose.msra.mxu0 0
      %1417 = vmatprep.subr.bf16.mxu0 0
      %1418 = vmatpush1.bf16.xpose.msra.mxu0 0
      %1419 = vmatprep.subr.bf16.mxu0 0
      %1420 = vmatpush1.bf16.xpose.msra.mxu0 0
      %1421 = vmatprep.subr.bf16.mxu0 0
      %1422 = vmatpush1.bf16.xpose.msra.mxu0 0
      %1423 = vmatprep.subr.bf16.mxu0 0
      %1424 = vmatpush1.bf16.xpose.msra.mxu0 0
      %1425 = vmatprep.subr.bf16.mxu0 0
      %1426 = vmatpush1.bf16.xpose.msra.mxu0 0
      %1427 = vmatprep.subr.bf16.mxu0 0
      %1428 = vmatpush1.bf16.xpose.msra.mxu0 0
      %1429 = vmatprep.subr.bf16.mxu0 0
      %1430 = vmatpush1.bf16.xpose.msra.mxu0 0
      %1431 = vmatprep.mubr.bf16.mxu0 0
      %1432 = vmatmul.mubr.bf16.gmra.mrb[0].mxu0 %v1375
      %v1433 = vpop.f32.mrb[0].mxu0
      %v1434 = vadd.f32 0.0, %v1433
      %v1435 = vpop.f32.mrb[0].mxu0
      %v1436 = vpop.f32.mrb[0].mxu0
      %v1437 = vadd.f32 0.0, %v1436
      %v1438 = vpop.f32.mrb[0].mxu0
      %1439 = vmatprep.mubr.bf16.mxu0 0
      %1440 = vmatmul.mubr.bf16.gmra.mrb[0].mxu0 %v1376
      %v1441 = vpop.f32.mrb[0].mxu0
      %v1442 = vadd.f32 0.0, %v1441
      %v1443 = vpop.f32.mrb[0].mxu0
      %v1444 = vpop.f32.mrb[0].mxu0
      %v1445 = vadd.f32 0.0, %v1444
      %v1446 = vpop.f32.mrb[0].mxu0
      %1447 = vmatprep.mubr.bf16.mxu0 0
      %1448 = vmatmul.mubr.bf16.gmra.mrb[0].mxu0 %v1377
      %v1449 = vpop.f32.mrb[0].mxu0
      %v1450 = vadd.f32 0.0, %v1449
      %v1451 = vpop.f32.mrb[0].mxu0
      %v1452 = vpop.f32.mrb[0].mxu0
      %v1453 = vadd.f32 0.0, %v1452
      %v1454 = vpop.f32.mrb[0].mxu0
      %1455 = vmatprep.mubr.bf16.mxu0 0
      %1456 = vmatmul.mubr.bf16.gmra.mrb[0].mxu0 %v1378
      %v1457 = vpop.f32.mrb[0].mxu0
      %v1458 = vadd.f32 0.0, %v1457
      %v1459 = vpop.f32.mrb[0].mxu0
      %v1460 = vpop.f32.mrb[0].mxu0
      %v1461 = vadd.f32 0.0, %v1460
      %v1462 = vpop.f32.mrb[0].mxu0
      %1463 = vmatprep.mubr.bf16.mxu0 0
      %1464 = vmatmul.mubr.bf16.gmra.mrb[0].mxu0 %v1379
      %v1465 = vpop.f32.mrb[0].mxu0
      %v1466 = vadd.f32 0.0, %v1465
      %v1467 = vpop.f32.mrb[0].mxu0
      %v1468 = vpop.f32.mrb[0].mxu0
      %v1469 = vadd.f32 0.0, %v1468
      %v1470 = vpop.f32.mrb[0].mxu0
      %1471 = vmatprep.mubr.bf16.mxu0 0
      %1472 = vmatmul.mubr.bf16.gmra.mrb[0].mxu0 %v1380
      %v1473 = vpop.f32.mrb[0].mxu0
      %v1474 = vadd.f32 0.0, %v1473
      %v1475 = vpop.f32.mrb[0].mxu0
      %v1476 = vpop.f32.mrb[0].mxu0
      %v1477 = vadd.f32 0.0, %v1476
      %v1478 = vpop.f32.mrb[0].mxu0
      %1479 = vmatprep.mubr.bf16.mxu0 0
      %1480 = vmatmul.mubr.bf16.gmra.mrb[0].mxu0 %v1381
      %v1481 = vpop.f32.mrb[0].mxu0
      %v1482 = vadd.f32 0.0, %v1481
      %v1483 = vpop.f32.mrb[0].mxu0
      %v1484 = vpop.f32.mrb[0].mxu0
      %v1485 = vadd.f32 0.0, %v1484
      %v1486 = vpop.f32.mrb[0].mxu0
      %1487 = vmatprep.mubr.bf16.mxu0 0
      %1488 = vmatmul.mubr.bf16.gmra.mrb[0].mxu0 %v1382
      %v1489 = vpop.f32.mrb[0].mxu0
      %v1490 = vadd.f32 0.0, %v1489
      %v1491 = vpop.f32.mrb[0].mxu0
      %v1492 = vpop.f32.mrb[0].mxu0
      %v1493 = vadd.f32 0.0, %v1492
      %v1494 = vpop.f32.mrb[0].mxu0
      %1495 = vdwg.mxu0
      %v1496 = vmul.f32 %v1434, 0.088388346
      %v1497 = vmul.f32 %v1437, 0.088388346
      %v1498 = vmul.f32 %v1442, 0.088388346
      %v1499 = vmul.f32 %v1445, 0.088388346
      %v1500 = vmul.f32 %v1450, 0.088388346
      %v1501 = vmul.f32 %v1453, 0.088388346
      %v1502 = vmul.f32 %v1458, 0.088388346
      %v1503 = vmul.f32 %v1461, 0.088388346
      %v1504 = vmul.f32 %v1466, 0.088388346
      %v1505 = vmul.f32 %v1469, 0.088388346
      %v1506 = vmul.f32 %v1474, 0.088388346
      %v1507 = vmul.f32 %v1477, 0.088388346
      %v1508 = vmul.f32 %v1482, 0.088388346
      %v1509 = vmul.f32 %v1485, 0.088388346
      %v1510 = vmul.f32 %v1490, 0.088388346
      %v1511 = vmul.f32 %v1493, 0.088388346
      %vm1512 = vnez %v753
      %vm1513 = vnez %v754
      %vm1514 = vnez %v755
      %vm1515 = vnez %v756
      %v1516 = vsel %vm1512, 16843009, 0
      %v1517 = vsel %vm1513, 16843009, 0
      %v1518 = vsel %vm1514, 16843009, 0
      %v1519 = vsel %vm1515, 16843009, 0
      %v1520 = vunpack.c.0.s8 %v1516
      %v1521 = vunpack.c.1.s8 %v1516
      %v1522 = vunpack.c.2.s8 %v1516
      %v1523 = vunpack.c.3.s8 %v1516
      %v1524 = vunpack.c.0.s8 %v1517
      %v1525 = vunpack.c.1.s8 %v1517
      %v1526 = vunpack.c.2.s8 %v1517
      %v1527 = vunpack.c.3.s8 %v1517
      %v1528 = vunpack.c.0.s8 %v1518
      %v1529 = vunpack.c.1.s8 %v1518
      %v1530 = vunpack.c.2.s8 %v1518
      %v1531 = vunpack.c.3.s8 %v1518
      %v1532 = vunpack.c.0.s8 %v1519
      %v1533 = vunpack.c.1.s8 %v1519
      %v1534 = vunpack.c.2.s8 %v1519
      %v1535 = vunpack.c.3.s8 %v1519
      %v1536 = vpack.c.b16 %v1520, %v1520
      %v1537 = vpack.c.b8 %v1536, %v1536
      %v1538 = vpack.c.b16 %v1521, %v1521
      %v1539 = vpack.c.b8 %v1538, %v1538
      %v1540 = vpack.c.b16 %v1522, %v1522
      %v1541 = vpack.c.b8 %v1540, %v1540
      %v1542 = vpack.c.b16 %v1523, %v1523
      %v1543 = vpack.c.b8 %v1542, %v1542
      %v1544 = vpack.c.b16 %v1524, %v1524
      %v1545 = vpack.c.b8 %v1544, %v1544
      %v1546 = vpack.c.b16 %v1525, %v1525
      %v1547 = vpack.c.b8 %v1546, %v1546
      %v1548 = vpack.c.b16 %v1526, %v1526
      %v1549 = vpack.c.b8 %v1548, %v1548
      %v1550 = vpack.c.b16 %v1527, %v1527
      %v1551 = vpack.c.b8 %v1550, %v1550
      %v1552 = vpack.c.b16 %v1528, %v1528
      %v1553 = vpack.c.b8 %v1552, %v1552
      %v1554 = vpack.c.b16 %v1529, %v1529
      %v1555 = vpack.c.b8 %v1554, %v1554
      %v1556 = vpack.c.b16 %v1530, %v1530
      %v1557 = vpack.c.b8 %v1556, %v1556
      %v1558 = vpack.c.b16 %v1531, %v1531
      %v1559 = vpack.c.b8 %v1558, %v1558
      %v1560 = vpack.c.b16 %v1532, %v1532
      %v1561 = vpack.c.b8 %v1560, %v1560
      %v1562 = vpack.c.b16 %v1533, %v1533
      %v1563 = vpack.c.b8 %v1562, %v1562
      %v1564 = vpack.c.b16 %v1534, %v1534
      %v1565 = vpack.c.b8 %v1564, %v1564
      %v1566 = vpack.c.b16 %v1535, %v1535
      %v1567 = vpack.c.b8 %v1566, %v1566
      %vm1568 = vnez %v1537
      %vm1569 = vnez %v1539
      %vm1570 = vnez %v1541
      %vm1571 = vnez %v1543
      %vm1572 = vnez %v1545
      %vm1573 = vnez %v1547
      %vm1574 = vnez %v1549
      %vm1575 = vnez %v1551
      %vm1576 = vnez %v1553
      %vm1577 = vnez %v1555
      %vm1578 = vnez %v1557
      %vm1579 = vnez %v1559
      %vm1580 = vnez %v1561
      %vm1581 = vnez %v1563
      %vm1582 = vnez %v1565
      %vm1583 = vnez %v1567
      %v1584 = vsel %vm1568, 16843009, 0
      %v1585 = vsel %vm1569, 16843009, 0
      %v1586 = vsel %vm1570, 16843009, 0
      %v1587 = vsel %vm1571, 16843009, 0
      %v1588 = vsel %vm1572, 16843009, 0
      %v1589 = vsel %vm1573, 16843009, 0
      %v1590 = vsel %vm1574, 16843009, 0
      %v1591 = vsel %vm1575, 16843009, 0
      %v1592 = vsel %vm1576, 16843009, 0
      %v1593 = vsel %vm1577, 16843009, 0
      %v1594 = vsel %vm1578, 16843009, 0
      %v1595 = vsel %vm1579, 16843009, 0
      %v1596 = vsel %vm1580, 16843009, 0
      %v1597 = vsel %vm1581, 16843009, 0
      %v1598 = vsel %vm1582, 16843009, 0
      %v1599 = vsel %vm1583, 16843009, 0
      %v1600 = vunpack.c.0.s8 %v1584
      %v1601 = vunpack.c.0.s8 %v1585
      %v1602 = vunpack.c.0.s8 %v1586
      %v1603 = vunpack.c.0.s8 %v1587
      %v1604 = vunpack.c.0.s8 %v1588
      %v1605 = vunpack.c.0.s8 %v1589
      %v1606 = vunpack.c.0.s8 %v1590
      %v1607 = vunpack.c.0.s8 %v1591
      %v1608 = vunpack.c.0.s8 %v1592
      %v1609 = vunpack.c.0.s8 %v1593
      %v1610 = vunpack.c.0.s8 %v1594
      %v1611 = vunpack.c.0.s8 %v1595
      %v1612 = vunpack.c.0.s8 %v1596
      %v1613 = vunpack.c.0.s8 %v1597
      %v1614 = vunpack.c.0.s8 %v1598
      %v1615 = vunpack.c.0.s8 %v1599
      %vm1616 = vcmp.ne.s32.totalorder %v1600, 0
      %vm1617 = vcmp.ne.s32.totalorder %v1601, 0
      %vm1618 = vcmp.ne.s32.totalorder %v1602, 0
      %vm1619 = vcmp.ne.s32.totalorder %v1603, 0
      %vm1620 = vcmp.ne.s32.totalorder %v1604, 0
      %vm1621 = vcmp.ne.s32.totalorder %v1605, 0
      %vm1622 = vcmp.ne.s32.totalorder %v1606, 0
      %vm1623 = vcmp.ne.s32.totalorder %v1607, 0
      %vm1624 = vcmp.ne.s32.totalorder %v1608, 0
      %vm1625 = vcmp.ne.s32.totalorder %v1609, 0
      %vm1626 = vcmp.ne.s32.totalorder %v1610, 0
      %vm1627 = vcmp.ne.s32.totalorder %v1611, 0
      %vm1628 = vcmp.ne.s32.totalorder %v1612, 0
      %vm1629 = vcmp.ne.s32.totalorder %v1613, 0
      %vm1630 = vcmp.ne.s32.totalorder %v1614, 0
      %vm1631 = vcmp.ne.s32.totalorder %v1615, 0
      %v1632 = vsel %vm1616, %v1496, -1e+09
      %v1633 = vsel %vm1617, %v1497, -1e+09
      %v1634 = vsel %vm1618, %v1498, -1e+09
      %v1635 = vsel %vm1619, %v1499, -1e+09
      %v1636 = vsel %vm1620, %v1500, -1e+09
      %v1637 = vsel %vm1621, %v1501, -1e+09
      %v1638 = vsel %vm1622, %v1502, -1e+09
      %v1639 = vsel %vm1623, %v1503, -1e+09
      %v1640 = vsel %vm1624, %v1504, -1e+09
      %v1641 = vsel %vm1625, %v1505, -1e+09
      %v1642 = vsel %vm1626, %v1506, -1e+09
      %v1643 = vsel %vm1627, %v1507, -1e+09
      %v1644 = vsel %vm1628, %v1508, -1e+09
      %v1645 = vsel %vm1629, %v1509, -1e+09
      %v1646 = vsel %vm1630, %v1510, -1e+09
      %v1647 = vsel %vm1631, %v1511, -1e+09
      %1648 = vmax.xlane.f32.xlu0 %v1632
      %v1649 = vpop.xlane.xlu0 %1648
      %1650 = vmax.xlane.f32.xlu0 %v1633
      %v1651 = vpop.xlane.xlu0 %1650
      %1652 = vmax.xlane.f32.xlu0 %v1634
      %v1653 = vpop.xlane.xlu0 %1652
      %1654 = vmax.xlane.f32.xlu0 %v1635
      %v1655 = vpop.xlane.xlu0 %1654
      %1656 = vmax.xlane.f32.xlu0 %v1636
      %v1657 = vpop.xlane.xlu0 %1656
      %1658 = vmax.xlane.f32.xlu0 %v1637
      %v1659 = vpop.xlane.xlu0 %1658
      %1660 = vmax.xlane.f32.xlu0 %v1638
      %v1661 = vpop.xlane.xlu0 %1660
      %1662 = vmax.xlane.f32.xlu0 %v1639
      %v1663 = vpop.xlane.xlu0 %1662
      %1664 = vmax.xlane.f32.xlu0 %v1640
      %v1665 = vpop.xlane.xlu0 %1664
      %1666 = vmax.xlane.f32.xlu0 %v1641
      %v1667 = vpop.xlane.xlu0 %1666
      %1668 = vmax.xlane.f32.xlu0 %v1642
      %v1669 = vpop.xlane.xlu0 %1668
      %1670 = vmax.xlane.f32.xlu0 %v1643
      %v1671 = vpop.xlane.xlu0 %1670
      %1672 = vmax.xlane.f32.xlu0 %v1644
      %v1673 = vpop.xlane.xlu0 %1672
      %1674 = vmax.xlane.f32.xlu0 %v1645
      %v1675 = vpop.xlane.xlu0 %1674
      %1676 = vmax.xlane.f32.xlu0 %v1646
      %v1677 = vpop.xlane.xlu0 %1676
      %1678 = vmax.xlane.f32.xlu0 %v1647
      %v1679 = vpop.xlane.xlu0 %1678
      %v1680 = vsub.f32 %v1632, %v1649
      %v1681 = vsub.f32 %v1633, %v1651
      %v1682 = vsub.f32 %v1634, %v1653
      %v1683 = vsub.f32 %v1635, %v1655
      %v1684 = vsub.f32 %v1636, %v1657
      %v1685 = vsub.f32 %v1637, %v1659
      %v1686 = vsub.f32 %v1638, %v1661
      %v1687 = vsub.f32 %v1639, %v1663
      %v1688 = vsub.f32 %v1640, %v1665
      %v1689 = vsub.f32 %v1641, %v1667
      %v1690 = vsub.f32 %v1642, %v1669
      %v1691 = vsub.f32 %v1643, %v1671
      %v1692 = vsub.f32 %v1644, %v1673
      %v1693 = vsub.f32 %v1645, %v1675
      %v1694 = vsub.f32 %v1646, %v1677
      %v1695 = vsub.f32 %v1647, %v1679
      %v1696 = vmul.f32 %v1680, 1.442695
      %v1697 = vpow.pop %v1696
      %v1698 = vmul.f32 %v1681, 1.442695
      %v1699 = vpow.pop %v1698
      %v1700 = vmul.f32 %v1682, 1.442695
      %v1701 = vpow.pop %v1700
      %v1702 = vmul.f32 %v1683, 1.442695
      %v1703 = vpow.pop %v1702
      %v1704 = vmul.f32 %v1684, 1.442695
      %v1705 = vpow.pop %v1704
      %v1706 = vmul.f32 %v1685, 1.442695
      %v1707 = vpow.pop %v1706
      %v1708 = vmul.f32 %v1686, 1.442695
      %v1709 = vpow.pop %v1708
      %v1710 = vmul.f32 %v1687, 1.442695
      %v1711 = vpow.pop %v1710
      %v1712 = vmul.f32 %v1688, 1.442695
      %v1713 = vpow.pop %v1712
      %v1714 = vmul.f32 %v1689, 1.442695
      %v1715 = vpow.pop %v1714
      %v1716 = vmul.f32 %v1690, 1.442695
      %v1717 = vpow.pop %v1716
      %v1718 = vmul.f32 %v1691, 1.442695
      %v1719 = vpow.pop %v1718
      %v1720 = vmul.f32 %v1692, 1.442695
      %v1721 = vpow.pop %v1720
      %v1722 = vmul.f32 %v1693, 1.442695
      %v1723 = vpow.pop %v1722
      %v1724 = vmul.f32 %v1694, 1.442695
      %v1725 = vpow.pop %v1724
      %v1726 = vmul.f32 %v1695, 1.442695
      %v1727 = vpow.pop %v1726
      %1728 = vadd.xlane.f32.xlu0 %v1697
      %v1729 = vpop.xlane.xlu0 %1728
      %1730 = vadd.xlane.f32.xlu0 %v1699
      %v1731 = vpop.xlane.xlu0 %1730
      %1732 = vadd.xlane.f32.xlu0 %v1701
      %v1733 = vpop.xlane.xlu0 %1732
      %1734 = vadd.xlane.f32.xlu0 %v1703
      %v1735 = vpop.xlane.xlu0 %1734
      %1736 = vadd.xlane.f32.xlu0 %v1705
      %v1737 = vpop.xlane.xlu0 %1736
      %1738 = vadd.xlane.f32.xlu0 %v1707
      %v1739 = vpop.xlane.xlu0 %1738
      %1740 = vadd.xlane.f32.xlu0 %v1709
      %v1741 = vpop.xlane.xlu0 %1740
      %1742 = vadd.xlane.f32.xlu0 %v1711
      %v1743 = vpop.xlane.xlu0 %1742
      %1744 = vadd.xlane.f32.xlu0 %v1713
      %v1745 = vpop.xlane.xlu0 %1744
      %1746 = vadd.xlane.f32.xlu0 %v1715
      %v1747 = vpop.xlane.xlu0 %1746
      %1748 = vadd.xlane.f32.xlu0 %v1717
      %v1749 = vpop.xlane.xlu0 %1748
      %1750 = vadd.xlane.f32.xlu0 %v1719
      %v1751 = vpop.xlane.xlu0 %1750
      %1752 = vadd.xlane.f32.xlu0 %v1721
      %v1753 = vpop.xlane.xlu0 %1752
      %1754 = vadd.xlane.f32.xlu0 %v1723
      %v1755 = vpop.xlane.xlu0 %1754
      %1756 = vadd.xlane.f32.xlu0 %v1725
      %v1757 = vpop.xlane.xlu0 %1756
      %1758 = vadd.xlane.f32.xlu0 %v1727
      %v1759 = vpop.xlane.xlu0 %1758
      %v1760 = vrcp.pop %v1729
      %v1761 = vrcp.pop %v1731
      %v1762 = vrcp.pop %v1733
      %v1763 = vrcp.pop %v1735
      %v1764 = vrcp.pop %v1737
      %v1765 = vrcp.pop %v1739
      %v1766 = vrcp.pop %v1741
      %v1767 = vrcp.pop %v1743
      %v1768 = vrcp.pop %v1745
      %v1769 = vrcp.pop %v1747
      %v1770 = vrcp.pop %v1749
      %v1771 = vrcp.pop %v1751
      %v1772 = vrcp.pop %v1753
      %v1773 = vrcp.pop %v1755
      %v1774 = vrcp.pop %v1757
      %v1775 = vrcp.pop %v1759
      %v1776 = vmul.f32 %v1697, %v1760
      %v1777 = vmul.f32 %v1699, %v1761
      %v1778 = vmul.f32 %v1701, %v1762
      %v1779 = vmul.f32 %v1703, %v1763
      %v1780 = vmul.f32 %v1705, %v1764
      %v1781 = vmul.f32 %v1707, %v1765
      %v1782 = vmul.f32 %v1709, %v1766
      %v1783 = vmul.f32 %v1711, %v1767
      %v1784 = vmul.f32 %v1713, %v1768
      %v1785 = vmul.f32 %v1715, %v1769
      %v1786 = vmul.f32 %v1717, %v1770
      %v1787 = vmul.f32 %v1719, %v1771
      %v1788 = vmul.f32 %v1721, %v1772
      %v1789 = vmul.f32 %v1723, %v1773
      %v1790 = vmul.f32 %v1725, %v1774
      %v1791 = vmul.f32 %v1727, %v1775
      %v1792 = vpack.c.bf16 %v1777, %v1776
      %v1793 = vpack.c.bf16 %v1779, %v1778
      %v1794 = vpack.c.bf16 %v1781, %v1780
      %v1795 = vpack.c.bf16 %v1783, %v1782
      %v1796 = vpack.c.bf16 %v1785, %v1784
      %v1797 = vpack.c.bf16 %v1787, %v1786
      %v1798 = vpack.c.bf16 %v1789, %v1788
      %v1799 = vpack.c.bf16 %v1791, %v1790
      %1800 = vmatprep.subr.bf16.mxu0 0
      %1801 = vmatpush1.bf16.msra.mxu0 %v1391
      %1802 = vmatprep.subr.bf16.mxu0 0
      %1803 = vmatpush1.bf16.msra.mxu0 %v1392
      %1804 = vmatprep.subr.bf16.mxu0 0
      %1805 = vmatpush1.bf16.msra.mxu0 %v1393
      %1806 = vmatprep.subr.bf16.mxu0 0
      %1807 = vmatpush1.bf16.msra.mxu0 %v1394
      %1808 = vmatprep.subr.bf16.mxu0 0
      %1809 = vmatpush1.bf16.msra.mxu0 %v1395
      %1810 = vmatprep.subr.bf16.mxu0 0
      %1811 = vmatpush1.bf16.msra.mxu0 %v1396
      %1812 = vmatprep.subr.bf16.mxu0 0
      %1813 = vmatpush1.bf16.msra.mxu0 %v1397
      %1814 = vmatprep.subr.bf16.mxu0 0
      %1815 = vmatpush1.bf16.msra.mxu0 %v1398
      %1816 = vmatprep.subr.bf16.mxu0 0
      %1817 = vmatpush1.bf16.msra.mxu0 0
      %1818 = vmatprep.subr.bf16.mxu0 0
      %1819 = vmatpush1.bf16.msra.mxu0 0
      %1820 = vmatprep.subr.bf16.mxu0 0
      %1821 = vmatpush1.bf16.msra.mxu0 0
      %1822 = vmatprep.subr.bf16.mxu0 0
      %1823 = vmatpush1.bf16.msra.mxu0 0
      %1824 = vmatprep.subr.bf16.mxu0 0
      %1825 = vmatpush1.bf16.msra.mxu0 0
      %1826 = vmatprep.subr.bf16.mxu0 0
      %1827 = vmatpush1.bf16.msra.mxu0 0
      %1828 = vmatprep.subr.bf16.mxu0 0
      %1829 = vmatpush1.bf16.msra.mxu0 0
      %1830 = vmatprep.subr.bf16.mxu0 0
      %1831 = vmatpush1.bf16.msra.mxu0 0
      %1832 = vmatprep.mubr.bf16.mxu0 0
      %1833 = vmatmul.mubr.bf16.gmra.mrb[0].mxu0 %v1792
      %v1834 = vpop.f32.mrb[0].mxu0
      %v1835 = vadd.f32 0.0, %v1834
      %v1836 = vpop.f32.mrb[0].mxu0
      %v1837 = vpop.f32.mrb[0].mxu0
      %v1838 = vadd.f32 0.0, %v1837
      %v1839 = vpop.f32.mrb[0].mxu0
      %1840 = vmatprep.mubr.bf16.mxu0 0
      %1841 = vmatmul.mubr.bf16.gmra.mrb[0].mxu0 %v1793
      %v1842 = vpop.f32.mrb[0].mxu0
      %v1843 = vadd.f32 0.0, %v1842
      %v1844 = vpop.f32.mrb[0].mxu0
      %v1845 = vpop.f32.mrb[0].mxu0
      %v1846 = vadd.f32 0.0, %v1845
      %v1847 = vpop.f32.mrb[0].mxu0
      %1848 = vmatprep.mubr.bf16.mxu0 0
      %1849 = vmatmul.mubr.bf16.gmra.mrb[0].mxu0 %v1794
      %v1850 = vpop.f32.mrb[0].mxu0
      %v1851 = vadd.f32 0.0, %v1850
      %v1852 = vpop.f32.mrb[0].mxu0
      %v1853 = vpop.f32.mrb[0].mxu0
      %v1854 = vadd.f32 0.0, %v1853
      %v1855 = vpop.f32.mrb[0].mxu0
      %1856 = vmatprep.mubr.bf16.mxu0 0
      %1857 = vmatmul.mubr.bf16.gmra.mrb[0].mxu0 %v1795
      %v1858 = vpop.f32.mrb[0].mxu0
      %v1859 = vadd.f32 0.0, %v1858
      %v1860 = vpop.f32.mrb[0].mxu0
      %v1861 = vpop.f32.mrb[0].mxu0
      %v1862 = vadd.f32 0.0, %v1861
      %v1863 = vpop.f32.mrb[0].mxu0
      %1864 = vmatprep.mubr.bf16.mxu0 0
      %1865 = vmatmul.mubr.bf16.gmra.mrb[0].mxu0 %v1796
      %v1866 = vpop.f32.mrb[0].mxu0
      %v1867 = vadd.f32 0.0, %v1866
      %v1868 = vpop.f32.mrb[0].mxu0
      %v1869 = vpop.f32.mrb[0].mxu0
      %v1870 = vadd.f32 0.0, %v1869
      %v1871 = vpop.f32.mrb[0].mxu0
      %1872 = vmatprep.mubr.bf16.mxu0 0
      %1873 = vmatmul.mubr.bf16.gmra.mrb[0].mxu0 %v1797
      %v1874 = vpop.f32.mrb[0].mxu0
      %v1875 = vadd.f32 0.0, %v1874
      %v1876 = vpop.f32.mrb[0].mxu0
      %v1877 = vpop.f32.mrb[0].mxu0
      %v1878 = vadd.f32 0.0, %v1877
      %v1879 = vpop.f32.mrb[0].mxu0
      %1880 = vmatprep.mubr.bf16.mxu0 0
      %1881 = vmatmul.mubr.bf16.gmra.mrb[0].mxu0 %v1798
      %v1882 = vpop.f32.mrb[0].mxu0
      %v1883 = vadd.f32 0.0, %v1882
      %v1884 = vpop.f32.mrb[0].mxu0
      %v1885 = vpop.f32.mrb[0].mxu0
      %v1886 = vadd.f32 0.0, %v1885
      %v1887 = vpop.f32.mrb[0].mxu0
      %1888 = vmatprep.mubr.bf16.mxu0 0
      %1889 = vmatmul.mubr.bf16.gmra.mrb[0].mxu0 %v1799
      %v1890 = vpop.f32.mrb[0].mxu0
      %v1891 = vadd.f32 0.0, %v1890
      %v1892 = vpop.f32.mrb[0].mxu0
      %v1893 = vpop.f32.mrb[0].mxu0
      %v1894 = vadd.f32 0.0, %v1893
      %v1895 = vpop.f32.mrb[0].mxu0
      %1896 = vdwg.mxu0
      %v1897 = vpack.c.bf16 %v1838, %v1835
      %v1898 = vpack.c.bf16 %v1846, %v1843
      %v1899 = vpack.c.bf16 %v1854, %v1851
      %v1900 = vpack.c.bf16 %v1862, %v1859
      %v1901 = vpack.c.bf16 %v1870, %v1867
      %v1902 = vpack.c.bf16 %v1878, %v1875
      %v1903 = vpack.c.bf16 %v1886, %v1883
      %v1904 = vpack.c.bf16 %v1894, %v1891
      %v1905 = vld [vmem:[%s666] sm:$0xf]
      %v1906 = vld [vmem:[%s666 + $0x4] sm:$0xf]
      %v1907 = vld [vmem:[%s666 + $0x8] sm:$0xf]
      %v1908 = vld [vmem:[%s666 + $0xc] sm:$0xf]
      %v1909 = vld [vmem:[%s666 + $0x10] sm:$0xf]
      %v1910 = vld [vmem:[%s666 + $0x14] sm:$0xf]
      %v1911 = vld [vmem:[%s666 + $0x18] sm:$0xf]
      %v1912 = vld [vmem:[%s666 + $0x1c] sm:$0xf]
      %v1913 = vld [vmem:[%s666 + $0x20] sm:$0xf]
      %v1914 = vld [vmem:[%s666 + $0x24] sm:$0xf]
      %v1915 = vld [vmem:[%s666 + $0x28] sm:$0xf]
      %v1916 = vld [vmem:[%s666 + $0x2c] sm:$0xf]
      %v1917 = vld [vmem:[%s666 + $0x30] sm:$0xf]
      %v1918 = vld [vmem:[%s666 + $0x34] sm:$0xf]
      %v1919 = vld [vmem:[%s666 + $0x38] sm:$0xf]
      %v1920 = vld [vmem:[%s666 + $0x3c] sm:$0xf]
      %v1921 = vld [vmem:[%s669] sm:$0x1]
      %v1923 = vlaneseq
      %v1924 = vshrl.u32 %v1923, 7
      %v1925 = vsub.s32 0, %v1924
      %v1926 = vrot.slane %v1921, %v1925
      %v1944 = vunpack.c.l.b16 %v1905
      %v1945 = vunpack.c.l.b16 %v1906
      %v1946 = vunpack.c.l.b16 %v1907
      %v1947 = vunpack.c.l.b16 %v1908
      %v1948 = vunpack.c.l.b16 %v1909
      %v1949 = vunpack.c.l.b16 %v1910
      %v1950 = vunpack.c.l.b16 %v1911
      %v1951 = vunpack.c.l.b16 %v1912
      %v1952 = vunpack.c.l.b16 %v1913
      %v1953 = vunpack.c.l.b16 %v1914
      %v1954 = vunpack.c.l.b16 %v1915
      %v1955 = vunpack.c.l.b16 %v1916
      %v1956 = vunpack.c.l.b16 %v1917
      %v1957 = vunpack.c.l.b16 %v1918
      %v1958 = vunpack.c.l.b16 %v1919
      %v1959 = vunpack.c.l.b16 %v1920
      %v1960 = vpack.c.b16 %v1945, %v1944
      %v1961 = vpack.c.b16 %v1947, %v1946
      %v1962 = vpack.c.b16 %v1949, %v1948
      %v1963 = vpack.c.b16 %v1951, %v1950
      %v1964 = vpack.c.b16 %v1953, %v1952
      %v1965 = vpack.c.b16 %v1955, %v1954
      %v1966 = vpack.c.b16 %v1957, %v1956
      %v1967 = vpack.c.b16 %v1959, %v1958
      %1976 = vmatprep.subr.bf16.mxu0 0
      %1977 = vmatpush1.bf16.msra.mxu0 %v1960
      %1978 = vmatprep.subr.bf16.mxu0 0
      %1979 = vmatpush1.bf16.msra.mxu0 %v1961
      %1980 = vmatprep.subr.bf16.mxu0 0
      %1981 = vmatpush1.bf16.msra.mxu0 %v1962
      %1982 = vmatprep.subr.bf16.mxu0 0
      %1983 = vmatpush1.bf16.msra.mxu0 %v1963
      %1984 = vmatprep.subr.bf16.mxu0 0
      %1985 = vmatpush1.bf16.msra.mxu0 %v1964
      %1986 = vmatprep.subr.bf16.mxu0 0
      %1987 = vmatpush1.bf16.msra.mxu0 %v1965
      %1988 = vmatprep.subr.bf16.mxu0 0
      %1989 = vmatpush1.bf16.msra.mxu0 %v1966
      %1990 = vmatprep.subr.bf16.mxu0 0
      %1991 = vmatpush1.bf16.msra.mxu0 %v1967
      %1992 = vmatprep.subr.bf16.mxu0 0
      %1993 = vmatpush1.bf16.msra.mxu0 0
      %1994 = vmatprep.subr.bf16.mxu0 0
      %1995 = vmatpush1.bf16.msra.mxu0 0
      %1996 = vmatprep.subr.bf16.mxu0 0
      %1997 = vmatpush1.bf16.msra.mxu0 0
      %1998 = vmatprep.subr.bf16.mxu0 0
      %1999 = vmatpush1.bf16.msra.mxu0 0
      %2000 = vmatprep.subr.bf16.mxu0 0
      %2001 = vmatpush1.bf16.msra.mxu0 0
      %2002 = vmatprep.subr.bf16.mxu0 0
      %2003 = vmatpush1.bf16.msra.mxu0 0
      %2004 = vmatprep.subr.bf16.mxu0 0
      %2005 = vmatpush1.bf16.msra.mxu0 0
      %2006 = vmatprep.subr.bf16.mxu0 0
      %2007 = vmatpush1.bf16.msra.mxu0 0
      %2008 = vmatprep.mubr.bf16.mxu0 0
      %2009 = vmatmul.mubr.bf16.gmra.mrb[0].mxu0 %v1897
      %v2010 = vpop.f32.mrb[0].mxu0
      %v2011 = vadd.f32 %v1926, %v2010
      %v2012 = vpop.f32.mrb[0].mxu0
      %v2013 = vpop.f32.mrb[0].mxu0
      %v2014 = vadd.f32 %v1926, %v2013
      %v2015 = vpop.f32.mrb[0].mxu0
      %2016 = vmatprep.mubr.bf16.mxu0 0
      %2017 = vmatmul.mubr.bf16.gmra.mrb[0].mxu0 %v1898
      %v2018 = vpop.f32.mrb[0].mxu0
      %v2019 = vadd.f32 %v1926, %v2018
      %v2020 = vpop.f32.mrb[0].mxu0
      %v2021 = vpop.f32.mrb[0].mxu0
      %v2022 = vadd.f32 %v1926, %v2021
      %v2023 = vpop.f32.mrb[0].mxu0
      %2024 = vmatprep.mubr.bf16.mxu0 0
      %2025 = vmatmul.mubr.bf16.gmra.mrb[0].mxu0 %v1899
      %v2026 = vpop.f32.mrb[0].mxu0
      %v2027 = vadd.f32 %v1926, %v2026
      %v2028 = vpop.f32.mrb[0].mxu0
      %v2029 = vpop.f32.mrb[0].mxu0
      %v2030 = vadd.f32 %v1926, %v2029
      %v2031 = vpop.f32.mrb[0].mxu0
      %2032 = vmatprep.mubr.bf16.mxu0 0
      %2033 = vmatmul.mubr.bf16.gmra.mrb[0].mxu0 %v1900
      %v2034 = vpop.f32.mrb[0].mxu0
      %v2035 = vadd.f32 %v1926, %v2034
      %v2036 = vpop.f32.mrb[0].mxu0
      %v2037 = vpop.f32.mrb[0].mxu0
      %v2038 = vadd.f32 %v1926, %v2037
      %v2039 = vpop.f32.mrb[0].mxu0
      %2040 = vmatprep.mubr.bf16.mxu0 0
      %2041 = vmatmul.mubr.bf16.gmra.mrb[0].mxu0 %v1901
      %v2042 = vpop.f32.mrb[0].mxu0
      %v2043 = vadd.f32 %v1926, %v2042
      %v2044 = vpop.f32.mrb[0].mxu0
      %v2045 = vpop.f32.mrb[0].mxu0
      %v2046 = vadd.f32 %v1926, %v2045
      %v2047 = vpop.f32.mrb[0].mxu0
      %2048 = vmatprep.mubr.bf16.mxu0 0
      %2049 = vmatmul.mubr.bf16.gmra.mrb[0].mxu0 %v1902
      %v2050 = vpop.f32.mrb[0].mxu0
      %v2051 = vadd.f32 %v1926, %v2050
      %v2052 = vpop.f32.mrb[0].mxu0
      %v2053 = vpop.f32.mrb[0].mxu0
      %v2054 = vadd.f32 %v1926, %v2053
      %v2055 = vpop.f32.mrb[0].mxu0
      %2056 = vmatprep.mubr.bf16.mxu0 0
      %2057 = vmatmul.mubr.bf16.gmra.mrb[0].mxu0 %v1903
      %v2058 = vpop.f32.mrb[0].mxu0
      %v2059 = vadd.f32 %v1926, %v2058
      %v2060 = vpop.f32.mrb[0].mxu0
      %v2061 = vpop.f32.mrb[0].mxu0
      %v2062 = vadd.f32 %v1926, %v2061
      %v2063 = vpop.f32.mrb[0].mxu0
      %2064 = vmatprep.mubr.bf16.mxu0 0
      %2065 = vmatmul.mubr.bf16.gmra.mrb[0].mxu0 %v1904
      %v2066 = vpop.f32.mrb[0].mxu0
      %v2067 = vadd.f32 %v1926, %v2066
      %v2068 = vpop.f32.mrb[0].mxu0
      %v2069 = vpop.f32.mrb[0].mxu0
      %v2070 = vadd.f32 %v1926, %v2069
      %v2071 = vpop.f32.mrb[0].mxu0
      %2072 = vdwg.mxu0
      %v2073 = vadd.f32 %v737, %v2011
      %v2074 = vadd.f32 %v738, %v2014
      %v2075 = vadd.f32 %v739, %v2019
      %v2076 = vadd.f32 %v740, %v2022
      %v2077 = vadd.f32 %v741, %v2027
      %v2078 = vadd.f32 %v742, %v2030
      %v2079 = vadd.f32 %v743, %v2035
      %v2080 = vadd.f32 %v744, %v2038
      %v2081 = vadd.f32 %v745, %v2043
      %v2082 = vadd.f32 %v746, %v2046
      %v2083 = vadd.f32 %v747, %v2051
      %v2084 = vadd.f32 %v748, %v2054
      %v2085 = vadd.f32 %v749, %v2059
      %v2086 = vadd.f32 %v750, %v2062
      %v2087 = vadd.f32 %v751, %v2067
      %v2088 = vadd.f32 %v752, %v2070
      %v2089 = vld [vmem:[%s672] sm:$0x1]
      %v2090 = vld [vmem:[%s675] sm:$0x1]
      %2091 = vadd.xlane.f32.xlu0 %v2073
      %v2092 = vpop.xlane.xlu0 %2091
      %2093 = vadd.xlane.f32.xlu0 %v2074
      %v2094 = vpop.xlane.xlu0 %2093
      %2095 = vadd.xlane.f32.xlu0 %v2075
      %v2096 = vpop.xlane.xlu0 %2095
      %2097 = vadd.xlane.f32.xlu0 %v2076
      %v2098 = vpop.xlane.xlu0 %2097
      %2099 = vadd.xlane.f32.xlu0 %v2077
      %v2100 = vpop.xlane.xlu0 %2099
      %2101 = vadd.xlane.f32.xlu0 %v2078
      %v2102 = vpop.xlane.xlu0 %2101
      %2103 = vadd.xlane.f32.xlu0 %v2079
      %v2104 = vpop.xlane.xlu0 %2103
      %2105 = vadd.xlane.f32.xlu0 %v2080
      %v2106 = vpop.xlane.xlu0 %2105
      %2107 = vadd.xlane.f32.xlu0 %v2081
      %v2108 = vpop.xlane.xlu0 %2107
      %2109 = vadd.xlane.f32.xlu0 %v2082
      %v2110 = vpop.xlane.xlu0 %2109
      %2111 = vadd.xlane.f32.xlu0 %v2083
      %v2112 = vpop.xlane.xlu0 %2111
      %2113 = vadd.xlane.f32.xlu0 %v2084
      %v2114 = vpop.xlane.xlu0 %2113
      %2115 = vadd.xlane.f32.xlu0 %v2085
      %v2116 = vpop.xlane.xlu0 %2115
      %2117 = vadd.xlane.f32.xlu0 %v2086
      %v2118 = vpop.xlane.xlu0 %2117
      %2119 = vadd.xlane.f32.xlu0 %v2087
      %v2120 = vpop.xlane.xlu0 %2119
      %2121 = vadd.xlane.f32.xlu0 %v2088
      %v2122 = vpop.xlane.xlu0 %2121
      %v2123 = vmul.f32 %v2092, %v791
      %v2124 = vmul.f32 %v2094, %v791
      %v2125 = vmul.f32 %v2096, %v791
      %v2126 = vmul.f32 %v2098, %v791
      %v2127 = vmul.f32 %v2100, %v791
      %v2128 = vmul.f32 %v2102, %v791
      %v2129 = vmul.f32 %v2104, %v791
      %v2130 = vmul.f32 %v2106, %v791
      %v2131 = vmul.f32 %v2108, %v791
      %v2132 = vmul.f32 %v2110, %v791
      %v2133 = vmul.f32 %v2112, %v791
      %v2134 = vmul.f32 %v2114, %v791
      %v2135 = vmul.f32 %v2116, %v791
      %v2136 = vmul.f32 %v2118, %v791
      %v2137 = vmul.f32 %v2120, %v791
      %v2138 = vmul.f32 %v2122, %v791
      %v2139 = vsub.f32 %v2073, %v2123
      %v2140 = vsub.f32 %v2074, %v2124
      %v2141 = vsub.f32 %v2075, %v2125
      %v2142 = vsub.f32 %v2076, %v2126
      %v2143 = vsub.f32 %v2077, %v2127
      %v2144 = vsub.f32 %v2078, %v2128
      %v2145 = vsub.f32 %v2079, %v2129
      %v2146 = vsub.f32 %v2080, %v2130
      %v2147 = vsub.f32 %v2081, %v2131
      %v2148 = vsub.f32 %v2082, %v2132
      %v2149 = vsub.f32 %v2083, %v2133
      %v2150 = vsub.f32 %v2084, %v2134
      %v2151 = vsub.f32 %v2085, %v2135
      %v2152 = vsub.f32 %v2086, %v2136
      %v2153 = vsub.f32 %v2087, %v2137
      %v2154 = vsub.f32 %v2088, %v2138
      %v2155 = vmul.f32 %v2139, %v2139
      %v2156 = vmul.f32 %v2140, %v2140
      %v2157 = vmul.f32 %v2141, %v2141
      %v2158 = vmul.f32 %v2142, %v2142
      %v2159 = vmul.f32 %v2143, %v2143
      %v2160 = vmul.f32 %v2144, %v2144
      %v2161 = vmul.f32 %v2145, %v2145
      %v2162 = vmul.f32 %v2146, %v2146
      %v2163 = vmul.f32 %v2147, %v2147
      %v2164 = vmul.f32 %v2148, %v2148
      %v2165 = vmul.f32 %v2149, %v2149
      %v2166 = vmul.f32 %v2150, %v2150
      %v2167 = vmul.f32 %v2151, %v2151
      %v2168 = vmul.f32 %v2152, %v2152
      %v2169 = vmul.f32 %v2153, %v2153
      %v2170 = vmul.f32 %v2154, %v2154
      %2171 = vadd.xlane.f32.xlu0 %v2155
      %v2172 = vpop.xlane.xlu0 %2171
      %2173 = vadd.xlane.f32.xlu0 %v2156
      %v2174 = vpop.xlane.xlu0 %2173
      %2175 = vadd.xlane.f32.xlu0 %v2157
      %v2176 = vpop.xlane.xlu0 %2175
      %2177 = vadd.xlane.f32.xlu0 %v2158
      %v2178 = vpop.xlane.xlu0 %2177
      %2179 = vadd.xlane.f32.xlu0 %v2159
      %v2180 = vpop.xlane.xlu0 %2179
      %2181 = vadd.xlane.f32.xlu0 %v2160
      %v2182 = vpop.xlane.xlu0 %2181
      %2183 = vadd.xlane.f32.xlu0 %v2161
      %v2184 = vpop.xlane.xlu0 %2183
      %2185 = vadd.xlane.f32.xlu0 %v2162
      %v2186 = vpop.xlane.xlu0 %2185
      %2187 = vadd.xlane.f32.xlu0 %v2163
      %v2188 = vpop.xlane.xlu0 %2187
      %2189 = vadd.xlane.f32.xlu0 %v2164
      %v2190 = vpop.xlane.xlu0 %2189
      %2191 = vadd.xlane.f32.xlu0 %v2165
      %v2192 = vpop.xlane.xlu0 %2191
      %2193 = vadd.xlane.f32.xlu0 %v2166
      %v2194 = vpop.xlane.xlu0 %2193
      %2195 = vadd.xlane.f32.xlu0 %v2167
      %v2196 = vpop.xlane.xlu0 %2195
      %2197 = vadd.xlane.f32.xlu0 %v2168
      %v2198 = vpop.xlane.xlu0 %2197
      %2199 = vadd.xlane.f32.xlu0 %v2169
      %v2200 = vpop.xlane.xlu0 %2199
      %2201 = vadd.xlane.f32.xlu0 %v2170
      %v2202 = vpop.xlane.xlu0 %2201
      %v2203 = vmul.f32 %v2172, %v791
      %v2204 = vmul.f32 %v2174, %v791
      %v2205 = vmul.f32 %v2176, %v791
      %v2206 = vmul.f32 %v2178, %v791
      %v2207 = vmul.f32 %v2180, %v791
      %v2208 = vmul.f32 %v2182, %v791
      %v2209 = vmul.f32 %v2184, %v791
      %v2210 = vmul.f32 %v2186, %v791
      %v2211 = vmul.f32 %v2188, %v791
      %v2212 = vmul.f32 %v2190, %v791
      %v2213 = vmul.f32 %v2192, %v791
      %v2214 = vmul.f32 %v2194, %v791
      %v2215 = vmul.f32 %v2196, %v791
      %v2216 = vmul.f32 %v2198, %v791
      %v2217 = vmul.f32 %v2200, %v791
      %v2218 = vmul.f32 %v2202, %v791
      %v2219 = vadd.f32 %v2203, 1e-05
      %v2220 = vadd.f32 %v2204, 1e-05
      %v2221 = vadd.f32 %v2205, 1e-05
      %v2222 = vadd.f32 %v2206, 1e-05
      %v2223 = vadd.f32 %v2207, 1e-05
      %v2224 = vadd.f32 %v2208, 1e-05
      %v2225 = vadd.f32 %v2209, 1e-05
      %v2226 = vadd.f32 %v2210, 1e-05
      %v2227 = vadd.f32 %v2211, 1e-05
      %v2228 = vadd.f32 %v2212, 1e-05
      %v2229 = vadd.f32 %v2213, 1e-05
      %v2230 = vadd.f32 %v2214, 1e-05
      %v2231 = vadd.f32 %v2215, 1e-05
      %v2232 = vadd.f32 %v2216, 1e-05
      %v2233 = vadd.f32 %v2217, 1e-05
      %v2234 = vadd.f32 %v2218, 1e-05
      %v2235 = vrsqrt.pop %v2219
      %v2236 = vrsqrt.pop %v2220
      %v2237 = vrsqrt.pop %v2221
      %v2238 = vrsqrt.pop %v2222
      %v2239 = vrsqrt.pop %v2223
      %v2240 = vrsqrt.pop %v2224
      %v2241 = vrsqrt.pop %v2225
      %v2242 = vrsqrt.pop %v2226
      %v2243 = vrsqrt.pop %v2227
      %v2244 = vrsqrt.pop %v2228
      %v2245 = vrsqrt.pop %v2229
      %v2246 = vrsqrt.pop %v2230
      %v2247 = vrsqrt.pop %v2231
      %v2248 = vrsqrt.pop %v2232
      %v2249 = vrsqrt.pop %v2233
      %v2250 = vrsqrt.pop %v2234
      %v2251 = vmul.f32 %v2139, %v2235
      %v2252 = vmul.f32 %v2140, %v2236
      %v2253 = vmul.f32 %v2141, %v2237
      %v2254 = vmul.f32 %v2142, %v2238
      %v2255 = vmul.f32 %v2143, %v2239
      %v2256 = vmul.f32 %v2144, %v2240
      %v2257 = vmul.f32 %v2145, %v2241
      %v2258 = vmul.f32 %v2146, %v2242
      %v2259 = vmul.f32 %v2147, %v2243
      %v2260 = vmul.f32 %v2148, %v2244
      %v2261 = vmul.f32 %v2149, %v2245
      %v2262 = vmul.f32 %v2150, %v2246
      %v2263 = vmul.f32 %v2151, %v2247
      %v2264 = vmul.f32 %v2152, %v2248
      %v2265 = vmul.f32 %v2153, %v2249
      %v2266 = vmul.f32 %v2154, %v2250
      %v2268 = vlaneseq
      %v2269 = vshrl.u32 %v2268, 7
      %v2270 = vsub.s32 0, %v2269
      %v2271 = vrot.slane %v2089, %v2270
      %v2273 = vmul.f32 %v2251, %v2271
      %v2274 = vmul.f32 %v2252, %v2271
      %v2275 = vmul.f32 %v2253, %v2271
      %v2276 = vmul.f32 %v2254, %v2271
      %v2277 = vmul.f32 %v2255, %v2271
      %v2278 = vmul.f32 %v2256, %v2271
      %v2279 = vmul.f32 %v2257, %v2271
      %v2280 = vmul.f32 %v2258, %v2271
      %v2281 = vmul.f32 %v2259, %v2271
      %v2282 = vmul.f32 %v2260, %v2271
      %v2283 = vmul.f32 %v2261, %v2271
      %v2284 = vmul.f32 %v2262, %v2271
      %v2285 = vmul.f32 %v2263, %v2271
      %v2286 = vmul.f32 %v2264, %v2271
      %v2287 = vmul.f32 %v2265, %v2271
      %v2288 = vmul.f32 %v2266, %v2271
      %v2290 = vlaneseq
      %v2291 = vshrl.u32 %v2290, 7
      %v2292 = vsub.s32 0, %v2291
      %v2293 = vrot.slane %v2090, %v2292
      %v2295 = vadd.f32 %v2273, %v2293
      %v2296 = vadd.f32 %v2274, %v2293
      %v2297 = vadd.f32 %v2275, %v2293
      %v2298 = vadd.f32 %v2276, %v2293
      %v2299 = vadd.f32 %v2277, %v2293
      %v2300 = vadd.f32 %v2278, %v2293
      %v2301 = vadd.f32 %v2279, %v2293
      %v2302 = vadd.f32 %v2280, %v2293
      %v2303 = vadd.f32 %v2281, %v2293
      %v2304 = vadd.f32 %v2282, %v2293
      %v2305 = vadd.f32 %v2283, %v2293
      %v2306 = vadd.f32 %v2284, %v2293
      %v2307 = vadd.f32 %v2285, %v2293
      %v2308 = vadd.f32 %v2286, %v2293
      %v2309 = vadd.f32 %v2287, %v2293
      %v2310 = vadd.f32 %v2288, %v2293
      %v2311 = vpack.c.bf16 %v2296, %v2295
      %v2312 = vpack.c.bf16 %v2298, %v2297
      %v2313 = vpack.c.bf16 %v2300, %v2299
      %v2314 = vpack.c.bf16 %v2302, %v2301
      %v2315 = vpack.c.bf16 %v2304, %v2303
      %v2316 = vpack.c.bf16 %v2306, %v2305
      %v2317 = vpack.c.bf16 %v2308, %v2307
      %v2318 = vpack.c.bf16 %v2310, %v2309
      %v2319 = vld [vmem:[%s680] sm:$0xff]
      %v2320 = vld [vmem:[%s680 + $0x8] sm:$0xff]
      %v2321 = vld [vmem:[%s680 + $0x10] sm:$0xff]
      %v2322 = vld [vmem:[%s680 + $0x18] sm:$0xff]
      %v2323 = vld [vmem:[%s680 + $0x20] sm:$0xff]
      %v2324 = vld [vmem:[%s680 + $0x28] sm:$0xff]
      %v2325 = vld [vmem:[%s680 + $0x30] sm:$0xff]
      %v2326 = vld [vmem:[%s680 + $0x38] sm:$0xff]
      %v2327 = vld [vmem:[%s680 + $0x40] sm:$0xff]
      %v2328 = vld [vmem:[%s680 + $0x48] sm:$0xff]
      %v2329 = vld [vmem:[%s680 + $0x50] sm:$0xff]
      %v2330 = vld [vmem:[%s680 + $0x58] sm:$0xff]
      %v2331 = vld [vmem:[%s680 + $0x60] sm:$0xff]
      %v2332 = vld [vmem:[%s680 + $0x68] sm:$0xff]
      %v2333 = vld [vmem:[%s680 + $0x70] sm:$0xff]
      %v2334 = vld [vmem:[%s680 + $0x78] sm:$0xff]
      %v2335 = vld [vmem:[%s680 + $0x80] sm:$0xff]
      %v2336 = vld [vmem:[%s680 + $0x88] sm:$0xff]
      %v2337 = vld [vmem:[%s680 + $0x90] sm:$0xff]
      %v2338 = vld [vmem:[%s680 + $0x98] sm:$0xff]
      %v2339 = vld [vmem:[%s680 + $0xa0] sm:$0xff]
      %v2340 = vld [vmem:[%s680 + $0xa8] sm:$0xff]
      %v2341 = vld [vmem:[%s680 + $0xb0] sm:$0xff]
      %v2342 = vld [vmem:[%s680 + $0xb8] sm:$0xff]
      %v2343 = vld [vmem:[%s680 + $0xc0] sm:$0xff]
      %v2344 = vld [vmem:[%s680 + $0xc8] sm:$0xff]
      %v2345 = vld [vmem:[%s680 + $0xd0] sm:$0xff]
      %v2346 = vld [vmem:[%s680 + $0xd8] sm:$0xff]
      %v2347 = vld [vmem:[%s680 + $0xe0] sm:$0xff]
      %v2348 = vld [vmem:[%s680 + $0xe8] sm:$0xff]
      %v2349 = vld [vmem:[%s680 + $0xf0] sm:$0xff]
      %v2350 = vld [vmem:[%s680 + $0xf8] sm:$0xff]
      %v2351 = vld [vmem:[%s684] sm:$0xf]
      %v2353 = vlaneseq
      %v2354 = vshrl.u32 %v2353, 7
      %v2355 = vsub.s32 0, %v2354
      %v2356 = vrot.slane %v2351, %v2355
      %v2357 = vlaneseq
      %v2358 = vshrl.u32 %v2357, 7
      %v2359 = vsub.s32 1, %v2358
      %v2360 = vrot.slane %v2351, %v2359
      %v2361 = vlaneseq
      %v2362 = vshrl.u32 %v2361, 7
      %v2363 = vsub.s32 2, %v2362
      %v2364 = vrot.slane %v2351, %v2363
      %v2365 = vlaneseq
      %v2366 = vshrl.u32 %v2365, 7
      %v2367 = vsub.s32 3, %v2366
      %v2368 = vrot.slane %v2351, %v2367
      %v2405 = vunpack.c.l.b16 %v2319
      %v2406 = vunpack.c.h.b16 %v2319
      %v2407 = vunpack.c.l.b16 %v2320
      %v2408 = vunpack.c.h.b16 %v2320
      %v2409 = vunpack.c.l.b16 %v2321
      %v2410 = vunpack.c.h.b16 %v2321
      %v2411 = vunpack.c.l.b16 %v2322
      %v2412 = vunpack.c.h.b16 %v2322
      %v2413 = vunpack.c.l.b16 %v2323
      %v2414 = vunpack.c.h.b16 %v2323
      %v2415 = vunpack.c.l.b16 %v2324
      %v2416 = vunpack.c.h.b16 %v2324
      %v2417 = vunpack.c.l.b16 %v2325
      %v2418 = vunpack.c.h.b16 %v2325
      %v2419 = vunpack.c.l.b16 %v2326
      %v2420 = vunpack.c.h.b16 %v2326
      %v2421 = vunpack.c.l.b16 %v2327
      %v2422 = vunpack.c.h.b16 %v2327
      %v2423 = vunpack.c.l.b16 %v2328
      %v2424 = vunpack.c.h.b16 %v2328
      %v2425 = vunpack.c.l.b16 %v2329
      %v2426 = vunpack.c.h.b16 %v2329
      %v2427 = vunpack.c.l.b16 %v2330
      %v2428 = vunpack.c.h.b16 %v2330
      %v2429 = vunpack.c.l.b16 %v2331
      %v2430 = vunpack.c.h.b16 %v2331
      %v2431 = vunpack.c.l.b16 %v2332
      %v2432 = vunpack.c.h.b16 %v2332
      %v2433 = vunpack.c.l.b16 %v2333
      %v2434 = vunpack.c.h.b16 %v2333
      %v2435 = vunpack.c.l.b16 %v2334
      %v2436 = vunpack.c.h.b16 %v2334
      %v2437 = vunpack.c.l.b16 %v2335
      %v2438 = vunpack.c.h.b16 %v2335
      %v2439 = vunpack.c.l.b16 %v2336
      %v2440 = vunpack.c.h.b16 %v2336
      %v2441 = vunpack.c.l.b16 %v2337
      %v2442 = vunpack.c.h.b16 %v2337
      %v2443 = vunpack.c.l.b16 %v2338
      %v2444 = vunpack.c.h.b16 %v2338
      %v2445 = vunpack.c.l.b16 %v2339
      %v2446 = vunpack.c.h.b16 %v2339
      %v2447 = vunpack.c.l.b16 %v2340
      %v2448 = vunpack.c.h.b16 %v2340
      %v2449 = vunpack.c.l.b16 %v2341
      %v2450 = vunpack.c.h.b16 %v2341
      %v2451 = vunpack.c.l.b16 %v2342
      %v2452 = vunpack.c.h.b16 %v2342
      %v2453 = vunpack.c.l.b16 %v2343
      %v2454 = vunpack.c.h.b16 %v2343
      %v2455 = vunpack.c.l.b16 %v2344
      %v2456 = vunpack.c.h.b16 %v2344
      %v2457 = vunpack.c.l.b16 %v2345
      %v2458 = vunpack.c.h.b16 %v2345
      %v2459 = vunpack.c.l.b16 %v2346
      %v2460 = vunpack.c.h.b16 %v2346
      %v2461 = vunpack.c.l.b16 %v2347
      %v2462 = vunpack.c.h.b16 %v2347
      %v2463 = vunpack.c.l.b16 %v2348
      %v2464 = vunpack.c.h.b16 %v2348
      %v2465 = vunpack.c.l.b16 %v2349
      %v2466 = vunpack.c.h.b16 %v2349
      %v2467 = vunpack.c.l.b16 %v2350
      %v2468 = vunpack.c.h.b16 %v2350
      %v2469 = vpack.c.b16 %v2409, %v2405
      %v2470 = vpack.c.b16 %v2410, %v2406
      %v2471 = vpack.c.b16 %v2411, %v2407
      %v2472 = vpack.c.b16 %v2412, %v2408
      %v2473 = vpack.c.b16 %v2417, %v2413
      %v2474 = vpack.c.b16 %v2418, %v2414
      %v2475 = vpack.c.b16 %v2419, %v2415
      %v2476 = vpack.c.b16 %v2420, %v2416
      %v2477 = vpack.c.b16 %v2425, %v2421
      %v2478 = vpack.c.b16 %v2426, %v2422
      %v2479 = vpack.c.b16 %v2427, %v2423
      %v2480 = vpack.c.b16 %v2428, %v2424
      %v2481 = vpack.c.b16 %v2433, %v2429
      %v2482 = vpack.c.b16 %v2434, %v2430
      %v2483 = vpack.c.b16 %v2435, %v2431
      %v2484 = vpack.c.b16 %v2436, %v2432
      %v2485 = vpack.c.b16 %v2441, %v2437
      %v2486 = vpack.c.b16 %v2442, %v2438
      %v2487 = vpack.c.b16 %v2443, %v2439
      %v2488 = vpack.c.b16 %v2444, %v2440
      %v2489 = vpack.c.b16 %v2449, %v2445
      %v2490 = vpack.c.b16 %v2450, %v2446
      %v2491 = vpack.c.b16 %v2451, %v2447
      %v2492 = vpack.c.b16 %v2452, %v2448
      %v2493 = vpack.c.b16 %v2457, %v2453
      %v2494 = vpack.c.b16 %v2458, %v2454
      %v2495 = vpack.c.b16 %v2459, %v2455
      %v2496 = vpack.c.b16 %v2460, %v2456
      %v2497 = vpack.c.b16 %v2465, %v2461
      %v2498 = vpack.c.b16 %v2466, %v2462
      %v2499 = vpack.c.b16 %v2467, %v2463
      %v2500 = vpack.c.b16 %v2468, %v2464
      %2533 = vmatprep.subr.bf16.mxu0 %v2470
      %2534 = vmatpush1.bf16.msra.mxu0 %v2469
      %2535 = vmatprep.subr.bf16.mxu0 %v2474
      %2536 = vmatpush1.bf16.msra.mxu0 %v2473
      %2537 = vmatprep.subr.bf16.mxu0 %v2478
      %2538 = vmatpush1.bf16.msra.mxu0 %v2477
      %2539 = vmatprep.subr.bf16.mxu0 %v2482
      %2540 = vmatpush1.bf16.msra.mxu0 %v2481
      %2541 = vmatprep.subr.bf16.mxu0 %v2486
      %2542 = vmatpush1.bf16.msra.mxu0 %v2485
      %2543 = vmatprep.subr.bf16.mxu0 %v2490
      %2544 = vmatpush1.bf16.msra.mxu0 %v2489
      %2545 = vmatprep.subr.bf16.mxu0 %v2494
      %2546 = vmatpush1.bf16.msra.mxu0 %v2493
      %2547 = vmatprep.subr.bf16.mxu0 %v2498
      %2548 = vmatpush1.bf16.msra.mxu0 %v2497
      %2549 = vmatprep.subr.bf16.mxu0 0
      %2550 = vmatpush1.bf16.msra.mxu0 0
      %2551 = vmatprep.subr.bf16.mxu0 0
      %2552 = vmatpush1.bf16.msra.mxu0 0
      %2553 = vmatprep.subr.bf16.mxu0 0
      %2554 = vmatpush1.bf16.msra.mxu0 0
      %2555 = vmatprep.subr.bf16.mxu0 0
      %2556 = vmatpush1.bf16.msra.mxu0 0
      %2557 = vmatprep.subr.bf16.mxu0 0
      %2558 = vmatpush1.bf16.msra.mxu0 0
      %2559 = vmatprep.subr.bf16.mxu0 0
      %2560 = vmatpush1.bf16.msra.mxu0 0
      %2561 = vmatprep.subr.bf16.mxu0 0
      %2562 = vmatpush1.bf16.msra.mxu0 0
      %2563 = vmatprep.subr.bf16.mxu0 0
      %2564 = vmatpush1.bf16.msra.mxu0 0
      %2565 = vmatprep.mubr.bf16.mxu0 0
      %2566 = vmatmul.mubr.bf16.gmra.mrb[0].mxu0 %v2311
      %v2567 = vpop.f32.mrb[0].mxu0
      %v2568 = vadd.f32 %v2356, %v2567
      %v2569 = vpop.f32.mrb[0].mxu0
      %v2570 = vadd.f32 %v2360, %v2569
      %v2571 = vpop.f32.mrb[0].mxu0
      %v2572 = vadd.f32 %v2356, %v2571
      %v2573 = vpop.f32.mrb[0].mxu0
      %v2574 = vadd.f32 %v2360, %v2573
      %2575 = vmatprep.mubr.bf16.mxu0 0
      %2576 = vmatmul.mubr.bf16.gmra.mrb[0].mxu0 %v2312
      %v2577 = vpop.f32.mrb[0].mxu0
      %v2578 = vadd.f32 %v2356, %v2577
      %v2579 = vpop.f32.mrb[0].mxu0
      %v2580 = vadd.f32 %v2360, %v2579
      %v2581 = vpop.f32.mrb[0].mxu0
      %v2582 = vadd.f32 %v2356, %v2581
      %v2583 = vpop.f32.mrb[0].mxu0
      %v2584 = vadd.f32 %v2360, %v2583
      %2585 = vmatprep.mubr.bf16.mxu0 0
      %2586 = vmatmul.mubr.bf16.gmra.mrb[0].mxu0 %v2313
      %v2587 = vpop.f32.mrb[0].mxu0
      %v2588 = vadd.f32 %v2356, %v2587
      %v2589 = vpop.f32.mrb[0].mxu0
      %v2590 = vadd.f32 %v2360, %v2589
      %v2591 = vpop.f32.mrb[0].mxu0
      %v2592 = vadd.f32 %v2356, %v2591
      %v2593 = vpop.f32.mrb[0].mxu0
      %v2594 = vadd.f32 %v2360, %v2593
      %2595 = vmatprep.mubr.bf16.mxu0 0
      %2596 = vmatmul.mubr.bf16.gmra.mrb[0].mxu0 %v2314
      %v2597 = vpop.f32.mrb[0].mxu0
      %v2598 = vadd.f32 %v2356, %v2597
      %v2599 = vpop.f32.mrb[0].mxu0
      %v2600 = vadd.f32 %v2360, %v2599
      %v2601 = vpop.f32.mrb[0].mxu0
      %v2602 = vadd.f32 %v2356, %v2601
      %v2603 = vpop.f32.mrb[0].mxu0
      %v2604 = vadd.f32 %v2360, %v2603
      %2605 = vmatprep.mubr.bf16.mxu0 0
      %2606 = vmatmul.mubr.bf16.gmra.mrb[0].mxu0 %v2315
      %v2607 = vpop.f32.mrb[0].mxu0
      %v2608 = vadd.f32 %v2356, %v2607
      %v2609 = vpop.f32.mrb[0].mxu0
      %v2610 = vadd.f32 %v2360, %v2609
      %v2611 = vpop.f32.mrb[0].mxu0
      %v2612 = vadd.f32 %v2356, %v2611
      %v2613 = vpop.f32.mrb[0].mxu0
      %v2614 = vadd.f32 %v2360, %v2613
      %2615 = vmatprep.mubr.bf16.mxu0 0
      %2616 = vmatmul.mubr.bf16.gmra.mrb[0].mxu0 %v2316
      %v2617 = vpop.f32.mrb[0].mxu0
      %v2618 = vadd.f32 %v2356, %v2617
      %v2619 = vpop.f32.mrb[0].mxu0
      %v2620 = vadd.f32 %v2360, %v2619
      %v2621 = vpop.f32.mrb[0].mxu0
      %v2622 = vadd.f32 %v2356, %v2621
      %v2623 = vpop.f32.mrb[0].mxu0
      %v2624 = vadd.f32 %v2360, %v2623
      %2625 = vmatprep.mubr.bf16.mxu0 0
      %2626 = vmatmul.mubr.bf16.gmra.mrb[0].mxu0 %v2317
      %v2627 = vpop.f32.mrb[0].mxu0
      %v2628 = vadd.f32 %v2356, %v2627
      %v2629 = vpop.f32.mrb[0].mxu0
      %v2630 = vadd.f32 %v2360, %v2629
      %v2631 = vpop.f32.mrb[0].mxu0
      %v2632 = vadd.f32 %v2356, %v2631
      %v2633 = vpop.f32.mrb[0].mxu0
      %v2634 = vadd.f32 %v2360, %v2633
      %2635 = vmatprep.mubr.bf16.mxu0 0
      %2636 = vmatmul.mubr.bf16.gmra.mrb[0].mxu0 %v2318
      %v2637 = vpop.f32.mrb[0].mxu0
      %v2638 = vadd.f32 %v2356, %v2637
      %v2639 = vpop.f32.mrb[0].mxu0
      %v2640 = vadd.f32 %v2360, %v2639
      %v2641 = vpop.f32.mrb[0].mxu0
      %v2642 = vadd.f32 %v2356, %v2641
      %v2643 = vpop.f32.mrb[0].mxu0
      %v2644 = vadd.f32 %v2360, %v2643
      %2645 = vdwg.mxu0
      %2646 = vmatprep.subr.bf16.mxu0 %v2472
      %2647 = vmatpush1.bf16.msra.mxu0 %v2471
      %2648 = vmatprep.subr.bf16.mxu0 %v2476
      %2649 = vmatpush1.bf16.msra.mxu0 %v2475
      %2650 = vmatprep.subr.bf16.mxu0 %v2480
      %2651 = vmatpush1.bf16.msra.mxu0 %v2479
      %2652 = vmatprep.subr.bf16.mxu0 %v2484
      %2653 = vmatpush1.bf16.msra.mxu0 %v2483
      %2654 = vmatprep.subr.bf16.mxu0 %v2488
      %2655 = vmatpush1.bf16.msra.mxu0 %v2487
      %2656 = vmatprep.subr.bf16.mxu0 %v2492
      %2657 = vmatpush1.bf16.msra.mxu0 %v2491
      %2658 = vmatprep.subr.bf16.mxu0 %v2496
      %2659 = vmatpush1.bf16.msra.mxu0 %v2495
      %2660 = vmatprep.subr.bf16.mxu0 %v2500
      %2661 = vmatpush1.bf16.msra.mxu0 %v2499
      %2662 = vmatprep.subr.bf16.mxu0 0
      %2663 = vmatpush1.bf16.msra.mxu0 0
      %2664 = vmatprep.subr.bf16.mxu0 0
      %2665 = vmatpush1.bf16.msra.mxu0 0
      %2666 = vmatprep.subr.bf16.mxu0 0
      %2667 = vmatpush1.bf16.msra.mxu0 0
      %2668 = vmatprep.subr.bf16.mxu0 0
      %2669 = vmatpush1.bf16.msra.mxu0 0
      %2670 = vmatprep.subr.bf16.mxu0 0
      %2671 = vmatpush1.bf16.msra.mxu0 0
      %2672 = vmatprep.subr.bf16.mxu0 0
      %2673 = vmatpush1.bf16.msra.mxu0 0
      %2674 = vmatprep.subr.bf16.mxu0 0
      %2675 = vmatpush1.bf16.msra.mxu0 0
      %2676 = vmatprep.subr.bf16.mxu0 0
      %2677 = vmatpush1.bf16.msra.mxu0 0
      %2678 = vmatprep.mubr.bf16.mxu0 0
      %2679 = vmatmul.mubr.bf16.gmra.mrb[0].mxu0 %v2311
      %v2680 = vpop.f32.mrb[0].mxu0
      %v2681 = vadd.f32 %v2364, %v2680
      %v2682 = vpop.f32.mrb[0].mxu0
      %v2683 = vadd.f32 %v2368, %v2682
      %v2684 = vpop.f32.mrb[0].mxu0
      %v2685 = vadd.f32 %v2364, %v2684
      %v2686 = vpop.f32.mrb[0].mxu0
      %v2687 = vadd.f32 %v2368, %v2686
      %2688 = vmatprep.mubr.bf16.mxu0 0
      %2689 = vmatmul.mubr.bf16.gmra.mrb[0].mxu0 %v2312
      %v2690 = vpop.f32.mrb[0].mxu0
      %v2691 = vadd.f32 %v2364, %v2690
      %v2692 = vpop.f32.mrb[0].mxu0
      %v2693 = vadd.f32 %v2368, %v2692
      %v2694 = vpop.f32.mrb[0].mxu0
      %v2695 = vadd.f32 %v2364, %v2694
      %v2696 = vpop.f32.mrb[0].mxu0
      %v2697 = vadd.f32 %v2368, %v2696
      %2698 = vmatprep.mubr.bf16.mxu0 0
      %2699 = vmatmul.mubr.bf16.gmra.mrb[0].mxu0 %v2313
      %v2700 = vpop.f32.mrb[0].mxu0
      %v2701 = vadd.f32 %v2364, %v2700
      %v2702 = vpop.f32.mrb[0].mxu0
      %v2703 = vadd.f32 %v2368, %v2702
      %v2704 = vpop.f32.mrb[0].mxu0
      %v2705 = vadd.f32 %v2364, %v2704
      %v2706 = vpop.f32.mrb[0].mxu0
      %v2707 = vadd.f32 %v2368, %v2706
      %2708 = vmatprep.mubr.bf16.mxu0 0
      %2709 = vmatmul.mubr.bf16.gmra.mrb[0].mxu0 %v2314
      %v2710 = vpop.f32.mrb[0].mxu0
      %v2711 = vadd.f32 %v2364, %v2710
      %v2712 = vpop.f32.mrb[0].mxu0
      %v2713 = vadd.f32 %v2368, %v2712
      %v2714 = vpop.f32.mrb[0].mxu0
      %v2715 = vadd.f32 %v2364, %v2714
      %v2716 = vpop.f32.mrb[0].mxu0
      %v2717 = vadd.f32 %v2368, %v2716
      %2718 = vmatprep.mubr.bf16.mxu0 0
      %2719 = vmatmul.mubr.bf16.gmra.mrb[0].mxu0 %v2315
      %v2720 = vpop.f32.mrb[0].mxu0
      %v2721 = vadd.f32 %v2364, %v2720
      %v2722 = vpop.f32.mrb[0].mxu0
      %v2723 = vadd.f32 %v2368, %v2722
      %v2724 = vpop.f32.mrb[0].mxu0
      %v2725 = vadd.f32 %v2364, %v2724
      %v2726 = vpop.f32.mrb[0].mxu0
      %v2727 = vadd.f32 %v2368, %v2726
      %2728 = vmatprep.mubr.bf16.mxu0 0
      %2729 = vmatmul.mubr.bf16.gmra.mrb[0].mxu0 %v2316
      %v2730 = vpop.f32.mrb[0].mxu0
      %v2731 = vadd.f32 %v2364, %v2730
      %v2732 = vpop.f32.mrb[0].mxu0
      %v2733 = vadd.f32 %v2368, %v2732
      %v2734 = vpop.f32.mrb[0].mxu0
      %v2735 = vadd.f32 %v2364, %v2734
      %v2736 = vpop.f32.mrb[0].mxu0
      %v2737 = vadd.f32 %v2368, %v2736
      %2738 = vmatprep.mubr.bf16.mxu0 0
      %2739 = vmatmul.mubr.bf16.gmra.mrb[0].mxu0 %v2317
      %v2740 = vpop.f32.mrb[0].mxu0
      %v2741 = vadd.f32 %v2364, %v2740
      %v2742 = vpop.f32.mrb[0].mxu0
      %v2743 = vadd.f32 %v2368, %v2742
      %v2744 = vpop.f32.mrb[0].mxu0
      %v2745 = vadd.f32 %v2364, %v2744
      %v2746 = vpop.f32.mrb[0].mxu0
      %v2747 = vadd.f32 %v2368, %v2746
      %2748 = vmatprep.mubr.bf16.mxu0 0
      %2749 = vmatmul.mubr.bf16.gmra.mrb[0].mxu0 %v2318
      %v2750 = vpop.f32.mrb[0].mxu0
      %v2751 = vadd.f32 %v2364, %v2750
      %v2752 = vpop.f32.mrb[0].mxu0
      %v2753 = vadd.f32 %v2368, %v2752
      %v2754 = vpop.f32.mrb[0].mxu0
      %v2755 = vadd.f32 %v2364, %v2754
      %v2756 = vpop.f32.mrb[0].mxu0
      %v2757 = vadd.f32 %v2368, %v2756
      %2758 = vdwg.mxu0
      %v2759 = vmax.f32 %v2568, 0.0
      %v2760 = vmax.f32 %v2570, 0.0
      %v2761 = vmax.f32 %v2681, 0.0
      %v2762 = vmax.f32 %v2683, 0.0
      %v2763 = vmax.f32 %v2572, 0.0
      %v2764 = vmax.f32 %v2574, 0.0
      %v2765 = vmax.f32 %v2685, 0.0
      %v2766 = vmax.f32 %v2687, 0.0
      %v2767 = vmax.f32 %v2578, 0.0
      %v2768 = vmax.f32 %v2580, 0.0
      %v2769 = vmax.f32 %v2691, 0.0
      %v2770 = vmax.f32 %v2693, 0.0
      %v2771 = vmax.f32 %v2582, 0.0
      %v2772 = vmax.f32 %v2584, 0.0
      %v2773 = vmax.f32 %v2695, 0.0
      %v2774 = vmax.f32 %v2697, 0.0
      %v2775 = vmax.f32 %v2588, 0.0
      %v2776 = vmax.f32 %v2590, 0.0
      %v2777 = vmax.f32 %v2701, 0.0
      %v2778 = vmax.f32 %v2703, 0.0
      %v2779 = vmax.f32 %v2592, 0.0
      %v2780 = vmax.f32 %v2594, 0.0
      %v2781 = vmax.f32 %v2705, 0.0
      %v2782 = vmax.f32 %v2707, 0.0
      %v2783 = vmax.f32 %v2598, 0.0
      %v2784 = vmax.f32 %v2600, 0.0
      %v2785 = vmax.f32 %v2711, 0.0
      %v2786 = vmax.f32 %v2713, 0.0
      %v2787 = vmax.f32 %v2602, 0.0
      %v2788 = vmax.f32 %v2604, 0.0
      %v2789 = vmax.f32 %v2715, 0.0
      %v2790 = vmax.f32 %v2717, 0.0
      %v2791 = vmax.f32 %v2608, 0.0
      %v2792 = vmax.f32 %v2610, 0.0
      %v2793 = vmax.f32 %v2721, 0.0
      %v2794 = vmax.f32 %v2723, 0.0
      %v2795 = vmax.f32 %v2612, 0.0
      %v2796 = vmax.f32 %v2614, 0.0
      %v2797 = vmax.f32 %v2725, 0.0
      %v2798 = vmax.f32 %v2727, 0.0
      %v2799 = vmax.f32 %v2618, 0.0
      %v2800 = vmax.f32 %v2620, 0.0
      %v2801 = vmax.f32 %v2731, 0.0
      %v2802 = vmax.f32 %v2733, 0.0
      %v2803 = vmax.f32 %v2622, 0.0
      %v2804 = vmax.f32 %v2624, 0.0
      %v2805 = vmax.f32 %v2735, 0.0
      %v2806 = vmax.f32 %v2737, 0.0
      %v2807 = vmax.f32 %v2628, 0.0
      %v2808 = vmax.f32 %v2630, 0.0
      %v2809 = vmax.f32 %v2741, 0.0
      %v2810 = vmax.f32 %v2743, 0.0
      %v2811 = vmax.f32 %v2632, 0.0
      %v2812 = vmax.f32 %v2634, 0.0
      %v2813 = vmax.f32 %v2745, 0.0
      %v2814 = vmax.f32 %v2747, 0.0
      %v2815 = vmax.f32 %v2638, 0.0
      %v2816 = vmax.f32 %v2640, 0.0
      %v2817 = vmax.f32 %v2751, 0.0
      %v2818 = vmax.f32 %v2753, 0.0
      %v2819 = vmax.f32 %v2642, 0.0
      %v2820 = vmax.f32 %v2644, 0.0
      %v2821 = vmax.f32 %v2755, 0.0
      %v2822 = vmax.f32 %v2757, 0.0
      %v2823 = vpack.c.bf16 %v2763, %v2759
      %v2824 = vpack.c.bf16 %v2764, %v2760
      %v2825 = vpack.c.bf16 %v2765, %v2761
      %v2826 = vpack.c.bf16 %v2766, %v2762
      %v2827 = vpack.c.bf16 %v2771, %v2767
      %v2828 = vpack.c.bf16 %v2772, %v2768
      %v2829 = vpack.c.bf16 %v2773, %v2769
      %v2830 = vpack.c.bf16 %v2774, %v2770
      %v2831 = vpack.c.bf16 %v2779, %v2775
      %v2832 = vpack.c.bf16 %v2780, %v2776
      %v2833 = vpack.c.bf16 %v2781, %v2777
      %v2834 = vpack.c.bf16 %v2782, %v2778
      %v2835 = vpack.c.bf16 %v2787, %v2783
      %v2836 = vpack.c.bf16 %v2788, %v2784
      %v2837 = vpack.c.bf16 %v2789, %v2785
      %v2838 = vpack.c.bf16 %v2790, %v2786
      %v2839 = vpack.c.bf16 %v2795, %v2791
      %v2840 = vpack.c.bf16 %v2796, %v2792
      %v2841 = vpack.c.bf16 %v2797, %v2793
      %v2842 = vpack.c.bf16 %v2798, %v2794
      %v2843 = vpack.c.bf16 %v2803, %v2799
      %v2844 = vpack.c.bf16 %v2804, %v2800
      %v2845 = vpack.c.bf16 %v2805, %v2801
      %v2846 = vpack.c.bf16 %v2806, %v2802
      %v2847 = vpack.c.bf16 %v2811, %v2807
      %v2848 = vpack.c.bf16 %v2812, %v2808
      %v2849 = vpack.c.bf16 %v2813, %v2809
      %v2850 = vpack.c.bf16 %v2814, %v2810
      %v2851 = vpack.c.bf16 %v2819, %v2815
      %v2852 = vpack.c.bf16 %v2820, %v2816
      %v2853 = vpack.c.bf16 %v2821, %v2817
      %v2854 = vpack.c.bf16 %v2822, %v2818
      %v2855 = vld [vmem:[%s689] sm:$0xf]
      %v2856 = vld [vmem:[%s689 + $0x4] sm:$0xf]
      %v2857 = vld [vmem:[%s689 + $0x8] sm:$0xf]
      %v2858 = vld [vmem:[%s689 + $0xc] sm:$0xf]
      %v2859 = vld [vmem:[%s689 + $0x10] sm:$0xf]
      %v2860 = vld [vmem:[%s689 + $0x14] sm:$0xf]
      %v2861 = vld [vmem:[%s689 + $0x18] sm:$0xf]
      %v2862 = vld [vmem:[%s689 + $0x1c] sm:$0xf]
      %v2863 = vld [vmem:[%s689 + $0x20] sm:$0xf]
      %v2864 = vld [vmem:[%s689 + $0x24] sm:$0xf]
      %v2865 = vld [vmem:[%s689 + $0x28] sm:$0xf]
      %v2866 = vld [vmem:[%s689 + $0x2c] sm:$0xf]
      %v2867 = vld [vmem:[%s689 + $0x30] sm:$0xf]
      %v2868 = vld [vmem:[%s689 + $0x34] sm:$0xf]
      %v2869 = vld [vmem:[%s689 + $0x38] sm:$0xf]
      %v2870 = vld [vmem:[%s689 + $0x3c] sm:$0xf]
      %v2871 = vld [vmem:[%s689 + $0x40] sm:$0xf]
      %v2872 = vld [vmem:[%s689 + $0x44] sm:$0xf]
      %v2873 = vld [vmem:[%s689 + $0x48] sm:$0xf]
      %v2874 = vld [vmem:[%s689 + $0x4c] sm:$0xf]
      %v2875 = vld [vmem:[%s689 + $0x50] sm:$0xf]
      %v2876 = vld [vmem:[%s689 + $0x54] sm:$0xf]
      %v2877 = vld [vmem:[%s689 + $0x58] sm:$0xf]
      %v2878 = vld [vmem:[%s689 + $0x5c] sm:$0xf]
      %v2879 = vld [vmem:[%s689 + $0x60] sm:$0xf]
      %v2880 = vld [vmem:[%s689 + $0x64] sm:$0xf]
      %v2881 = vld [vmem:[%s689 + $0x68] sm:$0xf]
      %v2882 = vld [vmem:[%s689 + $0x6c] sm:$0xf]
      %v2883 = vld [vmem:[%s689 + $0x70] sm:$0xf]
      %v2884 = vld [vmem:[%s689 + $0x74] sm:$0xf]
      %v2885 = vld [vmem:[%s689 + $0x78] sm:$0xf]
      %v2886 = vld [vmem:[%s689 + $0x7c] sm:$0xf]
      %v2887 = vld [vmem:[%s689 + $0x80] sm:$0xf]
      %v2888 = vld [vmem:[%s689 + $0x84] sm:$0xf]
      %v2889 = vld [vmem:[%s689 + $0x88] sm:$0xf]
      %v2890 = vld [vmem:[%s689 + $0x8c] sm:$0xf]
      %v2891 = vld [vmem:[%s689 + $0x90] sm:$0xf]
      %v2892 = vld [vmem:[%s689 + $0x94] sm:$0xf]
      %v2893 = vld [vmem:[%s689 + $0x98] sm:$0xf]
      %v2894 = vld [vmem:[%s689 + $0x9c] sm:$0xf]
      %v2895 = vld [vmem:[%s689 + $0xa0] sm:$0xf]
      %v2896 = vld [vmem:[%s689 + $0xa4] sm:$0xf]
      %v2897 = vld [vmem:[%s689 + $0xa8] sm:$0xf]
      %v2898 = vld [vmem:[%s689 + $0xac] sm:$0xf]
      %v2899 = vld [vmem:[%s689 + $0xb0] sm:$0xf]
      %v2900 = vld [vmem:[%s689 + $0xb4] sm:$0xf]
      %v2901 = vld [vmem:[%s689 + $0xb8] sm:$0xf]
      %v2902 = vld [vmem:[%s689 + $0xbc] sm:$0xf]
      %v2903 = vld [vmem:[%s689 + $0xc0] sm:$0xf]
      %v2904 = vld [vmem:[%s689 + $0xc4] sm:$0xf]
      %v2905 = vld [vmem:[%s689 + $0xc8] sm:$0xf]
      %v2906 = vld [vmem:[%s689 + $0xcc] sm:$0xf]
      %v2907 = vld [vmem:[%s689 + $0xd0] sm:$0xf]
      %v2908 = vld [vmem:[%s689 + $0xd4] sm:$0xf]
      %v2909 = vld [vmem:[%s689 + $0xd8] sm:$0xf]
      %v2910 = vld [vmem:[%s689 + $0xdc] sm:$0xf]
      %v2911 = vld [vmem:[%s689 + $0xe0] sm:$0xf]
      %v2912 = vld [vmem:[%s689 + $0xe4] sm:$0xf]
      %v2913 = vld [vmem:[%s689 + $0xe8] sm:$0xf]
      %v2914 = vld [vmem:[%s689 + $0xec] sm:$0xf]
      %v2915 = vld [vmem:[%s689 + $0xf0] sm:$0xf]
      %v2916 = vld [vmem:[%s689 + $0xf4] sm:$0xf]
      %v2917 = vld [vmem:[%s689 + $0xf8] sm:$0xf]
      %v2918 = vld [vmem:[%s689 + $0xfc] sm:$0xf]
      %v2919 = vld [vmem:[%s692] sm:$0x1]
      %v2921 = vlaneseq
      %v2922 = vshrl.u32 %v2921, 7
      %v2923 = vsub.s32 0, %v2922
      %v2924 = vrot.slane %v2919, %v2923
      %v2990 = vunpack.c.l.b16 %v2855
      %v2991 = vunpack.c.l.b16 %v2856
      %v2992 = vunpack.c.l.b16 %v2857
      %v2993 = vunpack.c.l.b16 %v2858
      %v2994 = vunpack.c.l.b16 %v2859
      %v2995 = vunpack.c.l.b16 %v2860
      %v2996 = vunpack.c.l.b16 %v2861
      %v2997 = vunpack.c.l.b16 %v2862
      %v2998 = vunpack.c.l.b16 %v2863
      %v2999 = vunpack.c.l.b16 %v2864
      %v3000 = vunpack.c.l.b16 %v2865
      %v3001 = vunpack.c.l.b16 %v2866
      %v3002 = vunpack.c.l.b16 %v2867
      %v3003 = vunpack.c.l.b16 %v2868
      %v3004 = vunpack.c.l.b16 %v2869
      %v3005 = vunpack.c.l.b16 %v2870
      %v3006 = vunpack.c.l.b16 %v2871
      %v3007 = vunpack.c.l.b16 %v2872
      %v3008 = vunpack.c.l.b16 %v2873
      %v3009 = vunpack.c.l.b16 %v2874
      %v3010 = vunpack.c.l.b16 %v2875
      %v3011 = vunpack.c.l.b16 %v2876
      %v3012 = vunpack.c.l.b16 %v2877
      %v3013 = vunpack.c.l.b16 %v2878
      %v3014 = vunpack.c.l.b16 %v2879
      %v3015 = vunpack.c.l.b16 %v2880
      %v3016 = vunpack.c.l.b16 %v2881
      %v3017 = vunpack.c.l.b16 %v2882
      %v3018 = vunpack.c.l.b16 %v2883
      %v3019 = vunpack.c.l.b16 %v2884
      %v3020 = vunpack.c.l.b16 %v2885
      %v3021 = vunpack.c.l.b16 %v2886
      %v3022 = vunpack.c.l.b16 %v2887
      %v3023 = vunpack.c.l.b16 %v2888
      %v3024 = vunpack.c.l.b16 %v2889
      %v3025 = vunpack.c.l.b16 %v2890
      %v3026 = vunpack.c.l.b16 %v2891
      %v3027 = vunpack.c.l.b16 %v2892
      %v3028 = vunpack.c.l.b16 %v2893
      %v3029 = vunpack.c.l.b16 %v2894
      %v3030 = vunpack.c.l.b16 %v2895
      %v3031 = vunpack.c.l.b16 %v2896
      %v3032 = vunpack.c.l.b16 %v2897
      %v3033 = vunpack.c.l.b16 %v2898
      %v3034 = vunpack.c.l.b16 %v2899
      %v3035 = vunpack.c.l.b16 %v2900
      %v3036 = vunpack.c.l.b16 %v2901
      %v3037 = vunpack.c.l.b16 %v2902
      %v3038 = vunpack.c.l.b16 %v2903
      %v3039 = vunpack.c.l.b16 %v2904
      %v3040 = vunpack.c.l.b16 %v2905
      %v3041 = vunpack.c.l.b16 %v2906
      %v3042 = vunpack.c.l.b16 %v2907
      %v3043 = vunpack.c.l.b16 %v2908
      %v3044 = vunpack.c.l.b16 %v2909
      %v3045 = vunpack.c.l.b16 %v2910
      %v3046 = vunpack.c.l.b16 %v2911
      %v3047 = vunpack.c.l.b16 %v2912
      %v3048 = vunpack.c.l.b16 %v2913
      %v3049 = vunpack.c.l.b16 %v2914
      %v3050 = vunpack.c.l.b16 %v2915
      %v3051 = vunpack.c.l.b16 %v2916
      %v3052 = vunpack.c.l.b16 %v2917
      %v3053 = vunpack.c.l.b16 %v2918
      %v3054 = vpack.c.b16 %v2991, %v2990
      %v3055 = vpack.c.b16 %v2993, %v2992
      %v3056 = vpack.c.b16 %v2995, %v2994
      %v3057 = vpack.c.b16 %v2997, %v2996
      %v3058 = vpack.c.b16 %v2999, %v2998
      %v3059 = vpack.c.b16 %v3001, %v3000
      %v3060 = vpack.c.b16 %v3003, %v3002
      %v3061 = vpack.c.b16 %v3005, %v3004
      %v3062 = vpack.c.b16 %v3007, %v3006
      %v3063 = vpack.c.b16 %v3009, %v3008
      %v3064 = vpack.c.b16 %v3011, %v3010
      %v3065 = vpack.c.b16 %v3013, %v3012
      %v3066 = vpack.c.b16 %v3015, %v3014
      %v3067 = vpack.c.b16 %v3017, %v3016
      %v3068 = vpack.c.b16 %v3019, %v3018
      %v3069 = vpack.c.b16 %v3021, %v3020
      %v3070 = vpack.c.b16 %v3023, %v3022
      %v3071 = vpack.c.b16 %v3025, %v3024
      %v3072 = vpack.c.b16 %v3027, %v3026
      %v3073 = vpack.c.b16 %v3029, %v3028
      %v3074 = vpack.c.b16 %v3031, %v3030
      %v3075 = vpack.c.b16 %v3033, %v3032
      %v3076 = vpack.c.b16 %v3035, %v3034
      %v3077 = vpack.c.b16 %v3037, %v3036
      %v3078 = vpack.c.b16 %v3039, %v3038
      %v3079 = vpack.c.b16 %v3041, %v3040
      %v3080 = vpack.c.b16 %v3043, %v3042
      %v3081 = vpack.c.b16 %v3045, %v3044
      %v3082 = vpack.c.b16 %v3047, %v3046
      %v3083 = vpack.c.b16 %v3049, %v3048
      %v3084 = vpack.c.b16 %v3051, %v3050
      %v3085 = vpack.c.b16 %v3053, %v3052
      %3118 = vmatprep.subr.bf16.mxu0 0
      %3119 = vmatpush1.bf16.msra.mxu0 %v3054
      %3120 = vmatprep.subr.bf16.mxu0 0
      %3121 = vmatpush1.bf16.msra.mxu0 %v3055
      %3122 = vmatprep.subr.bf16.mxu0 0
      %3123 = vmatpush1.bf16.msra.mxu0 %v3056
      %3124 = vmatprep.subr.bf16.mxu0 0
      %3125 = vmatpush1.bf16.msra.mxu0 %v3057
      %3126 = vmatprep.subr.bf16.mxu0 0
      %3127 = vmatpush1.bf16.msra.mxu0 %v3058
      %3128 = vmatprep.subr.bf16.mxu0 0
      %3129 = vmatpush1.bf16.msra.mxu0 %v3059
      %3130 = vmatprep.subr.bf16.mxu0 0
      %3131 = vmatpush1.bf16.msra.mxu0 %v3060
      %3132 = vmatprep.subr.bf16.mxu0 0
      %3133 = vmatpush1.bf16.msra.mxu0 %v3061
      %3134 = vmatprep.subr.bf16.mxu0 0
      %3135 = vmatpush1.bf16.msra.mxu0 %v3062
      %3136 = vmatprep.subr.bf16.mxu0 0
      %3137 = vmatpush1.bf16.msra.mxu0 %v3063
      %3138 = vmatprep.subr.bf16.mxu0 0
      %3139 = vmatpush1.bf16.msra.mxu0 %v3064
      %3140 = vmatprep.subr.bf16.mxu0 0
      %3141 = vmatpush1.bf16.msra.mxu0 %v3065
      %3142 = vmatprep.subr.bf16.mxu0 0
      %3143 = vmatpush1.bf16.msra.mxu0 %v3066
      %3144 = vmatprep.subr.bf16.mxu0 0
      %3145 = vmatpush1.bf16.msra.mxu0 %v3067
      %3146 = vmatprep.subr.bf16.mxu0 0
      %3147 = vmatpush1.bf16.msra.mxu0 %v3068
      %3148 = vmatprep.subr.bf16.mxu0 0
      %3149 = vmatpush1.bf16.msra.mxu0 %v3069
      %3150 = vmatprep.mubr.bf16.mxu0 %v2824
      %3151 = vmatmul.mubr.bf16.gmra.mrb[0].mxu0 %v2823
      %v3152 = vpop.f32.mrb[0].mxu0
      %v3153 = vadd.f32 %v2924, %v3152
      %v3154 = vpop.f32.mrb[0].mxu0
      %v3155 = vpop.f32.mrb[0].mxu0
      %v3156 = vadd.f32 %v2924, %v3155
      %v3157 = vpop.f32.mrb[0].mxu0
      %3158 = vmatprep.mubr.bf16.mxu0 %v2828
      %3159 = vmatmul.mubr.bf16.gmra.mrb[0].mxu0 %v2827
      %v3160 = vpop.f32.mrb[0].mxu0
      %v3161 = vadd.f32 %v2924, %v3160
      %v3162 = vpop.f32.mrb[0].mxu0
      %v3163 = vpop.f32.mrb[0].mxu0
      %v3164 = vadd.f32 %v2924, %v3163
      %v3165 = vpop.f32.mrb[0].mxu0
      %3166 = vmatprep.mubr.bf16.mxu0 %v2832
      %3167 = vmatmul.mubr.bf16.gmra.mrb[0].mxu0 %v2831
      %v3168 = vpop.f32.mrb[0].mxu0
      %v3169 = vadd.f32 %v2924, %v3168
      %v3170 = vpop.f32.mrb[0].mxu0
      %v3171 = vpop.f32.mrb[0].mxu0
      %v3172 = vadd.f32 %v2924, %v3171
      %v3173 = vpop.f32.mrb[0].mxu0
      %3174 = vmatprep.mubr.bf16.mxu0 %v2836
      %3175 = vmatmul.mubr.bf16.gmra.mrb[0].mxu0 %v2835
      %v3176 = vpop.f32.mrb[0].mxu0
      %v3177 = vadd.f32 %v2924, %v3176
      %v3178 = vpop.f32.mrb[0].mxu0
      %v3179 = vpop.f32.mrb[0].mxu0
      %v3180 = vadd.f32 %v2924, %v3179
      %v3181 = vpop.f32.mrb[0].mxu0
      %3182 = vmatprep.mubr.bf16.mxu0 %v2840
      %3183 = vmatmul.mubr.bf16.gmra.mrb[0].mxu0 %v2839
      %v3184 = vpop.f32.mrb[0].mxu0
      %v3185 = vadd.f32 %v2924, %v3184
      %v3186 = vpop.f32.mrb[0].mxu0
      %v3187 = vpop.f32.mrb[0].mxu0
      %v3188 = vadd.f32 %v2924, %v3187
      %v3189 = vpop.f32.mrb[0].mxu0
      %3190 = vmatprep.mubr.bf16.mxu0 %v2844
      %3191 = vmatmul.mubr.bf16.gmra.mrb[0].mxu0 %v2843
      %v3192 = vpop.f32.mrb[0].mxu0
      %v3193 = vadd.f32 %v2924, %v3192
      %v3194 = vpop.f32.mrb[0].mxu0
      %v3195 = vpop.f32.mrb[0].mxu0
      %v3196 = vadd.f32 %v2924, %v3195
      %v3197 = vpop.f32.mrb[0].mxu0
      %3198 = vmatprep.mubr.bf16.mxu0 %v2848
      %3199 = vmatmul.mubr.bf16.gmra.mrb[0].mxu0 %v2847
      %v3200 = vpop.f32.mrb[0].mxu0
      %v3201 = vadd.f32 %v2924, %v3200
      %v3202 = vpop.f32.mrb[0].mxu0
      %v3203 = vpop.f32.mrb[0].mxu0
      %v3204 = vadd.f32 %v2924, %v3203
      %v3205 = vpop.f32.mrb[0].mxu0
      %3206 = vmatprep.mubr.bf16.mxu0 %v2852
      %3207 = vmatmul.mubr.bf16.gmra.mrb[0].mxu0 %v2851
      %v3208 = vpop.f32.mrb[0].mxu0
      %v3209 = vadd.f32 %v2924, %v3208
      %v3210 = vpop.f32.mrb[0].mxu0
      %v3211 = vpop.f32.mrb[0].mxu0
      %v3212 = vadd.f32 %v2924, %v3211
      %v3213 = vpop.f32.mrb[0].mxu0
      %3214 = vdwg.mxu0
      %3215 = vmatprep.subr.bf16.mxu0 0
      %3216 = vmatpush1.bf16.msra.mxu0 %v3070
      %3217 = vmatprep.subr.bf16.mxu0 0
      %3218 = vmatpush1.bf16.msra.mxu0 %v3071
      %3219 = vmatprep.subr.bf16.mxu0 0
      %3220 = vmatpush1.bf16.msra.mxu0 %v3072
      %3221 = vmatprep.subr.bf16.mxu0 0
      %3222 = vmatpush1.bf16.msra.mxu0 %v3073
      %3223 = vmatprep.subr.bf16.mxu0 0
      %3224 = vmatpush1.bf16.msra.mxu0 %v3074
      %3225 = vmatprep.subr.bf16.mxu0 0
      %3226 = vmatpush1.bf16.msra.mxu0 %v3075
      %3227 = vmatprep.subr.bf16.mxu0 0
      %3228 = vmatpush1.bf16.msra.mxu0 %v3076
      %3229 = vmatprep.subr.bf16.mxu0 0
      %3230 = vmatpush1.bf16.msra.mxu0 %v3077
      %3231 = vmatprep.subr.bf16.mxu0 0
      %3232 = vmatpush1.bf16.msra.mxu0 %v3078
      %3233 = vmatprep.subr.bf16.mxu0 0
      %3234 = vmatpush1.bf16.msra.mxu0 %v3079
      %3235 = vmatprep.subr.bf16.mxu0 0
      %3236 = vmatpush1.bf16.msra.mxu0 %v3080
      %3237 = vmatprep.subr.bf16.mxu0 0
      %3238 = vmatpush1.bf16.msra.mxu0 %v3081
      %3239 = vmatprep.subr.bf16.mxu0 0
      %3240 = vmatpush1.bf16.msra.mxu0 %v3082
      %3241 = vmatprep.subr.bf16.mxu0 0
      %3242 = vmatpush1.bf16.msra.mxu0 %v3083
      %3243 = vmatprep.subr.bf16.mxu0 0
      %3244 = vmatpush1.bf16.msra.mxu0 %v3084
      %3245 = vmatprep.subr.bf16.mxu0 0
      %3246 = vmatpush1.bf16.msra.mxu0 %v3085
      %3247 = vmatprep.mubr.bf16.mxu0 %v2826
      %3248 = vmatmul.mubr.bf16.gmra.mrb[0].mxu0 %v2825
      %v3249 = vpop.f32.mrb[0].mxu0
      %v3250 = vadd.f32 %v3153, %v3249
      %v3251 = vpop.f32.mrb[0].mxu0
      %v3252 = vpop.f32.mrb[0].mxu0
      %v3253 = vadd.f32 %v3156, %v3252
      %v3254 = vpop.f32.mrb[0].mxu0
      %3255 = vmatprep.mubr.bf16.mxu0 %v2830
      %3256 = vmatmul.mubr.bf16.gmra.mrb[0].mxu0 %v2829
      %v3257 = vpop.f32.mrb[0].mxu0
      %v3258 = vadd.f32 %v3161, %v3257
      %v3259 = vpop.f32.mrb[0].mxu0
      %v3260 = vpop.f32.mrb[0].mxu0
      %v3261 = vadd.f32 %v3164, %v3260
      %v3262 = vpop.f32.mrb[0].mxu0
      %3263 = vmatprep.mubr.bf16.mxu0 %v2834
      %3264 = vmatmul.mubr.bf16.gmra.mrb[0].mxu0 %v2833
      %v3265 = vpop.f32.mrb[0].mxu0
      %v3266 = vadd.f32 %v3169, %v3265
      %v3267 = vpop.f32.mrb[0].mxu0
      %v3268 = vpop.f32.mrb[0].mxu0
      %v3269 = vadd.f32 %v3172, %v3268
      %v3270 = vpop.f32.mrb[0].mxu0
      %3271 = vmatprep.mubr.bf16.mxu0 %v2838
      %3272 = vmatmul.mubr.bf16.gmra.mrb[0].mxu0 %v2837
      %v3273 = vpop.f32.mrb[0].mxu0
      %v3274 = vadd.f32 %v3177, %v3273
      %v3275 = vpop.f32.mrb[0].mxu0
      %v3276 = vpop.f32.mrb[0].mxu0
      %v3277 = vadd.f32 %v3180, %v3276
      %v3278 = vpop.f32.mrb[0].mxu0
      %3279 = vmatprep.mubr.bf16.mxu0 %v2842
      %3280 = vmatmul.mubr.bf16.gmra.mrb[0].mxu0 %v2841
      %v3281 = vpop.f32.mrb[0].mxu0
      %v3282 = vadd.f32 %v3185, %v3281
      %v3283 = vpop.f32.mrb[0].mxu0
      %v3284 = vpop.f32.mrb[0].mxu0
      %v3285 = vadd.f32 %v3188, %v3284
      %v3286 = vpop.f32.mrb[0].mxu0
      %3287 = vmatprep.mubr.bf16.mxu0 %v2846
      %3288 = vmatmul.mubr.bf16.gmra.mrb[0].mxu0 %v2845
      %v3289 = vpop.f32.mrb[0].mxu0
      %v3290 = vadd.f32 %v3193, %v3289
      %v3291 = vpop.f32.mrb[0].mxu0
      %v3292 = vpop.f32.mrb[0].mxu0
      %v3293 = vadd.f32 %v3196, %v3292
      %v3294 = vpop.f32.mrb[0].mxu0
      %3295 = vmatprep.mubr.bf16.mxu0 %v2850
      %3296 = vmatmul.mubr.bf16.gmra.mrb[0].mxu0 %v2849
      %v3297 = vpop.f32.mrb[0].mxu0
      %v3298 = vadd.f32 %v3201, %v3297
      %v3299 = vpop.f32.mrb[0].mxu0
      %v3300 = vpop.f32.mrb[0].mxu0
      %v3301 = vadd.f32 %v3204, %v3300
      %v3302 = vpop.f32.mrb[0].mxu0
      %3303 = vmatprep.mubr.bf16.mxu0 %v2854
      %3304 = vmatmul.mubr.bf16.gmra.mrb[0].mxu0 %v2853
      %v3305 = vpop.f32.mrb[0].mxu0
      %v3306 = vadd.f32 %v3209, %v3305
      %v3307 = vpop.f32.mrb[0].mxu0
      %v3308 = vpop.f32.mrb[0].mxu0
      %v3309 = vadd.f32 %v3212, %v3308
      %v3310 = vpop.f32.mrb[0].mxu0
      %3311 = vdwg.mxu0
      %v3312 = vadd.f32 %v2073, %v3250
      %v3313 = vadd.f32 %v2074, %v3253
      %v3314 = vadd.f32 %v2075, %v3258
      %v3315 = vadd.f32 %v2076, %v3261
      %v3316 = vadd.f32 %v2077, %v3266
      %v3317 = vadd.f32 %v2078, %v3269
      %v3318 = vadd.f32 %v2079, %v3274
      %v3319 = vadd.f32 %v2080, %v3277
      %v3320 = vadd.f32 %v2081, %v3282
      %v3321 = vadd.f32 %v2082, %v3285
      %v3322 = vadd.f32 %v2083, %v3290
      %v3323 = vadd.f32 %v2084, %v3293
      %v3324 = vadd.f32 %v2085, %v3298
      %v3325 = vadd.f32 %v2086, %v3301
      %v3326 = vadd.f32 %v2087, %v3306
      %v3327 = vadd.f32 %v2088, %v3309
      %3328 = vst [vmem:[#allocation2] sm:$0xff] %v3312
      %3329 = vst [vmem:[#allocation2 + $0x8] sm:$0xff] %v3313
      %3330 = vst [vmem:[#allocation2 + $0x10] sm:$0xff] %v3314
      %3331 = vst [vmem:[#allocation2 + $0x18] sm:$0xff] %v3315
      %3332 = vst [vmem:[#allocation2 + $0x20] sm:$0xff] %v3316
      %3333 = vst [vmem:[#allocation2 + $0x28] sm:$0xff] %v3317
      %3334 = vst [vmem:[#allocation2 + $0x30] sm:$0xff] %v3318
      %3335 = vst [vmem:[#allocation2 + $0x38] sm:$0xff] %v3319
      %3336 = vst [vmem:[#allocation2 + $0x40] sm:$0xff] %v3320
      %3337 = vst [vmem:[#allocation2 + $0x48] sm:$0xff] %v3321
      %3338 = vst [vmem:[#allocation2 + $0x50] sm:$0xff] %v3322
      %3339 = vst [vmem:[#allocation2 + $0x58] sm:$0xff] %v3323
      %3340 = vst [vmem:[#allocation2 + $0x60] sm:$0xff] %v3324
      %3341 = vst [vmem:[#allocation2 + $0x68] sm:$0xff] %v3325
      %3342 = vst [vmem:[#allocation2 + $0x70] sm:$0xff] %v3326
      %3343 = vst [vmem:[#allocation2 + $0x78] sm:$0xff] %v3327
      %p3344 = scmp.eq.s32.totalorder %s30, 1
      // Predicated region
      $region81: #{full_transformer_forward.3} parent=75 // pred_check
        %p3345 = pneg %p3344
      $region82: #{full_transformer_forward.3} parent=75 // pred_check_branch
        %3347 = sbr.rel (%p3345) target = $region84
      $region83: #{full_transformer_forward.3} parent=75 // pred_region
        %v3348 = vld [vmem:[#allocation2] sm:$0xff]
        %v3349 = vld [vmem:[#allocation2 + $0x8] sm:$0xff]
        %v3350 = vld [vmem:[#allocation2 + $0x10] sm:$0xff]
        %v3351 = vld [vmem:[#allocation2 + $0x18] sm:$0xff]
        %v3352 = vld [vmem:[#allocation2 + $0x20] sm:$0xff]
        %v3353 = vld [vmem:[#allocation2 + $0x28] sm:$0xff]
        %v3354 = vld [vmem:[#allocation2 + $0x30] sm:$0xff]
        %v3355 = vld [vmem:[#allocation2 + $0x38] sm:$0xff]
        %v3356 = vld [vmem:[#allocation2 + $0x40] sm:$0xff]
        %v3357 = vld [vmem:[#allocation2 + $0x48] sm:$0xff]
        %v3358 = vld [vmem:[#allocation2 + $0x50] sm:$0xff]
        %v3359 = vld [vmem:[#allocation2 + $0x58] sm:$0xff]
        %v3360 = vld [vmem:[#allocation2 + $0x60] sm:$0xff]
        %v3361 = vld [vmem:[#allocation2 + $0x68] sm:$0xff]
        %v3362 = vld [vmem:[#allocation2 + $0x70] sm:$0xff]
        %v3363 = vld [vmem:[#allocation2 + $0x78] sm:$0xff]
        %3364 = vst [vmem:[%s697] sm:$0xff] %v3348
        %3365 = vst [vmem:[%s697 + $0x8] sm:$0xff] %v3349
        %3366 = vst [vmem:[%s697 + $0x10] sm:$0xff] %v3350
        %3367 = vst [vmem:[%s697 + $0x18] sm:$0xff] %v3351
        %3368 = vst [vmem:[%s697 + $0x20] sm:$0xff] %v3352
        %3369 = vst [vmem:[%s697 + $0x28] sm:$0xff] %v3353
        %3370 = vst [vmem:[%s697 + $0x30] sm:$0xff] %v3354
        %3371 = vst [vmem:[%s697 + $0x38] sm:$0xff] %v3355
        %3372 = vst [vmem:[%s697 + $0x40] sm:$0xff] %v3356
        %3373 = vst [vmem:[%s697 + $0x48] sm:$0xff] %v3357
        %3374 = vst [vmem:[%s697 + $0x50] sm:$0xff] %v3358
        %3375 = vst [vmem:[%s697 + $0x58] sm:$0xff] %v3359
        %3376 = vst [vmem:[%s697 + $0x60] sm:$0xff] %v3360
        %3377 = vst [vmem:[%s697 + $0x68] sm:$0xff] %v3361
        %3378 = vst [vmem:[%s697 + $0x70] sm:$0xff] %v3362
        %3379 = vst [vmem:[%s697 + $0x78] sm:$0xff] %v3363
      $region84: #{full_transformer_forward.3} parent=75 // pred_fallthru
        _
      %p3380 = scmp.lt.s32.totalorder %s29, 1
      %s3381 = scalar_select %p3380, %s29, 1
      %s3382 = smul.addr %s3381, 16
      %s3383 = smul.addr %s3382, 8
      %s3384 = scalar_lea.vmem %s14, %s3383
      // Predicated region
      $region85: #{full_transformer_forward.3} parent=75 // pred_check
        %p3385 = pneg %p419
      $region86: #{full_transformer_forward.3} parent=75 // pred_check_branch
        %3387 = sbr.rel (%p3385) target = $region88
      $region87: #{full_transformer_forward.3} parent=75 // pred_region
        _
      $region88: #{full_transformer_forward.3} parent=75 // pred_fallthru
        _
    $region76: #{full_transformer_forward.3} parent=5 // pred_fallthru
      _
    %p3388 = scmp.le.s32.totalorder 2, %s20
    // Predicated region
    $region89: #{full_transformer_forward.3} parent=5 // pred_check
      %p3389 = pneg %p3388
    $region90: #{full_transformer_forward.3} parent=5 // pred_check_branch
      %3391 = sbr.rel (%p3389) target = $region92
    $region91: #{full_transformer_forward.3} parent=5 // pred_region
      %s3392 = ssub.s32 %s20, 2
      // Predicated region
      $region93: #{full_transformer_forward.3} parent=91 // pred_check
        %p3393 = pneg %p425
      $region94: #{full_transformer_forward.3} parent=91 // pred_check_branch
        %3395 = sbr.rel (%p3393) target = $region96
      $region95: #{full_transformer_forward.3} parent=91 // pred_region
        %p3396 = scmp.lt.s32.totalorder %s31, 1
        %s3397 = scalar_select %p3396, %s31, 1
        %s3398 = smul.addr %s3397, 16
        %s3399 = smul.addr %s3398, 8
        %s3400 = scalar_lea.vmem %s14, %s3399
      $region96: #{full_transformer_forward.3} parent=91 // pred_fallthru
        _
    $region92: #{full_transformer_forward.3} parent=5 // pred_fallthru
      _
  $region6: #{full_transformer_forward.3} parent=0 // loop_footer
    %s24 = sadd.s32 1, %s20
  $region7: #{full_transformer_forward.3} parent=0 // loop_footer_branch
    %19 = sbr.rel target = $region3
  $region8: #{full_transformer_forward.3} parent=0 // loop_exit
    _

</llo_original>
